<compile_context>
chip_gen: v5e
topology: v5e:2x2
jax: 0.10.0
libtpu: 0.0.40
codegen_flags: <defaults>
</compile_context>

<pallas_src>
import functools

import jax
import jax.numpy as jnp
from jax.experimental import pallas as pl
from jax.experimental.pallas import tpu as pltpu

EPS = 1e-5  # PyTorch GroupNorm default eps


def _shared_feature_kernel(n_points,
                           x_ref,
                           w1_ref, b1_ref, g1_ref, be1_ref,
                           w2_ref, b2_ref, g2_ref, be2_ref,
                           w3_ref, b3_ref,
                           o_ref,
                           s1_ref, q1_ref, s2_ref, q2_ref):
    """One grid step = (batch block b, phase p, point tile t).

    x_ref : (TB, Cin, TN)  native NCW tile, points on lanes
    wK    : (CoutK, CinK) bf16, bK/gK/beK : (CoutK, 1) f32
    o_ref : (TB, 1, Cout)  resident across (p, t); holds the running max
    sK/qK : (TB, 1, 1)     per-sample GroupNorm sum / sum-of-squares scratch
    """
    tb = x_ref.shape[0]
    c1 = w1_ref.shape[0]
    c2 = w2_ref.shape[0]
    inv_n1 = 1.0 / (c1 * n_points)
    inv_n2 = 1.0 / (c2 * n_points)

    p = pl.program_id(1)
    t = pl.program_id(2)

    def conv1(i):
        # K=7 contraction: accept the (padded) MXU pass; bf16 in, f32 accumulate.
        x_i = x_ref[i].astype(jnp.bfloat16)                       # (Cin, TN)
        h = jnp.dot(w1_ref[...], x_i, preferred_element_type=jnp.float32)
        return h + b1_ref[...]                                    # (c1, TN) f32

    def conv(w_ref, b_ref, a_bf16):
        return (jnp.dot(w_ref[...], a_bf16,
                        preferred_element_type=jnp.float32) + b_ref[...])

    def gn_relu(h, s_ref, q_ref, i, g_ref, be_ref, inv_n):
        # Fused-statistics GroupNorm(1, C) over the whole sample, f32 math.
        mean = s_ref[i] * inv_n                                   # (1, 1)
        var = q_ref[i] * inv_n - mean * mean
        h = (h - mean) * jax.lax.rsqrt(var + EPS)
        return jnp.maximum(h * g_ref[...] + be_ref[...], 0.0)

    # ---- phase-entry initialisation --------------------------------------
    @pl.when(jnp.logical_and(p == 0, t == 0))
    def _():
        s1_ref[...] = jnp.zeros_like(s1_ref)
        q1_ref[...] = jnp.zeros_like(q1_ref)

    @pl.when(jnp.logical_and(p == 1, t == 0))
    def _():
        s2_ref[...] = jnp.zeros_like(s2_ref)
        q2_ref[...] = jnp.zeros_like(q2_ref)

    @pl.when(jnp.logical_and(p == 2, t == 0))
    def _():
        o_ref[...] = jnp.full_like(o_ref, -jnp.inf)

    # ---- phase 0: GN1 statistics (single pass: sum and sum-of-squares) ----
    @pl.when(p == 0)
    def _():
        for i in range(tb):
            h1 = conv1(i)
            s1_ref[i] = s1_ref[i] + jnp.sum(h1)
            q1_ref[i] = q1_ref[i] + jnp.sum(h1 * h1)

    # ---- phase 1: GN2 statistics ------------------------------------------
    @pl.when(p == 1)
    def _():
        for i in range(tb):
            a1 = gn_relu(conv1(i), s1_ref, q1_ref, i, g1_ref, be1_ref, inv_n1)
            h2 = conv(w2_ref, b2_ref, a1.astype(jnp.bfloat16))    # (c2, TN)
            s2_ref[i] = s2_ref[i] + jnp.sum(h2)
            q2_ref[i] = q2_ref[i] + jnp.sum(h2 * h2)

    # ---- phase 2: full forward + running max over points -------------------
    @pl.when(p == 2)
    def _():
        for i in range(tb):
            a1 = gn_relu(conv1(i), s1_ref, q1_ref, i, g1_ref, be1_ref, inv_n1)
            h2 = conv(w2_ref, b2_ref, a1.astype(jnp.bfloat16))
            a2 = gn_relu(h2, s2_ref, q2_ref, i, g2_ref, be2_ref, inv_n2)
            h3 = conv(w3_ref, b3_ref, a2.astype(jnp.bfloat16))    # (Cout, TN)
            o_ref[i, 0, :] = jnp.maximum(o_ref[i, 0, :], jnp.max(h3, axis=1))


def _pick_block(total, candidates):
    for c in candidates:
        if c <= total and total % c == 0:
            return c
    return total


def shared_feature_net(x_ncw, params):
    """x_ncw: (B, Cin=7, N) float32, PyTorch NCW layout.  Returns (B, Cout)."""
    (w1, b1, g1, be1, w2, b2, g2, be2, w3, b3) = params
    B, Cin, N = x_ncw.shape
    Cout = w3.shape[0]

    tb = _pick_block(B, (8, 4, 2))                     # samples per grid step
    tn = N if N <= 2048 else _pick_block(N, (2048, 1024, 512, 256, 128))
    nb, nt = B // tb, N // tn

    # bf16 weights for the MXU (cast once in the wrapper; biases stay f32).
    w1b = w1.astype(jnp.bfloat16)
    w2b = w2.astype(jnp.bfloat16)
    w3b = w3.astype(jnp.bfloat16)

    def const2d(arr):
        return pl.BlockSpec(arr.shape, lambda b, p, t: (0, 0))

    grid_spec = pltpu.PrefetchScalarGridSpec(
        num_scalar_prefetch=0,
        grid=(nb, 3, nt),
        in_specs=[
            pl.BlockSpec((tb, Cin, tn), lambda b, p, t: (b, 0, t)),
            const2d(w1b), const2d(b1), const2d(g1), const2d(be1),
            const2d(w2b), const2d(b2), const2d(g2), const2d(be2),
            const2d(w3b), const2d(b3),
        ],
        out_specs=pl.BlockSpec((tb, 1, Cout), lambda b, p, t: (b, 0, 0)),
        scratch_shapes=[pltpu.VMEM((tb, 1, 1), jnp.float32)] * 4,
    )

    out = pl.pallas_call(
        functools.partial(_shared_feature_kernel, N),
        out_shape=jax.ShapeDtypeStruct((B, 1, Cout), jnp.float32),
        grid_spec=grid_spec,
        compiler_params=pltpu.CompilerParams(
            dimension_semantics=("parallel", "arbitrary", "arbitrary")),
    )(x_ncw, w1b, b1, g1, be1, w2b, b2, g2, be2, w3b, b3)

    return out[:, 0, :]                                             # (B, Cout)


def reference(x_ncw, params, mxu_bf16):
    """Pure-JAX reference.  mxu_bf16=True mimics the kernel's bf16 matmuls."""
    (w1, b1, g1, be1, w2, b2, g2, be2, w3, b3) = params
    cast = (lambda a: a.astype(jnp.bfloat16)) if mxu_bf16 else (lambda a: a)

    def conv(w, b, h):
        return jnp.einsum("oc,bcn->bon", cast(w), cast(h),
                          preferred_element_type=jnp.float32) + b

    def gn_relu(h, g, be):
        n = h.shape[1] * h.shape[2]
        mean = jnp.sum(h, axis=(1, 2), keepdims=True) / n
        var = jnp.sum(h * h, axis=(1, 2), keepdims=True) / n - mean * mean
        return jax.nn.relu((h - mean) * jax.lax.rsqrt(var + EPS) * g + be)

    h = conv(w1, b1, x_ncw.astype(jnp.float32))
    h = gn_relu(h, g1, be1)
    h = conv(w2, b2, h)
    h = gn_relu(h, g2, be2)
    h = conv(w3, b3, h)
    return jnp.max(h, axis=2)                                       # (B, Cout)


def make_params(key, n_channel_out=128):
    """Channels-first weights: w (Cout, Cin) == squeezed Conv1d weight; (Cout,1) vectors."""
    dims = [(7, 64), (64, 128), (128, n_channel_out)]
    keys = jax.random.split(key, 10)
    params, k = [], 0
    for i, (cin, cout) in enumerate(dims):
        w = 0.1 * jax.random.normal(keys[k], (cout, cin), jnp.float32); k += 1
        b = 0.1 * jax.random.normal(keys[k], (cout, 1), jnp.float32); k += 1
        params += [w, b]
        if i < 2:  # GroupNorm affine params for the first two blocks
            g = 1.0 + 0.1 * jax.random.normal(keys[k], (cout, 1), jnp.float32); k += 1
            be = 0.1 * jax.random.normal(keys[k], (cout, 1), jnp.float32); k += 1
            params += [g, be]
    return tuple(params)


if __name__ == "__main__":
    key = jax.random.PRNGKey(0)
    k_x, k_p = jax.random.split(key)

    B, Cin, N = 2, 7, 16                                            # small shapes
    x = jax.random.normal(k_x, (B, Cin, N), jnp.float32)
    params = make_params(k_p, n_channel_out=128)

    out = jax.block_until_ready(shared_feature_net(x, params))
    assert out.shape == (B, 128), out.shape

    # Tight check vs a reference that mimics the kernel's bf16 matmuls exactly.
    ref_b = reference(x, params, mxu_bf16=True)
    assert jnp.allclose(out, ref_b, atol=1e-2, rtol=1e-2), \
        float(jnp.max(jnp.abs(out - ref_b)))

    # Loose sanity check vs the full-f32 PyTorch-semantics reference.
    ref_f = reference(x, params, mxu_bf16=False)
    assert jnp.allclose(out, ref_f, atol=1e-1, rtol=1e-1), \
        float(jnp.max(jnp.abs(out - ref_f)))

    print("KERNEL_OK")
</pallas_src>

<mosaic_0001>
module attributes {stable_mosaic.version = 11 : i64} {
  func.func @_shared_feature_kernel(%arg0: i32, %arg1: i32, %arg2: i32, %arg3: memref<2x7x16xf32, #tpu.memory_space<vmem>>, %arg4: memref<64x7xbf16, #tpu.memory_space<vmem>>, %arg5: memref<64x1xf32, #tpu.memory_space<vmem>>, %arg6: memref<64x1xf32, #tpu.memory_space<vmem>>, %arg7: memref<64x1xf32, #tpu.memory_space<vmem>>, %arg8: memref<128x64xbf16, #tpu.memory_space<vmem>>, %arg9: memref<128x1xf32, #tpu.memory_space<vmem>>, %arg10: memref<128x1xf32, #tpu.memory_space<vmem>>, %arg11: memref<128x1xf32, #tpu.memory_space<vmem>>, %arg12: memref<128x128xbf16, #tpu.memory_space<vmem>>, %arg13: memref<128x1xf32, #tpu.memory_space<vmem>>, %arg14: memref<2x1x128xf32, #tpu.memory_space<vmem>>, %arg15: memref<2x1x1xf32, #tpu.memory_space<vmem>>, %arg16: memref<2x1x1xf32, #tpu.memory_space<vmem>>, %arg17: memref<2x1x1xf32, #tpu.memory_space<vmem>>, %arg18: memref<2x1x1xf32, #tpu.memory_space<vmem>>) attributes {dimension_semantics = [#tpu.dimension_semantics<parallel>, #tpu.dimension_semantics<arbitrary>, #tpu.dimension_semantics<arbitrary>], iteration_bounds = array<i64: 1, 3, 1>, scalar_prefetch = 0 : i64, scratch_operands = 4 : i64, tpu.core_type = #tpu.core_type<tc>, window_params = [{transform_indices = @transform_0, window_bounds = array<i64: 2, 7, 16>}, {pipeline_mode = #tpu.pipeline_mode<synchronous>, transform_indices = @transform_1, window_bounds = array<i64: 64, 7>}, {pipeline_mode = #tpu.pipeline_mode<synchronous>, transform_indices = @transform_2, window_bounds = array<i64: 64, 1>}, {pipeline_mode = #tpu.pipeline_mode<synchronous>, transform_indices = @transform_3, window_bounds = array<i64: 64, 1>}, {pipeline_mode = #tpu.pipeline_mode<synchronous>, transform_indices = @transform_4, window_bounds = array<i64: 64, 1>}, {pipeline_mode = #tpu.pipeline_mode<synchronous>, transform_indices = @transform_5, window_bounds = array<i64: 128, 64>}, {pipeline_mode = #tpu.pipeline_mode<synchronous>, transform_indices = @transform_6, window_bounds = array<i64: 128, 1>}, {pipeline_mode = #tpu.pipeline_mode<synchronous>, transform_indices = @transform_7, window_bounds = array<i64: 128, 1>}, {pipeline_mode = #tpu.pipeline_mode<synchronous>, transform_indices = @transform_8, window_bounds = array<i64: 128, 1>}, {pipeline_mode = #tpu.pipeline_mode<synchronous>, transform_indices = @transform_9, window_bounds = array<i64: 128, 128>}, {pipeline_mode = #tpu.pipeline_mode<synchronous>, transform_indices = @transform_10, window_bounds = array<i64: 128, 1>}, {transform_indices = @transform_11, window_bounds = array<i64: 2, 1, 128>}]} {
    %c0_i32 = arith.constant 0 : i32
    %0 = arith.cmpi eq, %arg1, %c0_i32 : i32
    %c0_i32_0 = arith.constant 0 : i32
    %1 = arith.cmpi eq, %arg2, %c0_i32_0 : i32
    %2 = arith.andi %0, %1 : i1
    %3 = arith.extui %2 : i1 to i32
    %c0_i32_1 = arith.constant 0 : i32
    %4 = arith.cmpi ne, %3, %c0_i32_1 : i32
    scf.if %4 {
      %cst = arith.constant 0.000000e+00 : f32
      %24 = vector.broadcast %cst : f32 to vector<2x1x1xf32>
      %c0 = arith.constant 0 : index
      %c0_12 = arith.constant 0 : index
      %c0_13 = arith.constant 0 : index
      %25 = vector.load %arg15[%c0, %c0_12, %c0_13] : memref<2x1x1xf32, #tpu.memory_space<vmem>>, vector<2x1x1xf32>
      tpu.vector_store %arg15[%c0, %c0_12, %c0_13], %24 {strides = array<i32>} : memref<2x1x1xf32, #tpu.memory_space<vmem>>, vector<2x1x1xf32>,
      %cst_14 = arith.constant 0.000000e+00 : f32
      %26 = vector.broadcast %cst_14 : f32 to vector<2x1x1xf32>
      %c0_15 = arith.constant 0 : index
      %c0_16 = arith.constant 0 : index
      %c0_17 = arith.constant 0 : index
      %27 = vector.load %arg16[%c0_15, %c0_16, %c0_17] : memref<2x1x1xf32, #tpu.memory_space<vmem>>, vector<2x1x1xf32>
      tpu.vector_store %arg16[%c0_15, %c0_16, %c0_17], %26 {strides = array<i32>} : memref<2x1x1xf32, #tpu.memory_space<vmem>>, vector<2x1x1xf32>,
    } else {
    }
    %c1_i32 = arith.constant 1 : i32
    %5 = arith.cmpi eq, %arg1, %c1_i32 : i32
    %c0_i32_2 = arith.constant 0 : i32
    %6 = arith.cmpi eq, %arg2, %c0_i32_2 : i32
    %7 = arith.andi %5, %6 : i1
    %8 = arith.extui %7 : i1 to i32
    %c0_i32_3 = arith.constant 0 : i32
    %9 = arith.cmpi ne, %8, %c0_i32_3 : i32
    scf.if %9 {
      %cst = arith.constant 0.000000e+00 : f32
      %24 = vector.broadcast %cst : f32 to vector<2x1x1xf32>
      %c0 = arith.constant 0 : index
      %c0_12 = arith.constant 0 : index
      %c0_13 = arith.constant 0 : index
      %25 = vector.load %arg17[%c0, %c0_12, %c0_13] : memref<2x1x1xf32, #tpu.memory_space<vmem>>, vector<2x1x1xf32>
      tpu.vector_store %arg17[%c0, %c0_12, %c0_13], %24 {strides = array<i32>} : memref<2x1x1xf32, #tpu.memory_space<vmem>>, vector<2x1x1xf32>,
      %cst_14 = arith.constant 0.000000e+00 : f32
      %26 = vector.broadcast %cst_14 : f32 to vector<2x1x1xf32>
      %c0_15 = arith.constant 0 : index
      %c0_16 = arith.constant 0 : index
      %c0_17 = arith.constant 0 : index
      %27 = vector.load %arg18[%c0_15, %c0_16, %c0_17] : memref<2x1x1xf32, #tpu.memory_space<vmem>>, vector<2x1x1xf32>
      tpu.vector_store %arg18[%c0_15, %c0_16, %c0_17], %26 {strides = array<i32>} : memref<2x1x1xf32, #tpu.memory_space<vmem>>, vector<2x1x1xf32>,
    } else {
    }
    %c2_i32 = arith.constant 2 : i32
    %10 = arith.cmpi eq, %arg1, %c2_i32 : i32
    %c0_i32_4 = arith.constant 0 : i32
    %11 = arith.cmpi eq, %arg2, %c0_i32_4 : i32
    %12 = arith.andi %10, %11 : i1
    %13 = arith.extui %12 : i1 to i32
    %c0_i32_5 = arith.constant 0 : i32
    %14 = arith.cmpi ne, %13, %c0_i32_5 : i32
    scf.if %14 {
      %cst = arith.constant 0xFF800000 : f32
      %24 = vector.broadcast %cst : f32 to vector<2x1x128xf32>
      %c0 = arith.constant 0 : index
      %c0_12 = arith.constant 0 : index
      %c0_13 = arith.constant 0 : index
      %25 = vector.load %arg14[%c0, %c0_12, %c0_13] : memref<2x1x128xf32, #tpu.memory_space<vmem>>, vector<2x1x128xf32>
      tpu.vector_store %arg14[%c0, %c0_12, %c0_13], %24 {strides = array<i32>} : memref<2x1x128xf32, #tpu.memory_space<vmem>>, vector<2x1x128xf32>,
    } else {
    }
    %c0_i32_6 = arith.constant 0 : i32
    %15 = arith.cmpi eq, %arg1, %c0_i32_6 : i32
    %16 = arith.extui %15 : i1 to i32
    %c0_i32_7 = arith.constant 0 : i32
    %17 = arith.cmpi ne, %16, %c0_i32_7 : i32
    scf.if %17 {
      %c0 = arith.constant 0 : index
      %c0_12 = arith.constant 0 : index
      %c0_13 = arith.constant 0 : index
      %24 = vector.load %arg3[%c0, %c0_12, %c0_13] : memref<2x7x16xf32, #tpu.memory_space<vmem>>, vector<1x7x16xf32>
      %25 = vector.shape_cast %24 : vector<1x7x16xf32> to vector<7x16xf32>
      %26 = arith.truncf %25 : vector<7x16xf32> to vector<7x16xbf16>
      %c0_14 = arith.constant 0 : index
      %c0_15 = arith.constant 0 : index
      %27 = vector.load %arg4[%c0_14, %c0_15] : memref<64x7xbf16, #tpu.memory_space<vmem>>, vector<64x7xbf16>
      %cst = arith.constant dense<0.000000e+00> : vector<64x16xf32>
      %28 = tpu.matmul %27, %26, %cst {dimension_numbers = #tpu.dot_dimension_numbers<[1], [0], [0], [1], [0, 0, 1, 1], [], []>} : vector<64x7xbf16>, vector<7x16xbf16>, vector<64x16xf32> -> vector<64x16xf32>
      %c0_16 = arith.constant 0 : index
      %c0_17 = arith.constant 0 : index
      %29 = vector.load %arg5[%c0_16, %c0_17] : memref<64x1xf32, #tpu.memory_space<vmem>>, vector<64x1xf32>
      %30 = vector.broadcast %29 : vector<64x1xf32> to vector<64x16xf32>
      %31 = arith.addf %28, %30 : vector<64x16xf32>
      %c0_18 = arith.constant 0 : index
      %c0_19 = arith.constant 0 : index
      %c0_20 = arith.constant 0 : index
      %32 = vector.load %arg15[%c0_18, %c0_19, %c0_20] : memref<2x1x1xf32, #tpu.memory_space<vmem>>, vector<1x1x1xf32>
      %33 = vector.shape_cast %32 : vector<1x1x1xf32> to vector<1x1xf32>
      %34 = vector.shape_cast %31 : vector<64x16xf32> to vector<1x64x16xf32>
      %cst_21 = arith.constant dense<0.000000e+00> : vector<1xf32>
      %35 = vector.multi_reduction <add>, %34, %cst_21 [1, 2] : vector<1x64x16xf32> to vector<1xf32>
      %36 = vector.shape_cast %35 : vector<1xf32> to vector<1x1x1xf32>
      %37 = vector.extract %36[0, 0, 0] : f32 from vector<1x1x1xf32>
      %38 = vector.broadcast %37 : f32 to vector<1x1xf32>
      %39 = arith.addf %33, %38 : vector<1x1xf32>
      %c0_22 = arith.constant 0 : index
      %c0_23 = arith.constant 0 : index
      %c0_24 = arith.constant 0 : index
      %40 = vector.load %arg15[%c0_22, %c0_23, %c0_24] : memref<2x1x1xf32, #tpu.memory_space<vmem>>, vector<1x1x1xf32>
      %41 = vector.shape_cast %40 : vector<1x1x1xf32> to vector<1x1xf32>
      %42 = vector.shape_cast %39 : vector<1x1xf32> to vector<1x1x1xf32>
      tpu.vector_store %arg15[%c0_22, %c0_23, %c0_24], %42 {strides = array<i32>} : memref<2x1x1xf32, #tpu.memory_space<vmem>>, vector<1x1x1xf32>,
      %c0_25 = arith.constant 0 : index
      %c0_26 = arith.constant 0 : index
      %c0_27 = arith.constant 0 : index
      %43 = vector.load %arg16[%c0_25, %c0_26, %c0_27] : memref<2x1x1xf32, #tpu.memory_space<vmem>>, vector<1x1x1xf32>
      %44 = vector.shape_cast %43 : vector<1x1x1xf32> to vector<1x1xf32>
      %45 = arith.mulf %31, %31 : vector<64x16xf32>
      %46 = vector.shape_cast %45 : vector<64x16xf32> to vector<1x64x16xf32>
      %cst_28 = arith.constant dense<0.000000e+00> : vector<1xf32>
      %47 = vector.multi_reduction <add>, %46, %cst_28 [1, 2] : vector<1x64x16xf32> to vector<1xf32>
      %48 = vector.shape_cast %47 : vector<1xf32> to vector<1x1x1xf32>
      %49 = vector.extract %48[0, 0, 0] : f32 from vector<1x1x1xf32>
      %50 = vector.broadcast %49 : f32 to vector<1x1xf32>
      %51 = arith.addf %44, %50 : vector<1x1xf32>
      %c0_29 = arith.constant 0 : index
      %c0_30 = arith.constant 0 : index
      %c0_31 = arith.constant 0 : index
      %52 = vector.load %arg16[%c0_29, %c0_30, %c0_31] : memref<2x1x1xf32, #tpu.memory_space<vmem>>, vector<1x1x1xf32>
      %53 = vector.shape_cast %52 : vector<1x1x1xf32> to vector<1x1xf32>
      %54 = vector.shape_cast %51 : vector<1x1xf32> to vector<1x1x1xf32>
      tpu.vector_store %arg16[%c0_29, %c0_30, %c0_31], %54 {strides = array<i32>} : memref<2x1x1xf32, #tpu.memory_space<vmem>>, vector<1x1x1xf32>,
      %c1 = arith.constant 1 : index
      %c0_32 = arith.constant 0 : index
      %c0_33 = arith.constant 0 : index
      %55 = vector.load %arg3[%c1, %c0_32, %c0_33] : memref<2x7x16xf32, #tpu.memory_space<vmem>>, vector<1x7x16xf32>
      %56 = vector.shape_cast %55 : vector<1x7x16xf32> to vector<7x16xf32>
      %57 = arith.truncf %56 : vector<7x16xf32> to vector<7x16xbf16>
      %c0_34 = arith.constant 0 : index
      %c0_35 = arith.constant 0 : index
      %58 = vector.load %arg4[%c0_34, %c0_35] : memref<64x7xbf16, #tpu.memory_space<vmem>>, vector<64x7xbf16>
      %cst_36 = arith.constant dense<0.000000e+00> : vector<64x16xf32>
      %59 = tpu.matmul %58, %57, %cst_36 {dimension_numbers = #tpu.dot_dimension_numbers<[1], [0], [0], [1], [0, 0, 1, 1], [], []>} : vector<64x7xbf16>, vector<7x16xbf16>, vector<64x16xf32> -> vector<64x16xf32>
      %c0_37 = arith.constant 0 : index
      %c0_38 = arith.constant 0 : index
      %60 = vector.load %arg5[%c0_37, %c0_38] : memref<64x1xf32, #tpu.memory_space<vmem>>, vector<64x1xf32>
      %61 = vector.broadcast %60 : vector<64x1xf32> to vector<64x16xf32>
      %62 = arith.addf %59, %61 : vector<64x16xf32>
      %c1_39 = arith.constant 1 : index
      %c0_40 = arith.constant 0 : index
      %c0_41 = arith.constant 0 : index
      %63 = vector.load %arg15[%c1_39, %c0_40, %c0_41] : memref<2x1x1xf32, #tpu.memory_space<vmem>>, vector<1x1x1xf32>
      %64 = vector.shape_cast %63 : vector<1x1x1xf32> to vector<1x1xf32>
      %65 = vector.shape_cast %62 : vector<64x16xf32> to vector<1x64x16xf32>
      %cst_42 = arith.constant dense<0.000000e+00> : vector<1xf32>
      %66 = vector.multi_reduction <add>, %65, %cst_42 [1, 2] : vector<1x64x16xf32> to vector<1xf32>
      %67 = vector.shape_cast %66 : vector<1xf32> to vector<1x1x1xf32>
      %68 = vector.extract %67[0, 0, 0] : f32 from vector<1x1x1xf32>
      %69 = vector.broadcast %68 : f32 to vector<1x1xf32>
      %70 = arith.addf %64, %69 : vector<1x1xf32>
      %c1_43 = arith.constant 1 : index
      %c0_44 = arith.constant 0 : index
      %c0_45 = arith.constant 0 : index
      %71 = vector.load %arg15[%c1_43, %c0_44, %c0_45] : memref<2x1x1xf32, #tpu.memory_space<vmem>>, vector<1x1x1xf32>
      %72 = vector.shape_cast %71 : vector<1x1x1xf32> to vector<1x1xf32>
      %73 = vector.shape_cast %70 : vector<1x1xf32> to vector<1x1x1xf32>
      tpu.vector_store %arg15[%c1_43, %c0_44, %c0_45], %73 {strides = array<i32>} : memref<2x1x1xf32, #tpu.memory_space<vmem>>, vector<1x1x1xf32>,
      %c1_46 = arith.constant 1 : index
      %c0_47 = arith.constant 0 : index
      %c0_48 = arith.constant 0 : index
      %74 = vector.load %arg16[%c1_46, %c0_47, %c0_48] : memref<2x1x1xf32, #tpu.memory_space<vmem>>, vector<1x1x1xf32>
      %75 = vector.shape_cast %74 : vector<1x1x1xf32> to vector<1x1xf32>
      %76 = arith.mulf %62, %62 : vector<64x16xf32>
      %77 = vector.shape_cast %76 : vector<64x16xf32> to vector<1x64x16xf32>
      %cst_49 = arith.constant dense<0.000000e+00> : vector<1xf32>
      %78 = vector.multi_reduction <add>, %77, %cst_49 [1, 2] : vector<1x64x16xf32> to vector<1xf32>
      %79 = vector.shape_cast %78 : vector<1xf32> to vector<1x1x1xf32>
      %80 = vector.extract %79[0, 0, 0] : f32 from vector<1x1x1xf32>
      %81 = vector.broadcast %80 : f32 to vector<1x1xf32>
      %82 = arith.addf %75, %81 : vector<1x1xf32>
      %c1_50 = arith.constant 1 : index
      %c0_51 = arith.constant 0 : index
      %c0_52 = arith.constant 0 : index
      %83 = vector.load %arg16[%c1_50, %c0_51, %c0_52] : memref<2x1x1xf32, #tpu.memory_space<vmem>>, vector<1x1x1xf32>
      %84 = vector.shape_cast %83 : vector<1x1x1xf32> to vector<1x1xf32>
      %85 = vector.shape_cast %82 : vector<1x1xf32> to vector<1x1x1xf32>
      tpu.vector_store %arg16[%c1_50, %c0_51, %c0_52], %85 {strides = array<i32>} : memref<2x1x1xf32, #tpu.memory_space<vmem>>, vector<1x1x1xf32>,
    } else {
    }
    %c1_i32_8 = arith.constant 1 : i32
    %18 = arith.cmpi eq, %arg1, %c1_i32_8 : i32
    %19 = arith.extui %18 : i1 to i32
    %c0_i32_9 = arith.constant 0 : i32
    %20 = arith.cmpi ne, %19, %c0_i32_9 : i32
    scf.if %20 {
      %c0 = arith.constant 0 : index
      %c0_12 = arith.constant 0 : index
      %c0_13 = arith.constant 0 : index
      %24 = vector.load %arg3[%c0, %c0_12, %c0_13] : memref<2x7x16xf32, #tpu.memory_space<vmem>>, vector<1x7x16xf32>
      %25 = vector.shape_cast %24 : vector<1x7x16xf32> to vector<7x16xf32>
      %26 = arith.truncf %25 : vector<7x16xf32> to vector<7x16xbf16>
      %c0_14 = arith.constant 0 : index
      %c0_15 = arith.constant 0 : index
      %27 = vector.load %arg4[%c0_14, %c0_15] : memref<64x7xbf16, #tpu.memory_space<vmem>>, vector<64x7xbf16>
      %cst = arith.constant dense<0.000000e+00> : vector<64x16xf32>
      %28 = tpu.matmul %27, %26, %cst {dimension_numbers = #tpu.dot_dimension_numbers<[1], [0], [0], [1], [0, 0, 1, 1], [], []>} : vector<64x7xbf16>, vector<7x16xbf16>, vector<64x16xf32> -> vector<64x16xf32>
      %c0_16 = arith.constant 0 : index
      %c0_17 = arith.constant 0 : index
      %29 = vector.load %arg5[%c0_16, %c0_17] : memref<64x1xf32, #tpu.memory_space<vmem>>, vector<64x1xf32>
      %30 = vector.broadcast %29 : vector<64x1xf32> to vector<64x16xf32>
      %31 = arith.addf %28, %30 : vector<64x16xf32>
      %c0_18 = arith.constant 0 : index
      %c0_19 = arith.constant 0 : index
      %c0_20 = arith.constant 0 : index
      %32 = vector.load %arg15[%c0_18, %c0_19, %c0_20] : memref<2x1x1xf32, #tpu.memory_space<vmem>>, vector<1x1x1xf32>
      %33 = vector.shape_cast %32 : vector<1x1x1xf32> to vector<1x1xf32>
      %cst_21 = arith.constant 9.765625E-4 : f32
      %34 = vector.broadcast %cst_21 : f32 to vector<1x1xf32>
      %35 = arith.mulf %33, %34 : vector<1x1xf32>
      %c0_22 = arith.constant 0 : index
      %c0_23 = arith.constant 0 : index
      %c0_24 = arith.constant 0 : index
      %36 = vector.load %arg16[%c0_22, %c0_23, %c0_24] : memref<2x1x1xf32, #tpu.memory_space<vmem>>, vector<1x1x1xf32>
      %37 = vector.shape_cast %36 : vector<1x1x1xf32> to vector<1x1xf32>
      %cst_25 = arith.constant 9.765625E-4 : f32
      %38 = vector.broadcast %cst_25 : f32 to vector<1x1xf32>
      %39 = arith.mulf %37, %38 : vector<1x1xf32>
      %40 = arith.mulf %35, %35 : vector<1x1xf32>
      %41 = arith.subf %39, %40 : vector<1x1xf32>
      %42 = vector.broadcast %35 : vector<1x1xf32> to vector<64x16xf32>
      %43 = arith.subf %31, %42 : vector<64x16xf32>
      %cst_26 = arith.constant 9.99999974E-6 : f32
      %44 = vector.broadcast %cst_26 : f32 to vector<1x1xf32>
      %45 = arith.addf %41, %44 : vector<1x1xf32>
      %46 = math.rsqrt %45 : vector<1x1xf32>
      %47 = vector.broadcast %46 : vector<1x1xf32> to vector<64x16xf32>
      %48 = arith.mulf %43, %47 : vector<64x16xf32>
      %c0_27 = arith.constant 0 : index
      %c0_28 = arith.constant 0 : index
      %49 = vector.load %arg6[%c0_27, %c0_28] : memref<64x1xf32, #tpu.memory_space<vmem>>, vector<64x1xf32>
      %50 = vector.broadcast %49 : vector<64x1xf32> to vector<64x16xf32>
      %51 = arith.mulf %48, %50 : vector<64x16xf32>
      %c0_29 = arith.constant 0 : index
      %c0_30 = arith.constant 0 : index
      %52 = vector.load %arg7[%c0_29, %c0_30] : memref<64x1xf32, #tpu.memory_space<vmem>>, vector<64x1xf32>
      %53 = vector.broadcast %52 : vector<64x1xf32> to vector<64x16xf32>
      %54 = arith.addf %51, %53 : vector<64x16xf32>
      %cst_31 = arith.constant 0.000000e+00 : f32
      %55 = vector.broadcast %cst_31 : f32 to vector<64x16xf32>
      %56 = arith.maximumf %54, %55 : vector<64x16xf32>
      %57 = arith.truncf %56 : vector<64x16xf32> to vector<64x16xbf16>
      %c0_32 = arith.constant 0 : index
      %c0_33 = arith.constant 0 : index
      %58 = vector.load %arg8[%c0_32, %c0_33] : memref<128x64xbf16, #tpu.memory_space<vmem>>, vector<128x64xbf16>
      %cst_34 = arith.constant dense<0.000000e+00> : vector<128x16xf32>
      %59 = tpu.matmul %58, %57, %cst_34 {dimension_numbers = #tpu.dot_dimension_numbers<[1], [0], [0], [1], [0, 0, 1, 1], [], []>} : vector<128x64xbf16>, vector<64x16xbf16>, vector<128x16xf32> -> vector<128x16xf32>
      %c0_35 = arith.constant 0 : index
      %c0_36 = arith.constant 0 : index
      %60 = vector.load %arg9[%c0_35, %c0_36] : memref<128x1xf32, #tpu.memory_space<vmem>>, vector<128x1xf32>
      %61 = vector.broadcast %60 : vector<128x1xf32> to vector<128x16xf32>
      %62 = arith.addf %59, %61 : vector<128x16xf32>
      %c0_37 = arith.constant 0 : index
      %c0_38 = arith.constant 0 : index
      %c0_39 = arith.constant 0 : index
      %63 = vector.load %arg17[%c0_37, %c0_38, %c0_39] : memref<2x1x1xf32, #tpu.memory_space<vmem>>, vector<1x1x1xf32>
      %64 = vector.shape_cast %63 : vector<1x1x1xf32> to vector<1x1xf32>
      %65 = vector.shape_cast %62 : vector<128x16xf32> to vector<1x128x16xf32>
      %cst_40 = arith.constant dense<0.000000e+00> : vector<1xf32>
      %66 = vector.multi_reduction <add>, %65, %cst_40 [1, 2] : vector<1x128x16xf32> to vector<1xf32>
      %67 = vector.shape_cast %66 : vector<1xf32> to vector<1x1x1xf32>
      %68 = vector.extract %67[0, 0, 0] : f32 from vector<1x1x1xf32>
      %69 = vector.broadcast %68 : f32 to vector<1x1xf32>
      %70 = arith.addf %64, %69 : vector<1x1xf32>
      %c0_41 = arith.constant 0 : index
      %c0_42 = arith.constant 0 : index
      %c0_43 = arith.constant 0 : index
      %71 = vector.load %arg17[%c0_41, %c0_42, %c0_43] : memref<2x1x1xf32, #tpu.memory_space<vmem>>, vector<1x1x1xf32>
      %72 = vector.shape_cast %71 : vector<1x1x1xf32> to vector<1x1xf32>
      %73 = vector.shape_cast %70 : vector<1x1xf32> to vector<1x1x1xf32>
      tpu.vector_store %arg17[%c0_41, %c0_42, %c0_43], %73 {strides = array<i32>} : memref<2x1x1xf32, #tpu.memory_space<vmem>>, vector<1x1x1xf32>,
      %c0_44 = arith.constant 0 : index
      %c0_45 = arith.constant 0 : index
      %c0_46 = arith.constant 0 : index
      %74 = vector.load %arg18[%c0_44, %c0_45, %c0_46] : memref<2x1x1xf32, #tpu.memory_space<vmem>>, vector<1x1x1xf32>
      %75 = vector.shape_cast %74 : vector<1x1x1xf32> to vector<1x1xf32>
      %76 = arith.mulf %62, %62 : vector<128x16xf32>
      %77 = vector.shape_cast %76 : vector<128x16xf32> to vector<1x128x16xf32>
      %cst_47 = arith.constant dense<0.000000e+00> : vector<1xf32>
      %78 = vector.multi_reduction <add>, %77, %cst_47 [1, 2] : vector<1x128x16xf32> to vector<1xf32>
      %79 = vector.shape_cast %78 : vector<1xf32> to vector<1x1x1xf32>
      %80 = vector.extract %79[0, 0, 0] : f32 from vector<1x1x1xf32>
      %81 = vector.broadcast %80 : f32 to vector<1x1xf32>
      %82 = arith.addf %75, %81 : vector<1x1xf32>
      %c0_48 = arith.constant 0 : index
      %c0_49 = arith.constant 0 : index
      %c0_50 = arith.constant 0 : index
      %83 = vector.load %arg18[%c0_48, %c0_49, %c0_50] : memref<2x1x1xf32, #tpu.memory_space<vmem>>, vector<1x1x1xf32>
      %84 = vector.shape_cast %83 : vector<1x1x1xf32> to vector<1x1xf32>
      %85 = vector.shape_cast %82 : vector<1x1xf32> to vector<1x1x1xf32>
      tpu.vector_store %arg18[%c0_48, %c0_49, %c0_50], %85 {strides = array<i32>} : memref<2x1x1xf32, #tpu.memory_space<vmem>>, vector<1x1x1xf32>,
      %c1 = arith.constant 1 : index
      %c0_51 = arith.constant 0 : index
      %c0_52 = arith.constant 0 : index
      %86 = vector.load %arg3[%c1, %c0_51, %c0_52] : memref<2x7x16xf32, #tpu.memory_space<vmem>>, vector<1x7x16xf32>
      %87 = vector.shape_cast %86 : vector<1x7x16xf32> to vector<7x16xf32>
      %88 = arith.truncf %87 : vector<7x16xf32> to vector<7x16xbf16>
      %c0_53 = arith.constant 0 : index
      %c0_54 = arith.constant 0 : index
      %89 = vector.load %arg4[%c0_53, %c0_54] : memref<64x7xbf16, #tpu.memory_space<vmem>>, vector<64x7xbf16>
      %cst_55 = arith.constant dense<0.000000e+00> : vector<64x16xf32>
      %90 = tpu.matmul %89, %88, %cst_55 {dimension_numbers = #tpu.dot_dimension_numbers<[1], [0], [0], [1], [0, 0, 1, 1], [], []>} : vector<64x7xbf16>, vector<7x16xbf16>, vector<64x16xf32> -> vector<64x16xf32>
      %c0_56 = arith.constant 0 : index
      %c0_57 = arith.constant 0 : index
      %91 = vector.load %arg5[%c0_56, %c0_57] : memref<64x1xf32, #tpu.memory_space<vmem>>, vector<64x1xf32>
      %92 = vector.broadcast %91 : vector<64x1xf32> to vector<64x16xf32>
      %93 = arith.addf %90, %92 : vector<64x16xf32>
      %c1_58 = arith.constant 1 : index
      %c0_59 = arith.constant 0 : index
      %c0_60 = arith.constant 0 : index
      %94 = vector.load %arg15[%c1_58, %c0_59, %c0_60] : memref<2x1x1xf32, #tpu.memory_space<vmem>>, vector<1x1x1xf32>
      %95 = vector.shape_cast %94 : vector<1x1x1xf32> to vector<1x1xf32>
      %cst_61 = arith.constant 9.765625E-4 : f32
      %96 = vector.broadcast %cst_61 : f32 to vector<1x1xf32>
      %97 = arith.mulf %95, %96 : vector<1x1xf32>
      %c1_62 = arith.constant 1 : index
      %c0_63 = arith.constant 0 : index
      %c0_64 = arith.constant 0 : index
      %98 = vector.load %arg16[%c1_62, %c0_63, %c0_64] : memref<2x1x1xf32, #tpu.memory_space<vmem>>, vector<1x1x1xf32>
      %99 = vector.shape_cast %98 : vector<1x1x1xf32> to vector<1x1xf32>
      %cst_65 = arith.constant 9.765625E-4 : f32
      %100 = vector.broadcast %cst_65 : f32 to vector<1x1xf32>
      %101 = arith.mulf %99, %100 : vector<1x1xf32>
      %102 = arith.mulf %97, %97 : vector<1x1xf32>
      %103 = arith.subf %101, %102 : vector<1x1xf32>
      %104 = vector.broadcast %97 : vector<1x1xf32> to vector<64x16xf32>
      %105 = arith.subf %93, %104 : vector<64x16xf32>
      %cst_66 = arith.constant 9.99999974E-6 : f32
      %106 = vector.broadcast %cst_66 : f32 to vector<1x1xf32>
      %107 = arith.addf %103, %106 : vector<1x1xf32>
      %108 = math.rsqrt %107 : vector<1x1xf32>
      %109 = vector.broadcast %108 : vector<1x1xf32> to vector<64x16xf32>
      %110 = arith.mulf %105, %109 : vector<64x16xf32>
      %c0_67 = arith.constant 0 : index
      %c0_68 = arith.constant 0 : index
      %111 = vector.load %arg6[%c0_67, %c0_68] : memref<64x1xf32, #tpu.memory_space<vmem>>, vector<64x1xf32>
      %112 = vector.broadcast %111 : vector<64x1xf32> to vector<64x16xf32>
      %113 = arith.mulf %110, %112 : vector<64x16xf32>
      %c0_69 = arith.constant 0 : index
      %c0_70 = arith.constant 0 : index
      %114 = vector.load %arg7[%c0_69, %c0_70] : memref<64x1xf32, #tpu.memory_space<vmem>>, vector<64x1xf32>
      %115 = vector.broadcast %114 : vector<64x1xf32> to vector<64x16xf32>
      %116 = arith.addf %113, %115 : vector<64x16xf32>
      %cst_71 = arith.constant 0.000000e+00 : f32
      %117 = vector.broadcast %cst_71 : f32 to vector<64x16xf32>
      %118 = arith.maximumf %116, %117 : vector<64x16xf32>
      %119 = arith.truncf %118 : vector<64x16xf32> to vector<64x16xbf16>
      %c0_72 = arith.constant 0 : index
      %c0_73 = arith.constant 0 : index
      %120 = vector.load %arg8[%c0_72, %c0_73] : memref<128x64xbf16, #tpu.memory_space<vmem>>, vector<128x64xbf16>
      %cst_74 = arith.constant dense<0.000000e+00> : vector<128x16xf32>
      %121 = tpu.matmul %120, %119, %cst_74 {dimension_numbers = #tpu.dot_dimension_numbers<[1], [0], [0], [1], [0, 0, 1, 1], [], []>} : vector<128x64xbf16>, vector<64x16xbf16>, vector<128x16xf32> -> vector<128x16xf32>
      %c0_75 = arith.constant 0 : index
      %c0_76 = arith.constant 0 : index
      %122 = vector.load %arg9[%c0_75, %c0_76] : memref<128x1xf32, #tpu.memory_space<vmem>>, vector<128x1xf32>
      %123 = vector.broadcast %122 : vector<128x1xf32> to vector<128x16xf32>
      %124 = arith.addf %121, %123 : vector<128x16xf32>
      %c1_77 = arith.constant 1 : index
      %c0_78 = arith.constant 0 : index
      %c0_79 = arith.constant 0 : index
      %125 = vector.load %arg17[%c1_77, %c0_78, %c0_79] : memref<2x1x1xf32, #tpu.memory_space<vmem>>, vector<1x1x1xf32>
      %126 = vector.shape_cast %125 : vector<1x1x1xf32> to vector<1x1xf32>
      %127 = vector.shape_cast %124 : vector<128x16xf32> to vector<1x128x16xf32>
      %cst_80 = arith.constant dense<0.000000e+00> : vector<1xf32>
      %128 = vector.multi_reduction <add>, %127, %cst_80 [1, 2] : vector<1x128x16xf32> to vector<1xf32>
      %129 = vector.shape_cast %128 : vector<1xf32> to vector<1x1x1xf32>
      %130 = vector.extract %129[0, 0, 0] : f32 from vector<1x1x1xf32>
      %131 = vector.broadcast %130 : f32 to vector<1x1xf32>
      %132 = arith.addf %126, %131 : vector<1x1xf32>
      %c1_81 = arith.constant 1 : index
      %c0_82 = arith.constant 0 : index
      %c0_83 = arith.constant 0 : index
      %133 = vector.load %arg17[%c1_81, %c0_82, %c0_83] : memref<2x1x1xf32, #tpu.memory_space<vmem>>, vector<1x1x1xf32>
      %134 = vector.shape_cast %133 : vector<1x1x1xf32> to vector<1x1xf32>
      %135 = vector.shape_cast %132 : vector<1x1xf32> to vector<1x1x1xf32>
      tpu.vector_store %arg17[%c1_81, %c0_82, %c0_83], %135 {strides = array<i32>} : memref<2x1x1xf32, #tpu.memory_space<vmem>>, vector<1x1x1xf32>,
      %c1_84 = arith.constant 1 : index
      %c0_85 = arith.constant 0 : index
      %c0_86 = arith.constant 0 : index
      %136 = vector.load %arg18[%c1_84, %c0_85, %c0_86] : memref<2x1x1xf32, #tpu.memory_space<vmem>>, vector<1x1x1xf32>
      %137 = vector.shape_cast %136 : vector<1x1x1xf32> to vector<1x1xf32>
      %138 = arith.mulf %124, %124 : vector<128x16xf32>
      %139 = vector.shape_cast %138 : vector<128x16xf32> to vector<1x128x16xf32>
      %cst_87 = arith.constant dense<0.000000e+00> : vector<1xf32>
      %140 = vector.multi_reduction <add>, %139, %cst_87 [1, 2] : vector<1x128x16xf32> to vector<1xf32>
      %141 = vector.shape_cast %140 : vector<1xf32> to vector<1x1x1xf32>
      %142 = vector.extract %141[0, 0, 0] : f32 from vector<1x1x1xf32>
      %143 = vector.broadcast %142 : f32 to vector<1x1xf32>
      %144 = arith.addf %137, %143 : vector<1x1xf32>
      %c1_88 = arith.constant 1 : index
      %c0_89 = arith.constant 0 : index
      %c0_90 = arith.constant 0 : index
      %145 = vector.load %arg18[%c1_88, %c0_89, %c0_90] : memref<2x1x1xf32, #tpu.memory_space<vmem>>, vector<1x1x1xf32>
      %146 = vector.shape_cast %145 : vector<1x1x1xf32> to vector<1x1xf32>
      %147 = vector.shape_cast %144 : vector<1x1xf32> to vector<1x1x1xf32>
      tpu.vector_store %arg18[%c1_88, %c0_89, %c0_90], %147 {strides = array<i32>} : memref<2x1x1xf32, #tpu.memory_space<vmem>>, vector<1x1x1xf32>,
    } else {
    }
    %c2_i32_10 = arith.constant 2 : i32
    %21 = arith.cmpi eq, %arg1, %c2_i32_10 : i32
    %22 = arith.extui %21 : i1 to i32
    %c0_i32_11 = arith.constant 0 : i32
    %23 = arith.cmpi ne, %22, %c0_i32_11 : i32
    scf.if %23 {
      %c0 = arith.constant 0 : index
      %c0_12 = arith.constant 0 : index
      %c0_13 = arith.constant 0 : index
      %24 = vector.load %arg3[%c0, %c0_12, %c0_13] : memref<2x7x16xf32, #tpu.memory_space<vmem>>, vector<1x7x16xf32>
      %25 = vector.shape_cast %24 : vector<1x7x16xf32> to vector<7x16xf32>
      %26 = arith.truncf %25 : vector<7x16xf32> to vector<7x16xbf16>
      %c0_14 = arith.constant 0 : index
      %c0_15 = arith.constant 0 : index
      %27 = vector.load %arg4[%c0_14, %c0_15] : memref<64x7xbf16, #tpu.memory_space<vmem>>, vector<64x7xbf16>
      %cst = arith.constant dense<0.000000e+00> : vector<64x16xf32>
      %28 = tpu.matmul %27, %26, %cst {dimension_numbers = #tpu.dot_dimension_numbers<[1], [0], [0], [1], [0, 0, 1, 1], [], []>} : vector<64x7xbf16>, vector<7x16xbf16>, vector<64x16xf32> -> vector<64x16xf32>
      %c0_16 = arith.constant 0 : index
      %c0_17 = arith.constant 0 : index
      %29 = vector.load %arg5[%c0_16, %c0_17] : memref<64x1xf32, #tpu.memory_space<vmem>>, vector<64x1xf32>
      %30 = vector.broadcast %29 : vector<64x1xf32> to vector<64x16xf32>
      %31 = arith.addf %28, %30 : vector<64x16xf32>
      %c0_18 = arith.constant 0 : index
      %c0_19 = arith.constant 0 : index
      %c0_20 = arith.constant 0 : index
      %32 = vector.load %arg15[%c0_18, %c0_19, %c0_20] : memref<2x1x1xf32, #tpu.memory_space<vmem>>, vector<1x1x1xf32>
      %33 = vector.shape_cast %32 : vector<1x1x1xf32> to vector<1x1xf32>
      %cst_21 = arith.constant 9.765625E-4 : f32
      %34 = vector.broadcast %cst_21 : f32 to vector<1x1xf32>
      %35 = arith.mulf %33, %34 : vector<1x1xf32>
      %c0_22 = arith.constant 0 : index
      %c0_23 = arith.constant 0 : index
      %c0_24 = arith.constant 0 : index
      %36 = vector.load %arg16[%c0_22, %c0_23, %c0_24] : memref<2x1x1xf32, #tpu.memory_space<vmem>>, vector<1x1x1xf32>
      %37 = vector.shape_cast %36 : vector<1x1x1xf32> to vector<1x1xf32>
      %cst_25 = arith.constant 9.765625E-4 : f32
      %38 = vector.broadcast %cst_25 : f32 to vector<1x1xf32>
      %39 = arith.mulf %37, %38 : vector<1x1xf32>
      %40 = arith.mulf %35, %35 : vector<1x1xf32>
      %41 = arith.subf %39, %40 : vector<1x1xf32>
      %42 = vector.broadcast %35 : vector<1x1xf32> to vector<64x16xf32>
      %43 = arith.subf %31, %42 : vector<64x16xf32>
      %cst_26 = arith.constant 9.99999974E-6 : f32
      %44 = vector.broadcast %cst_26 : f32 to vector<1x1xf32>
      %45 = arith.addf %41, %44 : vector<1x1xf32>
      %46 = math.rsqrt %45 : vector<1x1xf32>
      %47 = vector.broadcast %46 : vector<1x1xf32> to vector<64x16xf32>
      %48 = arith.mulf %43, %47 : vector<64x16xf32>
      %c0_27 = arith.constant 0 : index
      %c0_28 = arith.constant 0 : index
      %49 = vector.load %arg6[%c0_27, %c0_28] : memref<64x1xf32, #tpu.memory_space<vmem>>, vector<64x1xf32>
      %50 = vector.broadcast %49 : vector<64x1xf32> to vector<64x16xf32>
      %51 = arith.mulf %48, %50 : vector<64x16xf32>
      %c0_29 = arith.constant 0 : index
      %c0_30 = arith.constant 0 : index
      %52 = vector.load %arg7[%c0_29, %c0_30] : memref<64x1xf32, #tpu.memory_space<vmem>>, vector<64x1xf32>
      %53 = vector.broadcast %52 : vector<64x1xf32> to vector<64x16xf32>
      %54 = arith.addf %51, %53 : vector<64x16xf32>
      %cst_31 = arith.constant 0.000000e+00 : f32
      %55 = vector.broadcast %cst_31 : f32 to vector<64x16xf32>
      %56 = arith.maximumf %54, %55 : vector<64x16xf32>
      %57 = arith.truncf %56 : vector<64x16xf32> to vector<64x16xbf16>
      %c0_32 = arith.constant 0 : index
      %c0_33 = arith.constant 0 : index
      %58 = vector.load %arg8[%c0_32, %c0_33] : memref<128x64xbf16, #tpu.memory_space<vmem>>, vector<128x64xbf16>
      %cst_34 = arith.constant dense<0.000000e+00> : vector<128x16xf32>
      %59 = tpu.matmul %58, %57, %cst_34 {dimension_numbers = #tpu.dot_dimension_numbers<[1], [0], [0], [1], [0, 0, 1, 1], [], []>} : vector<128x64xbf16>, vector<64x16xbf16>, vector<128x16xf32> -> vector<128x16xf32>
      %c0_35 = arith.constant 0 : index
      %c0_36 = arith.constant 0 : index
      %60 = vector.load %arg9[%c0_35, %c0_36] : memref<128x1xf32, #tpu.memory_space<vmem>>, vector<128x1xf32>
      %61 = vector.broadcast %60 : vector<128x1xf32> to vector<128x16xf32>
      %62 = arith.addf %59, %61 : vector<128x16xf32>
      %c0_37 = arith.constant 0 : index
      %c0_38 = arith.constant 0 : index
      %c0_39 = arith.constant 0 : index
      %63 = vector.load %arg17[%c0_37, %c0_38, %c0_39] : memref<2x1x1xf32, #tpu.memory_space<vmem>>, vector<1x1x1xf32>
      %64 = vector.shape_cast %63 : vector<1x1x1xf32> to vector<1x1xf32>
      %cst_40 = arith.constant 4.8828125E-4 : f32
      %65 = vector.broadcast %cst_40 : f32 to vector<1x1xf32>
      %66 = arith.mulf %64, %65 : vector<1x1xf32>
      %c0_41 = arith.constant 0 : index
      %c0_42 = arith.constant 0 : index
      %c0_43 = arith.constant 0 : index
      %67 = vector.load %arg18[%c0_41, %c0_42, %c0_43] : memref<2x1x1xf32, #tpu.memory_space<vmem>>, vector<1x1x1xf32>
      %68 = vector.shape_cast %67 : vector<1x1x1xf32> to vector<1x1xf32>
      %cst_44 = arith.constant 4.8828125E-4 : f32
      %69 = vector.broadcast %cst_44 : f32 to vector<1x1xf32>
      %70 = arith.mulf %68, %69 : vector<1x1xf32>
      %71 = arith.mulf %66, %66 : vector<1x1xf32>
      %72 = arith.subf %70, %71 : vector<1x1xf32>
      %73 = vector.broadcast %66 : vector<1x1xf32> to vector<128x16xf32>
      %74 = arith.subf %62, %73 : vector<128x16xf32>
      %cst_45 = arith.constant 9.99999974E-6 : f32
      %75 = vector.broadcast %cst_45 : f32 to vector<1x1xf32>
      %76 = arith.addf %72, %75 : vector<1x1xf32>
      %77 = math.rsqrt %76 : vector<1x1xf32>
      %78 = vector.broadcast %77 : vector<1x1xf32> to vector<128x16xf32>
      %79 = arith.mulf %74, %78 : vector<128x16xf32>
      %c0_46 = arith.constant 0 : index
      %c0_47 = arith.constant 0 : index
      %80 = vector.load %arg10[%c0_46, %c0_47] : memref<128x1xf32, #tpu.memory_space<vmem>>, vector<128x1xf32>
      %81 = vector.broadcast %80 : vector<128x1xf32> to vector<128x16xf32>
      %82 = arith.mulf %79, %81 : vector<128x16xf32>
      %c0_48 = arith.constant 0 : index
      %c0_49 = arith.constant 0 : index
      %83 = vector.load %arg11[%c0_48, %c0_49] : memref<128x1xf32, #tpu.memory_space<vmem>>, vector<128x1xf32>
      %84 = vector.broadcast %83 : vector<128x1xf32> to vector<128x16xf32>
      %85 = arith.addf %82, %84 : vector<128x16xf32>
      %cst_50 = arith.constant 0.000000e+00 : f32
      %86 = vector.broadcast %cst_50 : f32 to vector<128x16xf32>
      %87 = arith.maximumf %85, %86 : vector<128x16xf32>
      %88 = arith.truncf %87 : vector<128x16xf32> to vector<128x16xbf16>
      %c0_51 = arith.constant 0 : index
      %c0_52 = arith.constant 0 : index
      %89 = vector.load %arg12[%c0_51, %c0_52] : memref<128x128xbf16, #tpu.memory_space<vmem>>, vector<128x128xbf16>
      %cst_53 = arith.constant dense<0.000000e+00> : vector<128x16xf32>
      %90 = tpu.matmul %89, %88, %cst_53 {dimension_numbers = #tpu.dot_dimension_numbers<[1], [0], [0], [1], [0, 0, 1, 1], [], []>} : vector<128x128xbf16>, vector<128x16xbf16>, vector<128x16xf32> -> vector<128x16xf32>
      %c0_54 = arith.constant 0 : index
      %c0_55 = arith.constant 0 : index
      %91 = vector.load %arg13[%c0_54, %c0_55] : memref<128x1xf32, #tpu.memory_space<vmem>>, vector<128x1xf32>
      %92 = vector.broadcast %91 : vector<128x1xf32> to vector<128x16xf32>
      %93 = arith.addf %90, %92 : vector<128x16xf32>
      %c0_56 = arith.constant 0 : index
      %c0_57 = arith.constant 0 : index
      %c0_58 = arith.constant 0 : index
      %94 = vector.load %arg14[%c0_56, %c0_57, %c0_58] : memref<2x1x128xf32, #tpu.memory_space<vmem>>, vector<1x1x128xf32>
      %95 = vector.shape_cast %94 : vector<1x1x128xf32> to vector<128xf32>
      %cst_59 = arith.constant dense<0xFF800000> : vector<128xf32>
      %96 = vector.multi_reduction <maximumf>, %93, %cst_59 [1] : vector<128x16xf32> to vector<128xf32>
      %97 = arith.maximumf %95, %96 : vector<128xf32>
      %c0_60 = arith.constant 0 : index
      %c0_61 = arith.constant 0 : index
      %c0_62 = arith.constant 0 : index
      %98 = vector.load %arg14[%c0_60, %c0_61, %c0_62] : memref<2x1x128xf32, #tpu.memory_space<vmem>>, vector<1x1x128xf32>
      %99 = vector.shape_cast %98 : vector<1x1x128xf32> to vector<128xf32>
      %100 = vector.shape_cast %97 : vector<128xf32> to vector<1x1x128xf32>
      tpu.vector_store %arg14[%c0_60, %c0_61, %c0_62], %100 {strides = array<i32>} : memref<2x1x128xf32, #tpu.memory_space<vmem>>, vector<1x1x128xf32>,
      %c1 = arith.constant 1 : index
      %c0_63 = arith.constant 0 : index
      %c0_64 = arith.constant 0 : index
      %101 = vector.load %arg3[%c1, %c0_63, %c0_64] : memref<2x7x16xf32, #tpu.memory_space<vmem>>, vector<1x7x16xf32>
      %102 = vector.shape_cast %101 : vector<1x7x16xf32> to vector<7x16xf32>
      %103 = arith.truncf %102 : vector<7x16xf32> to vector<7x16xbf16>
      %c0_65 = arith.constant 0 : index
      %c0_66 = arith.constant 0 : index
      %104 = vector.load %arg4[%c0_65, %c0_66] : memref<64x7xbf16, #tpu.memory_space<vmem>>, vector<64x7xbf16>
      %cst_67 = arith.constant dense<0.000000e+00> : vector<64x16xf32>
      %105 = tpu.matmul %104, %103, %cst_67 {dimension_numbers = #tpu.dot_dimension_numbers<[1], [0], [0], [1], [0, 0, 1, 1], [], []>} : vector<64x7xbf16>, vector<7x16xbf16>, vector<64x16xf32> -> vector<64x16xf32>
      %c0_68 = arith.constant 0 : index
      %c0_69 = arith.constant 0 : index
      %106 = vector.load %arg5[%c0_68, %c0_69] : memref<64x1xf32, #tpu.memory_space<vmem>>, vector<64x1xf32>
      %107 = vector.broadcast %106 : vector<64x1xf32> to vector<64x16xf32>
      %108 = arith.addf %105, %107 : vector<64x16xf32>
      %c1_70 = arith.constant 1 : index
      %c0_71 = arith.constant 0 : index
      %c0_72 = arith.constant 0 : index
      %109 = vector.load %arg15[%c1_70, %c0_71, %c0_72] : memref<2x1x1xf32, #tpu.memory_space<vmem>>, vector<1x1x1xf32>
      %110 = vector.shape_cast %109 : vector<1x1x1xf32> to vector<1x1xf32>
      %cst_73 = arith.constant 9.765625E-4 : f32
      %111 = vector.broadcast %cst_73 : f32 to vector<1x1xf32>
      %112 = arith.mulf %110, %111 : vector<1x1xf32>
      %c1_74 = arith.constant 1 : index
      %c0_75 = arith.constant 0 : index
      %c0_76 = arith.constant 0 : index
      %113 = vector.load %arg16[%c1_74, %c0_75, %c0_76] : memref<2x1x1xf32, #tpu.memory_space<vmem>>, vector<1x1x1xf32>
      %114 = vector.shape_cast %113 : vector<1x1x1xf32> to vector<1x1xf32>
      %cst_77 = arith.constant 9.765625E-4 : f32
      %115 = vector.broadcast %cst_77 : f32 to vector<1x1xf32>
      %116 = arith.mulf %114, %115 : vector<1x1xf32>
      %117 = arith.mulf %112, %112 : vector<1x1xf32>
      %118 = arith.subf %116, %117 : vector<1x1xf32>
      %119 = vector.broadcast %112 : vector<1x1xf32> to vector<64x16xf32>
      %120 = arith.subf %108, %119 : vector<64x16xf32>
      %cst_78 = arith.constant 9.99999974E-6 : f32
      %121 = vector.broadcast %cst_78 : f32 to vector<1x1xf32>
      %122 = arith.addf %118, %121 : vector<1x1xf32>
      %123 = math.rsqrt %122 : vector<1x1xf32>
      %124 = vector.broadcast %123 : vector<1x1xf32> to vector<64x16xf32>
      %125 = arith.mulf %120, %124 : vector<64x16xf32>
      %c0_79 = arith.constant 0 : index
      %c0_80 = arith.constant 0 : index
      %126 = vector.load %arg6[%c0_79, %c0_80] : memref<64x1xf32, #tpu.memory_space<vmem>>, vector<64x1xf32>
      %127 = vector.broadcast %126 : vector<64x1xf32> to vector<64x16xf32>
      %128 = arith.mulf %125, %127 : vector<64x16xf32>
      %c0_81 = arith.constant 0 : index
      %c0_82 = arith.constant 0 : index
      %129 = vector.load %arg7[%c0_81, %c0_82] : memref<64x1xf32, #tpu.memory_space<vmem>>, vector<64x1xf32>
      %130 = vector.broadcast %129 : vector<64x1xf32> to vector<64x16xf32>
      %131 = arith.addf %128, %130 : vector<64x16xf32>
      %cst_83 = arith.constant 0.000000e+00 : f32
      %132 = vector.broadcast %cst_83 : f32 to vector<64x16xf32>
      %133 = arith.maximumf %131, %132 : vector<64x16xf32>
      %134 = arith.truncf %133 : vector<64x16xf32> to vector<64x16xbf16>
      %c0_84 = arith.constant 0 : index
      %c0_85 = arith.constant 0 : index
      %135 = vector.load %arg8[%c0_84, %c0_85] : memref<128x64xbf16, #tpu.memory_space<vmem>>, vector<128x64xbf16>
      %cst_86 = arith.constant dense<0.000000e+00> : vector<128x16xf32>
      %136 = tpu.matmul %135, %134, %cst_86 {dimension_numbers = #tpu.dot_dimension_numbers<[1], [0], [0], [1], [0, 0, 1, 1], [], []>} : vector<128x64xbf16>, vector<64x16xbf16>, vector<128x16xf32> -> vector<128x16xf32>
      %c0_87 = arith.constant 0 : index
      %c0_88 = arith.constant 0 : index
      %137 = vector.load %arg9[%c0_87, %c0_88] : memref<128x1xf32, #tpu.memory_space<vmem>>, vector<128x1xf32>
      %138 = vector.broadcast %137 : vector<128x1xf32> to vector<128x16xf32>
      %139 = arith.addf %136, %138 : vector<128x16xf32>
      %c1_89 = arith.constant 1 : index
      %c0_90 = arith.constant 0 : index
      %c0_91 = arith.constant 0 : index
      %140 = vector.load %arg17[%c1_89, %c0_90, %c0_91] : memref<2x1x1xf32, #tpu.memory_space<vmem>>, vector<1x1x1xf32>
      %141 = vector.shape_cast %140 : vector<1x1x1xf32> to vector<1x1xf32>
      %cst_92 = arith.constant 4.8828125E-4 : f32
      %142 = vector.broadcast %cst_92 : f32 to vector<1x1xf32>
      %143 = arith.mulf %141, %142 : vector<1x1xf32>
      %c1_93 = arith.constant 1 : index
      %c0_94 = arith.constant 0 : index
      %c0_95 = arith.constant 0 : index
      %144 = vector.load %arg18[%c1_93, %c0_94, %c0_95] : memref<2x1x1xf32, #tpu.memory_space<vmem>>, vector<1x1x1xf32>
      %145 = vector.shape_cast %144 : vector<1x1x1xf32> to vector<1x1xf32>
      %cst_96 = arith.constant 4.8828125E-4 : f32
      %146 = vector.broadcast %cst_96 : f32 to vector<1x1xf32>
      %147 = arith.mulf %145, %146 : vector<1x1xf32>
      %148 = arith.mulf %143, %143 : vector<1x1xf32>
      %149 = arith.subf %147, %148 : vector<1x1xf32>
      %150 = vector.broadcast %143 : vector<1x1xf32> to vector<128x16xf32>
      %151 = arith.subf %139, %150 : vector<128x16xf32>
      %cst_97 = arith.constant 9.99999974E-6 : f32
      %152 = vector.broadcast %cst_97 : f32 to vector<1x1xf32>
      %153 = arith.addf %149, %152 : vector<1x1xf32>
      %154 = math.rsqrt %153 : vector<1x1xf32>
      %155 = vector.broadcast %154 : vector<1x1xf32> to vector<128x16xf32>
      %156 = arith.mulf %151, %155 : vector<128x16xf32>
      %c0_98 = arith.constant 0 : index
      %c0_99 = arith.constant 0 : index
      %157 = vector.load %arg10[%c0_98, %c0_99] : memref<128x1xf32, #tpu.memory_space<vmem>>, vector<128x1xf32>
      %158 = vector.broadcast %157 : vector<128x1xf32> to vector<128x16xf32>
      %159 = arith.mulf %156, %158 : vector<128x16xf32>
      %c0_100 = arith.constant 0 : index
      %c0_101 = arith.constant 0 : index
      %160 = vector.load %arg11[%c0_100, %c0_101] : memref<128x1xf32, #tpu.memory_space<vmem>>, vector<128x1xf32>
      %161 = vector.broadcast %160 : vector<128x1xf32> to vector<128x16xf32>
      %162 = arith.addf %159, %161 : vector<128x16xf32>
      %cst_102 = arith.constant 0.000000e+00 : f32
      %163 = vector.broadcast %cst_102 : f32 to vector<128x16xf32>
      %164 = arith.maximumf %162, %163 : vector<128x16xf32>
      %165 = arith.truncf %164 : vector<128x16xf32> to vector<128x16xbf16>
      %c0_103 = arith.constant 0 : index
      %c0_104 = arith.constant 0 : index
      %166 = vector.load %arg12[%c0_103, %c0_104] : memref<128x128xbf16, #tpu.memory_space<vmem>>, vector<128x128xbf16>
      %cst_105 = arith.constant dense<0.000000e+00> : vector<128x16xf32>
      %167 = tpu.matmul %166, %165, %cst_105 {dimension_numbers = #tpu.dot_dimension_numbers<[1], [0], [0], [1], [0, 0, 1, 1], [], []>} : vector<128x128xbf16>, vector<128x16xbf16>, vector<128x16xf32> -> vector<128x16xf32>
      %c0_106 = arith.constant 0 : index
      %c0_107 = arith.constant 0 : index
      %168 = vector.load %arg13[%c0_106, %c0_107] : memref<128x1xf32, #tpu.memory_space<vmem>>, vector<128x1xf32>
      %169 = vector.broadcast %168 : vector<128x1xf32> to vector<128x16xf32>
      %170 = arith.addf %167, %169 : vector<128x16xf32>
      %c1_108 = arith.constant 1 : index
      %c0_109 = arith.constant 0 : index
      %c0_110 = arith.constant 0 : index
      %171 = vector.load %arg14[%c1_108, %c0_109, %c0_110] : memref<2x1x128xf32, #tpu.memory_space<vmem>>, vector<1x1x128xf32>
      %172 = vector.shape_cast %171 : vector<1x1x128xf32> to vector<128xf32>
      %cst_111 = arith.constant dense<0xFF800000> : vector<128xf32>
      %173 = vector.multi_reduction <maximumf>, %170, %cst_111 [1] : vector<128x16xf32> to vector<128xf32>
      %174 = arith.maximumf %172, %173 : vector<128xf32>
      %c1_112 = arith.constant 1 : index
      %c0_113 = arith.constant 0 : index
      %c0_114 = arith.constant 0 : index
      %175 = vector.load %arg14[%c1_112, %c0_113, %c0_114] : memref<2x1x128xf32, #tpu.memory_space<vmem>>, vector<1x1x128xf32>
      %176 = vector.shape_cast %175 : vector<1x1x128xf32> to vector<128xf32>
      %177 = vector.shape_cast %174 : vector<128xf32> to vector<1x1x128xf32>
      tpu.vector_store %arg14[%c1_112, %c0_113, %c0_114], %177 {strides = array<i32>} : memref<2x1x128xf32, #tpu.memory_space<vmem>>, vector<1x1x128xf32>,
    } else {
    }
    return
  }
  func.func @transform_0(%arg0: i32, %arg1: i32, %arg2: i32) -> (i32, i32, i32) {
    %c0_i32 = arith.constant 0 : i32
    %c0_i32_0 = arith.constant 0 : i32
    return %arg0, %c0_i32, %arg2 : i32, i32, i32
  }
  func.func @transform_1(%arg0: i32, %arg1: i32, %arg2: i32) -> (i32, i32) {
    %c0_i32 = arith.constant 0 : i32
    %c0_i32_0 = arith.constant 0 : i32
    %c0_i32_1 = arith.constant 0 : i32
    return %c0_i32, %c0_i32_0 : i32, i32
  }
  func.func @transform_2(%arg0: i32, %arg1: i32, %arg2: i32) -> (i32, i32) {
    %c0_i32 = arith.constant 0 : i32
    %c0_i32_0 = arith.constant 0 : i32
    %c0_i32_1 = arith.constant 0 : i32
    return %c0_i32, %c0_i32_0 : i32, i32
  }
  func.func @transform_3(%arg0: i32, %arg1: i32, %arg2: i32) -> (i32, i32) {
    %c0_i32 = arith.constant 0 : i32
    %c0_i32_0 = arith.constant 0 : i32
    %c0_i32_1 = arith.constant 0 : i32
    return %c0_i32, %c0_i32_0 : i32, i32
  }
  func.func @transform_4(%arg0: i32, %arg1: i32, %arg2: i32) -> (i32, i32) {
    %c0_i32 = arith.constant 0 : i32
    %c0_i32_0 = arith.constant 0 : i32
    %c0_i32_1 = arith.constant 0 : i32
    return %c0_i32, %c0_i32_0 : i32, i32
  }
  func.func @transform_5(%arg0: i32, %arg1: i32, %arg2: i32) -> (i32, i32) {
    %c0_i32 = arith.constant 0 : i32
    %c0_i32_0 = arith.constant 0 : i32
    %c0_i32_1 = arith.constant 0 : i32
    return %c0_i32, %c0_i32_0 : i32, i32
  }
  func.func @transform_6(%arg0: i32, %arg1: i32, %arg2: i32) -> (i32, i32) {
    %c0_i32 = arith.constant 0 : i32
    %c0_i32_0 = arith.constant 0 : i32
    %c0_i32_1 = arith.constant 0 : i32
    return %c0_i32, %c0_i32_0 : i32, i32
  }
  func.func @transform_7(%arg0: i32, %arg1: i32, %arg2: i32) -> (i32, i32) {
    %c0_i32 = arith.constant 0 : i32
    %c0_i32_0 = arith.constant 0 : i32
    %c0_i32_1 = arith.constant 0 : i32
    return %c0_i32, %c0_i32_0 : i32, i32
  }
  func.func @transform_8(%arg0: i32, %arg1: i32, %arg2: i32) -> (i32, i32) {
    %c0_i32 = arith.constant 0 : i32
    %c0_i32_0 = arith.constant 0 : i32
    %c0_i32_1 = arith.constant 0 : i32
    return %c0_i32, %c0_i32_0 : i32, i32
  }
  func.func @transform_9(%arg0: i32, %arg1: i32, %arg2: i32) -> (i32, i32) {
    %c0_i32 = arith.constant 0 : i32
    %c0_i32_0 = arith.constant 0 : i32
    %c0_i32_1 = arith.constant 0 : i32
    return %c0_i32, %c0_i32_0 : i32, i32
  }
  func.func @transform_10(%arg0: i32, %arg1: i32, %arg2: i32) -> (i32, i32) {
    %c0_i32 = arith.constant 0 : i32
    %c0_i32_0 = arith.constant 0 : i32
    %c0_i32_1 = arith.constant 0 : i32
    return %c0_i32, %c0_i32_0 : i32, i32
  }
  func.func @transform_11(%arg0: i32, %arg1: i32, %arg2: i32) -> (i32, i32, i32) {
    %c0_i32 = arith.constant 0 : i32
    %c0_i32_0 = arith.constant 0 : i32
    %c0_i32_1 = arith.constant 0 : i32
    return %arg0, %c0_i32, %c0_i32_0 : i32, i32, i32
  }
}

</mosaic_0001>

<llo_original>
// kernel: tpu_custom_call.1
$region0: #{tpu_custom_call.1}
  #allocation0 [shape = 'u32[]', space=smem, size = 0x4, offset = 0x4, fixed_abs, tag = 'smem constant byte address 0x4 - core index']
  #allocation1 [shape = 'u32[72,128]{1,0:T(1,128)}', space=vmem, size = 0x9000, scoped, tag = 'internal scratch']
  #allocation2 [shape = 'f32[2,1,1]{2,1,0:T(1,128)}', space=vmem, size = 0x400, scoped, tag = 'scratch operand']
  #allocation3 [shape = 'f32[2,1,1]{2,1,0:T(1,128)}', space=vmem, size = 0x400, scoped, tag = 'scratch operand']
  #allocation4 [shape = 'f32[2,1,1]{2,1,0:T(1,128)}', space=vmem, size = 0x400, scoped, tag = 'scratch operand']
  #allocation5 [shape = 'f32[2,1,1]{2,1,0:T(1,128)}', space=vmem, size = 0x400, scoped, tag = 'scratch operand']
  %s0 = inlined_call_operand.vmem [shape: f32[2,7,16], index: 0, kind: input, shape index: {}]
  %s1 = inlined_call_operand.vmem [shape: bf16[64,7], index: 1, kind: input, shape index: {}]
  %s2 = inlined_call_operand.vmem [shape: f32[64,1], index: 2, kind: input, shape index: {}]
  %s3 = inlined_call_operand.vmem [shape: f32[64,1], index: 3, kind: input, shape index: {}]
  %s4 = inlined_call_operand.vmem [shape: f32[64,1], index: 4, kind: input, shape index: {}]
  %s5 = inlined_call_operand.vmem [shape: bf16[128,64], index: 5, kind: input, shape index: {}]
  %s6 = inlined_call_operand.vmem [shape: f32[128,1], index: 6, kind: input, shape index: {}]
  %s7 = inlined_call_operand.vmem [shape: f32[128,1], index: 7, kind: input, shape index: {}]
  %s8 = inlined_call_operand.vmem [shape: f32[128,1], index: 8, kind: input, shape index: {}]
  %s9 = inlined_call_operand.vmem [shape: bf16[128,128], index: 9, kind: input, shape index: {}]
  %s10 = inlined_call_operand.vmem [shape: f32[128,1], index: 10, kind: input, shape index: {}]
  %s11 = inlined_call_operand.hbm [shape: f32[2,1,128], index: 11, kind: output, shape index: {}]
  %s12 = sld [smem:[#allocation0]]
  $region101: #{tpu_custom_call.1} parent=0
    _
  %s14 = ssub.s32 1, %s12
  %s15 = scalar_select 0, %s14, %s12
  $region1: #{tpu_custom_call.1} parent=0
    #allocation6 [shape = 'u8[1024]{0}', space=vmem, size = 0x400, scoped, tag = 'output window, operand 0, single buffered']
    #allocation7 [shape = 's32[2]{0}', space=sflag, size = 0x8, scoped, tag = 'scoped memory for tpu_custom_call.1']
    %16 = vsyncpa [#allocation7], 0
    loop: start=0, step=1, limit=5
    $region2: #{tpu_custom_call.1} parent=1 // loop_pre_header
      _
    $region3: #{tpu_custom_call.1} parent=1 // loop_header
      %s18 = sphi 0, %s22
      %p19 = scmp.ge.s32.totalorder %s18, 5
      %s25 = sphi 0, %s44
      %s26 = sphi 0, %s40
      %s27 = sphi 0, %s36
      %s28 = sphi 0, %s25
      %s29 = sphi 0, %s26
      %s30 = sphi 0, %s27
      %s31 = sphi 0, %s28
      %s32 = sphi 0, %s29
      %s33 = sphi 0, %s30
      %s49 = sphi 0, %s51
      %s52 = sphi 0, %s49
      %s53 = sphi 0, %s52
      %s69 = sphi 0, %s53
      %s73 = sphi 0, %s73
      %s75 = sphi 0, %s73
      %s76 = sphi 0, %s75
      %s90 = sphi 0, %s76
      %s94 = sphi 0, %s94
      %s96 = sphi 0, %s94
      %s97 = sphi 0, %s96
      %s111 = sphi 0, %s97
      %s115 = sphi 0, %s115
      %s117 = sphi 0, %s115
      %s118 = sphi 0, %s117
      %s132 = sphi 0, %s118
      %s136 = sphi 0, %s136
      %s138 = sphi 0, %s136
      %s139 = sphi 0, %s138
      %s153 = sphi 0, %s139
      %s157 = sphi 0, %s157
      %s159 = sphi 0, %s157
      %s160 = sphi 0, %s159
      %s174 = sphi 0, %s160
      %s178 = sphi 0, %s178
      %s180 = sphi 0, %s178
      %s181 = sphi 0, %s180
      %s195 = sphi 0, %s181
      %s199 = sphi 0, %s199
      %s201 = sphi 0, %s199
      %s202 = sphi 0, %s201
      %s216 = sphi 0, %s202
      %s220 = sphi 0, %s220
      %s222 = sphi 0, %s220
      %s223 = sphi 0, %s222
      %s237 = sphi 0, %s223
      %s241 = sphi 0, %s241
      %s243 = sphi 0, %s241
      %s244 = sphi 0, %s243
      %s258 = sphi 0, %s244
      %s262 = sphi 0, %s262
      %s264 = sphi 0, %s262
      %s265 = sphi 0, %s264
      %s279 = sphi 0, %s265
      %s285 = sphi 0, %s287
      %s288 = sphi 0, %s285
      %s289 = sphi 0, %s288
      %s305 = sphi 0, %s289
    $region4: #{tpu_custom_call.1} parent=1 // loop_header_branch
      %21 = sbr.rel (%p19) target = $region8
    $region5: #{tpu_custom_call.1} parent=1 // loop_body
      %s23 = ssub.s32 %s18, 1
      %s24 = ssub.s32 %s18, 2
      %s34 = sadd.s32 1, %s27
      %p35 = scmp.ge.s32.totalorder %s34, 1
      %s36 = scalar_select %p35, 0, %s34
      %s37 = sadd.s32 1, %s26
      %s38 = scalar_select %p35, %s37, %s26
      %p39 = scmp.ge.s32.totalorder %s38, 3
      %s40 = scalar_select %p39, 0, %s38
      %s41 = sadd.s32 1, %s25
      %s42 = scalar_select %p39, %s41, %s25
      %p43 = scmp.ge.s32.totalorder %s42, 1
      %s44 = scalar_select %p43, 0, %s42
      %s45 = ssub.s32 %s25, %s44
      %s46 = ssub.s32 %s27, %s36
      %s47 = sor.u32 %s45, %s46
      %p48 = scmp.eq.s32.totalorder %s47, 0
      %s50 = sadd.s32 %s49, 1
      %s51 = scalar_select %p48, %s49, %s50
      %p54 = pneg %p48
      %p55 = scmp.eq.s32.totalorder %s18, 2
      %p56 = por %p54, %p55
      %p57 = scmp.ne.s32.totalorder %s49, %s52
      %p58 = scmp.eq.s32.totalorder %s18, 0
      %p59 = por %p57, %p58
      %p60 = scmp.ne.s32.totalorder %s49, %s52
      %p61 = scmp.eq.s32.totalorder %s23, 2
      %p62 = por %p60, %p61
      %p63 = scmp.ne.s32.totalorder %s52, %s53
      %p64 = scmp.eq.s32.totalorder %s23, 0
      %p65 = por %p63, %p64
      %p66 = scmp.ne.s32.totalorder %s52, %s53
      %p67 = scmp.eq.s32.totalorder %s24, 2
      %p68 = por %p66, %p67
      %p70 = scmp.ne.s32.totalorder %s53, %s69
      %p71 = scmp.eq.s32.totalorder %s24, 0
      %p72 = por %p70, %p71
      %s74 = sadd.s32 %s73, 1
      %p77 = scmp.eq.s32.totalorder %s18, 2
      %p78 = scmp.ne.s32.totalorder %s73, %s75
      %p79 = scmp.eq.s32.totalorder %s18, 0
      %p80 = por %p78, %p79
      %p81 = scmp.ne.s32.totalorder %s73, %s75
      %p82 = scmp.eq.s32.totalorder %s23, 2
      %p83 = por %p81, %p82
      %p84 = scmp.ne.s32.totalorder %s75, %s76
      %p85 = scmp.eq.s32.totalorder %s23, 0
      %p86 = por %p84, %p85
      %p87 = scmp.ne.s32.totalorder %s75, %s76
      %p88 = scmp.eq.s32.totalorder %s24, 2
      %p89 = por %p87, %p88
      %p91 = scmp.ne.s32.totalorder %s76, %s90
      %p92 = scmp.eq.s32.totalorder %s24, 0
      %p93 = por %p91, %p92
      %s95 = sadd.s32 %s94, 1
      %p98 = scmp.eq.s32.totalorder %s18, 2
      %p99 = scmp.ne.s32.totalorder %s94, %s96
      %p100 = scmp.eq.s32.totalorder %s18, 0
      %p101 = por %p99, %p100
      %p102 = scmp.ne.s32.totalorder %s94, %s96
      %p103 = scmp.eq.s32.totalorder %s23, 2
      %p104 = por %p102, %p103
      %p105 = scmp.ne.s32.totalorder %s96, %s97
      %p106 = scmp.eq.s32.totalorder %s23, 0
      %p107 = por %p105, %p106
      %p108 = scmp.ne.s32.totalorder %s96, %s97
      %p109 = scmp.eq.s32.totalorder %s24, 2
      %p110 = por %p108, %p109
      %p112 = scmp.ne.s32.totalorder %s97, %s111
      %p113 = scmp.eq.s32.totalorder %s24, 0
      %p114 = por %p112, %p113
      %s116 = sadd.s32 %s115, 1
      %p119 = scmp.eq.s32.totalorder %s18, 2
      %p120 = scmp.ne.s32.totalorder %s115, %s117
      %p121 = scmp.eq.s32.totalorder %s18, 0
      %p122 = por %p120, %p121
      %p123 = scmp.ne.s32.totalorder %s115, %s117
      %p124 = scmp.eq.s32.totalorder %s23, 2
      %p125 = por %p123, %p124
      %p126 = scmp.ne.s32.totalorder %s117, %s118
      %p127 = scmp.eq.s32.totalorder %s23, 0
      %p128 = por %p126, %p127
      %p129 = scmp.ne.s32.totalorder %s117, %s118
      %p130 = scmp.eq.s32.totalorder %s24, 2
      %p131 = por %p129, %p130
      %p133 = scmp.ne.s32.totalorder %s118, %s132
      %p134 = scmp.eq.s32.totalorder %s24, 0
      %p135 = por %p133, %p134
      %s137 = sadd.s32 %s136, 1
      %p140 = scmp.eq.s32.totalorder %s18, 2
      %p141 = scmp.ne.s32.totalorder %s136, %s138
      %p142 = scmp.eq.s32.totalorder %s18, 0
      %p143 = por %p141, %p142
      %p144 = scmp.ne.s32.totalorder %s136, %s138
      %p145 = scmp.eq.s32.totalorder %s23, 2
      %p146 = por %p144, %p145
      %p147 = scmp.ne.s32.totalorder %s138, %s139
      %p148 = scmp.eq.s32.totalorder %s23, 0
      %p149 = por %p147, %p148
      %p150 = scmp.ne.s32.totalorder %s138, %s139
      %p151 = scmp.eq.s32.totalorder %s24, 2
      %p152 = por %p150, %p151
      %p154 = scmp.ne.s32.totalorder %s139, %s153
      %p155 = scmp.eq.s32.totalorder %s24, 0
      %p156 = por %p154, %p155
      %s158 = sadd.s32 %s157, 1
      %p161 = scmp.eq.s32.totalorder %s18, 2
      %p162 = scmp.ne.s32.totalorder %s157, %s159
      %p163 = scmp.eq.s32.totalorder %s18, 0
      %p164 = por %p162, %p163
      %p165 = scmp.ne.s32.totalorder %s157, %s159
      %p166 = scmp.eq.s32.totalorder %s23, 2
      %p167 = por %p165, %p166
      %p168 = scmp.ne.s32.totalorder %s159, %s160
      %p169 = scmp.eq.s32.totalorder %s23, 0
      %p170 = por %p168, %p169
      %p171 = scmp.ne.s32.totalorder %s159, %s160
      %p172 = scmp.eq.s32.totalorder %s24, 2
      %p173 = por %p171, %p172
      %p175 = scmp.ne.s32.totalorder %s160, %s174
      %p176 = scmp.eq.s32.totalorder %s24, 0
      %p177 = por %p175, %p176
      %s179 = sadd.s32 %s178, 1
      %p182 = scmp.eq.s32.totalorder %s18, 2
      %p183 = scmp.ne.s32.totalorder %s178, %s180
      %p184 = scmp.eq.s32.totalorder %s18, 0
      %p185 = por %p183, %p184
      %p186 = scmp.ne.s32.totalorder %s178, %s180
      %p187 = scmp.eq.s32.totalorder %s23, 2
      %p188 = por %p186, %p187
      %p189 = scmp.ne.s32.totalorder %s180, %s181
      %p190 = scmp.eq.s32.totalorder %s23, 0
      %p191 = por %p189, %p190
      %p192 = scmp.ne.s32.totalorder %s180, %s181
      %p193 = scmp.eq.s32.totalorder %s24, 2
      %p194 = por %p192, %p193
      %p196 = scmp.ne.s32.totalorder %s181, %s195
      %p197 = scmp.eq.s32.totalorder %s24, 0
      %p198 = por %p196, %p197
      %s200 = sadd.s32 %s199, 1
      %p203 = scmp.eq.s32.totalorder %s18, 2
      %p204 = scmp.ne.s32.totalorder %s199, %s201
      %p205 = scmp.eq.s32.totalorder %s18, 0
      %p206 = por %p204, %p205
      %p207 = scmp.ne.s32.totalorder %s199, %s201
      %p208 = scmp.eq.s32.totalorder %s23, 2
      %p209 = por %p207, %p208
      %p210 = scmp.ne.s32.totalorder %s201, %s202
      %p211 = scmp.eq.s32.totalorder %s23, 0
      %p212 = por %p210, %p211
      %p213 = scmp.ne.s32.totalorder %s201, %s202
      %p214 = scmp.eq.s32.totalorder %s24, 2
      %p215 = por %p213, %p214
      %p217 = scmp.ne.s32.totalorder %s202, %s216
      %p218 = scmp.eq.s32.totalorder %s24, 0
      %p219 = por %p217, %p218
      %s221 = sadd.s32 %s220, 1
      %p224 = scmp.eq.s32.totalorder %s18, 2
      %p225 = scmp.ne.s32.totalorder %s220, %s222
      %p226 = scmp.eq.s32.totalorder %s18, 0
      %p227 = por %p225, %p226
      %p228 = scmp.ne.s32.totalorder %s220, %s222
      %p229 = scmp.eq.s32.totalorder %s23, 2
      %p230 = por %p228, %p229
      %p231 = scmp.ne.s32.totalorder %s222, %s223
      %p232 = scmp.eq.s32.totalorder %s23, 0
      %p233 = por %p231, %p232
      %p234 = scmp.ne.s32.totalorder %s222, %s223
      %p235 = scmp.eq.s32.totalorder %s24, 2
      %p236 = por %p234, %p235
      %p238 = scmp.ne.s32.totalorder %s223, %s237
      %p239 = scmp.eq.s32.totalorder %s24, 0
      %p240 = por %p238, %p239
      %s242 = sadd.s32 %s241, 1
      %p245 = scmp.eq.s32.totalorder %s18, 2
      %p246 = scmp.ne.s32.totalorder %s241, %s243
      %p247 = scmp.eq.s32.totalorder %s18, 0
      %p248 = por %p246, %p247
      %p249 = scmp.ne.s32.totalorder %s241, %s243
      %p250 = scmp.eq.s32.totalorder %s23, 2
      %p251 = por %p249, %p250
      %p252 = scmp.ne.s32.totalorder %s243, %s244
      %p253 = scmp.eq.s32.totalorder %s23, 0
      %p254 = por %p252, %p253
      %p255 = scmp.ne.s32.totalorder %s243, %s244
      %p256 = scmp.eq.s32.totalorder %s24, 2
      %p257 = por %p255, %p256
      %p259 = scmp.ne.s32.totalorder %s244, %s258
      %p260 = scmp.eq.s32.totalorder %s24, 0
      %p261 = por %p259, %p260
      %s263 = sadd.s32 %s262, 1
      %p266 = scmp.eq.s32.totalorder %s18, 2
      %p267 = scmp.ne.s32.totalorder %s262, %s264
      %p268 = scmp.eq.s32.totalorder %s18, 0
      %p269 = por %p267, %p268
      %p270 = scmp.ne.s32.totalorder %s262, %s264
      %p271 = scmp.eq.s32.totalorder %s23, 2
      %p272 = por %p270, %p271
      %p273 = scmp.ne.s32.totalorder %s264, %s265
      %p274 = scmp.eq.s32.totalorder %s23, 0
      %p275 = por %p273, %p274
      %p276 = scmp.ne.s32.totalorder %s264, %s265
      %p277 = scmp.eq.s32.totalorder %s24, 2
      %p278 = por %p276, %p277
      %p280 = scmp.ne.s32.totalorder %s265, %s279
      %p281 = scmp.eq.s32.totalorder %s24, 0
      %p282 = por %p280, %p281
      %s283 = ssub.s32 %s25, %s44
      %p284 = scmp.eq.s32.totalorder %s283, 0
      %s286 = sadd.s32 %s285, 1
      %s287 = scalar_select %p284, %s285, %s286
      %p290 = pneg %p284
      %p291 = scmp.eq.s32.totalorder %s18, 2
      %p292 = por %p290, %p291
      %p293 = scmp.ne.s32.totalorder %s285, %s288
      %p294 = scmp.eq.s32.totalorder %s18, 0
      %p295 = por %p293, %p294
      %p296 = scmp.ne.s32.totalorder %s285, %s288
      %p297 = scmp.eq.s32.totalorder %s23, 2
      %p298 = por %p296, %p297
      %p299 = scmp.ne.s32.totalorder %s288, %s289
      %p300 = scmp.eq.s32.totalorder %s23, 0
      %p301 = por %p299, %p300
      %p302 = scmp.ne.s32.totalorder %s288, %s289
      %p303 = scmp.eq.s32.totalorder %s24, 2
      %p304 = por %p302, %p303
      %p306 = scmp.ne.s32.totalorder %s289, %s305
      %p307 = scmp.eq.s32.totalorder %s24, 0
      %p308 = por %p306, %p307
      %p309 = scmp.le.s32.totalorder 1, %s18
      %p310 = scmp.lt.s32.totalorder %s18, 4
      %p311 = pnand %p309, %p310
      %p312 = pneg %p311
      // Predicated region
      $region9: #{tpu_custom_call.1} parent=5 // pred_check
        _
      $region10: #{tpu_custom_call.1} parent=5 // pred_check_branch
        %314 = sbr.rel (%p311) target = $region12
      $region11: #{tpu_custom_call.1} parent=5 // pred_region
        %s315 = ssub.s32 %s18, 1
        // Predicated region
        $region13: #{tpu_custom_call.1} parent=11 // pred_check
          %p316 = pneg %p65
        $region14: #{tpu_custom_call.1} parent=11 // pred_check_branch
          %318 = sbr.rel (%p316) target = $region16
        $region15: #{tpu_custom_call.1} parent=11 // pred_region
          %s319 = smul.u32 2, %s28
          %p320 = scmp.lt.s32.totalorder %s319, 1
          %s321 = scalar_select %p320, %s319, 1
          %p322 = scmp.lt.s32.totalorder %s30, 0
          %s323 = scalar_select %p322, %s30, 0
          %s324 = sadd.s32 %s323, %s321
          %s325 = smul.addr %s324, 8
          %s326 = scalar_lea.vmem %s0, %s325
          %s327 = smul.u32 2, %s28
        $region16: #{tpu_custom_call.1} parent=11 // pred_fallthru
          _
        // Predicated region
        $region17: #{tpu_custom_call.1} parent=11 // pred_check
          %p328 = pneg %p86
        $region18: #{tpu_custom_call.1} parent=11 // pred_check_branch
          %330 = sbr.rel (%p328) target = $region20
        $region19: #{tpu_custom_call.1} parent=11 // pred_region
          _
        $region20: #{tpu_custom_call.1} parent=11 // pred_fallthru
          _
        // Predicated region
        $region21: #{tpu_custom_call.1} parent=11 // pred_check
          %p331 = pneg %p107
        $region22: #{tpu_custom_call.1} parent=11 // pred_check_branch
          %333 = sbr.rel (%p331) target = $region24
        $region23: #{tpu_custom_call.1} parent=11 // pred_region
          _
        $region24: #{tpu_custom_call.1} parent=11 // pred_fallthru
          _
        // Predicated region
        $region25: #{tpu_custom_call.1} parent=11 // pred_check
          %p334 = pneg %p128
        $region26: #{tpu_custom_call.1} parent=11 // pred_check_branch
          %336 = sbr.rel (%p334) target = $region28
        $region27: #{tpu_custom_call.1} parent=11 // pred_region
          _
        $region28: #{tpu_custom_call.1} parent=11 // pred_fallthru
          _
        // Predicated region
        $region29: #{tpu_custom_call.1} parent=11 // pred_check
          %p337 = pneg %p149
        $region30: #{tpu_custom_call.1} parent=11 // pred_check_branch
          %339 = sbr.rel (%p337) target = $region32
        $region31: #{tpu_custom_call.1} parent=11 // pred_region
          _
        $region32: #{tpu_custom_call.1} parent=11 // pred_fallthru
          _
        // Predicated region
        $region33: #{tpu_custom_call.1} parent=11 // pred_check
          %p340 = pneg %p170
        $region34: #{tpu_custom_call.1} parent=11 // pred_check_branch
          %342 = sbr.rel (%p340) target = $region36
        $region35: #{tpu_custom_call.1} parent=11 // pred_region
          _
        $region36: #{tpu_custom_call.1} parent=11 // pred_fallthru
          _
        // Predicated region
        $region37: #{tpu_custom_call.1} parent=11 // pred_check
          %p343 = pneg %p191
        $region38: #{tpu_custom_call.1} parent=11 // pred_check_branch
          %345 = sbr.rel (%p343) target = $region40
        $region39: #{tpu_custom_call.1} parent=11 // pred_region
          _
        $region40: #{tpu_custom_call.1} parent=11 // pred_fallthru
          _
        // Predicated region
        $region41: #{tpu_custom_call.1} parent=11 // pred_check
          %p346 = pneg %p212
        $region42: #{tpu_custom_call.1} parent=11 // pred_check_branch
          %348 = sbr.rel (%p346) target = $region44
        $region43: #{tpu_custom_call.1} parent=11 // pred_region
          _
        $region44: #{tpu_custom_call.1} parent=11 // pred_fallthru
          _
        // Predicated region
        $region45: #{tpu_custom_call.1} parent=11 // pred_check
          %p349 = pneg %p233
        $region46: #{tpu_custom_call.1} parent=11 // pred_check_branch
          %351 = sbr.rel (%p349) target = $region48
        $region47: #{tpu_custom_call.1} parent=11 // pred_region
          _
        $region48: #{tpu_custom_call.1} parent=11 // pred_fallthru
          _
        // Predicated region
        $region49: #{tpu_custom_call.1} parent=11 // pred_check
          %p352 = pneg %p254
        $region50: #{tpu_custom_call.1} parent=11 // pred_check_branch
          %354 = sbr.rel (%p352) target = $region52
        $region51: #{tpu_custom_call.1} parent=11 // pred_region
          _
        $region52: #{tpu_custom_call.1} parent=11 // pred_fallthru
          _
        // Predicated region
        $region53: #{tpu_custom_call.1} parent=11 // pred_check
          %p355 = pneg %p275
        $region54: #{tpu_custom_call.1} parent=11 // pred_check_branch
          %357 = sbr.rel (%p355) target = $region56
        $region55: #{tpu_custom_call.1} parent=11 // pred_region
          _
        $region56: #{tpu_custom_call.1} parent=11 // pred_fallthru
          _
      $region12: #{tpu_custom_call.1} parent=5 // pred_fallthru
        _
      %p358 = scmp.lt.s32.totalorder %s18, 3
      // Predicated region
      $region57: #{tpu_custom_call.1} parent=5 // pred_check
        %p359 = pneg %p358
      $region58: #{tpu_custom_call.1} parent=5 // pred_check_branch
        %361 = sbr.rel (%p359) target = $region60
      $region59: #{tpu_custom_call.1} parent=5 // pred_region
        _
      $region60: #{tpu_custom_call.1} parent=5 // pred_fallthru
        _
      %p362 = scmp.le.s32.totalorder 1, %s18
      %p363 = scmp.lt.s32.totalorder %s18, 4
      %p364 = pnand %p362, %p363
      %p365 = pneg %p364
      // Predicated region
      $region61: #{tpu_custom_call.1} parent=5 // pred_check
        _
      $region62: #{tpu_custom_call.1} parent=5 // pred_check_branch
        %367 = sbr.rel (%p364) target = $region64
      $region63: #{tpu_custom_call.1} parent=5 // pred_region
        %s368 = ssub.s32 %s18, 1
        %s369 = smul.u32 2, %s28
        %p370 = scmp.lt.s32.totalorder %s369, 1
        %s371 = scalar_select %p370, %s369, 1
        %p372 = scmp.lt.s32.totalorder %s30, 0
        %s373 = scalar_select %p372, %s30, 0
        %s374 = sadd.s32 %s373, %s371
        %s375 = smul.addr %s374, 8
        %s376 = scalar_lea.vmem %s0, %s375
        %p377 = pneg %p65
        %p378 = pneg %p62
        %p379 = pneg %p86
        %p380 = pneg %p83
        %p381 = pneg %p107
        %p382 = pneg %p104
        %p383 = pneg %p128
        %p384 = pneg %p125
        %p385 = pneg %p149
        %p386 = pneg %p146
        %p387 = pneg %p170
        %p388 = pneg %p167
        %p389 = pneg %p191
        %p390 = pneg %p188
        %p391 = pneg %p212
        %p392 = pneg %p209
        %p393 = pneg %p233
        %p394 = pneg %p230
        %p395 = pneg %p254
        %p396 = pneg %p251
        %p397 = pneg %p275
        %p398 = pneg %p272
        %p399 = pneg %p301
        %p400 = pneg %p298
        %s401 = smul.u32 2, %s28
        %p402 = scmp.lt.s32.totalorder %s401, 1
        %s403 = scalar_select %p402, %s401, 1
        %p404 = scmp.lt.s32.totalorder %s30, 0
        %s405 = scalar_select %p404, %s30, 0
        %s406 = sadd.s32 %s405, %s403
        %s407 = smul.addr %s406, 8
        %s408 = scalar_lea.vmem %s0, %s407
        %s409 = smul.u32 2, %s28
        %s410 = smul.u32 2, %s28
        %p412 = scmp.eq.s32.totalorder %s29, 0
        %p413 = scmp.eq.s32.totalorder %s30, 0
        %p414 = pnand %p412, %p413
        %p415 = pneg %p414
        // Predicated region
        $region65: #{tpu_custom_call.1} parent=63 // pred_check
          _
        $region66: #{tpu_custom_call.1} parent=63 // pred_check_branch
          %417 = sbr.rel (%p414) target = $region68
        $region67: #{tpu_custom_call.1} parent=63 // pred_region
          %vm418 = vcmask 0
          %419 = vst.msk [vmem:[#allocation2] sm:$0x1] %vm418, 0.0
          %420 = vst.msk [vmem:[#allocation2 + $0x1] sm:$0x1] %vm418, 0.0
          %421 = vst.msk [vmem:[#allocation3] sm:$0x1] %vm418, 0.0
          %422 = vst.msk [vmem:[#allocation3 + $0x1] sm:$0x1] %vm418, 0.0
        $region68: #{tpu_custom_call.1} parent=63 // pred_fallthru
          _
        %p423 = scmp.eq.s32.totalorder %s29, 1
        %p424 = pnand %p423, %p413
        %p425 = pneg %p424
        // Predicated region
        $region69: #{tpu_custom_call.1} parent=63 // pred_check
          _
        $region70: #{tpu_custom_call.1} parent=63 // pred_check_branch
          %427 = sbr.rel (%p424) target = $region72
        $region71: #{tpu_custom_call.1} parent=63 // pred_region
          %vm428 = vcmask 0
          %429 = vst.msk [vmem:[#allocation4] sm:$0x1] %vm428, 0.0
          %430 = vst.msk [vmem:[#allocation4 + $0x1] sm:$0x1] %vm428, 0.0
          %431 = vst.msk [vmem:[#allocation5] sm:$0x1] %vm428, 0.0
          %432 = vst.msk [vmem:[#allocation5 + $0x1] sm:$0x1] %vm428, 0.0
        $region72: #{tpu_custom_call.1} parent=63 // pred_fallthru
          _
        %p433 = scmp.eq.s32.totalorder %s29, 2
        %p434 = pnand %p433, %p413
        %p435 = pneg %p434
        // Predicated region
        $region73: #{tpu_custom_call.1} parent=63 // pred_check
          _
        $region74: #{tpu_custom_call.1} parent=63 // pred_check_branch
          %437 = sbr.rel (%p434) target = $region76
        $region75: #{tpu_custom_call.1} parent=63 // pred_region
          %438 = vst [vmem:[#allocation6] sm:$0x1] -inf
          %439 = vst [vmem:[#allocation6 + $0x1] sm:$0x1] -inf
        $region76: #{tpu_custom_call.1} parent=63 // pred_fallthru
          _
        // Predicated region
        $region77: #{tpu_custom_call.1} parent=63 // pred_check
          %p440 = pneg %p412
        $region78: #{tpu_custom_call.1} parent=63 // pred_check_branch
          %442 = sbr.rel (%p440) target = $region80
        $region79: #{tpu_custom_call.1} parent=63 // pred_region
          %v443 = vld [vmem:[%s408] sm:$0x7f]
          %v444 = vpack.c.bf16 %v443, %v443
          %v445 = vld [vmem:[%s1] sm:$0xf]
          %v446 = vld [vmem:[%s1 + $0x4] sm:$0xf]
          %v447 = vld [vmem:[%s1 + $0x8] sm:$0xf]
          %v448 = vld [vmem:[%s1 + $0xc] sm:$0xf]
          %v449 = vld [vmem:[%s1 + $0x10] sm:$0xf]
          %v450 = vld [vmem:[%s1 + $0x14] sm:$0xf]
          %v451 = vld [vmem:[%s1 + $0x18] sm:$0xf]
          %v452 = vld [vmem:[%s1 + $0x1c] sm:$0xf]
          %v453 = vld [vmem:[%s2] sm:$0xff]
          %v454 = vld [vmem:[%s2 + $0x8] sm:$0xff]
          %v455 = vld [vmem:[%s2 + $0x10] sm:$0xff]
          %v456 = vld [vmem:[%s2 + $0x18] sm:$0xff]
          %v457 = vld [vmem:[%s2 + $0x20] sm:$0xff]
          %v458 = vld [vmem:[%s2 + $0x28] sm:$0xff]
          %v459 = vld [vmem:[%s2 + $0x30] sm:$0xff]
          %v460 = vld [vmem:[%s2 + $0x38] sm:$0xff]
          %462 = vset.pattern.permute.xlu0 0
          %463 = vperm.xlu0 %462, %v453
          %v464 = vpop.permute.xlu0 %463
          %467 = vset.pattern.permute.xlu0 0
          %468 = vperm.xlu0 %467, %v454
          %v469 = vpop.permute.xlu0 %468
          %472 = vset.pattern.permute.xlu0 0
          %473 = vperm.xlu0 %472, %v455
          %v474 = vpop.permute.xlu0 %473
          %477 = vset.pattern.permute.xlu0 0
          %478 = vperm.xlu0 %477, %v456
          %v479 = vpop.permute.xlu0 %478
          %482 = vset.pattern.permute.xlu0 0
          %483 = vperm.xlu0 %482, %v457
          %v484 = vpop.permute.xlu0 %483
          %487 = vset.pattern.permute.xlu0 0
          %488 = vperm.xlu0 %487, %v458
          %v489 = vpop.permute.xlu0 %488
          %492 = vset.pattern.permute.xlu0 0
          %493 = vperm.xlu0 %492, %v459
          %v494 = vpop.permute.xlu0 %493
          %497 = vset.pattern.permute.xlu0 0
          %498 = vperm.xlu0 %497, %v460
          %v499 = vpop.permute.xlu0 %498
          %v509 = vunpack.c.l.b16 %v445
          %v510 = vunpack.c.l.b16 %v446
          %v511 = vunpack.c.l.b16 %v447
          %v512 = vunpack.c.l.b16 %v448
          %v513 = vunpack.c.l.b16 %v449
          %v514 = vunpack.c.l.b16 %v450
          %v515 = vunpack.c.l.b16 %v451
          %v516 = vunpack.c.l.b16 %v452
          %v517 = vpack.c.b16 %v510, %v509
          %v518 = vpack.c.b16 %v512, %v511
          %v519 = vpack.c.b16 %v514, %v513
          %v520 = vpack.c.b16 %v516, %v515
          %vm521 = vcmask 56320
          %v523 = vsel %vm521, %v517, 0
          %v526 = vsel %vm521, %v518, 0
          %v529 = vsel %vm521, %v519, 0
          %v532 = vsel %vm521, %v520, 0
          %vm534 = vcmask 1042432
          %vm535 = vcmask 1043456
          %v536 = vsel %vm534, 4294967295, 65535
          %v537 = vsel %vm535, %v536, 0
          %v539 = vand.u32 %v444, %v537
          %541 = vmatpush.bf16.msra.mxu0 0
          %542 = vmatpush.bf16.msra.mxu0 0
          %543 = vmatpush.bf16.msra.mxu0 0
          %544 = vmatpush.bf16.msra.mxu0 0
          %545 = vmatpush.bf16.msra.mxu0 0
          %546 = vmatpush.bf16.msra.mxu0 0
          %547 = vmatpush.bf16.msra.mxu0 0
          %548 = vmatpush.bf16.msra.mxu0 %v539
          %549 = vmatmul.bf16.gmra.mxu0 %v523
          %v550 = vpop.f32.mrf.mxu0
          %v551 = vadd.f32 %v464, %v550
          %v552 = vpop.f32.mrf.mxu0
          %v553 = vadd.f32 %v469, %v552
          %554 = vmatmul.bf16.gmra.mxu0 %v526
          %v555 = vpop.f32.mrf.mxu0
          %v556 = vadd.f32 %v474, %v555
          %v557 = vpop.f32.mrf.mxu0
          %v558 = vadd.f32 %v479, %v557
          %559 = vmatmul.bf16.gmra.mxu0 %v529
          %v560 = vpop.f32.mrf.mxu0
          %v561 = vadd.f32 %v484, %v560
          %v562 = vpop.f32.mrf.mxu0
          %v563 = vadd.f32 %v489, %v562
          %564 = vmatmul.bf16.gmra.mxu0 %v532
          %v565 = vpop.f32.mrf.mxu0
          %v566 = vadd.f32 %v494, %v565
          %v567 = vpop.f32.mrf.mxu0
          %v568 = vadd.f32 %v499, %v567
          %569 = vdwg.mxu0
          %v570 = vld [vmem:[#allocation2] sm:$0x1]
          %vm571 = vcmask 130048
          %v572 = vsel %vm571, %v551, 0.0
          %v573 = vsel %vm571, %v553, 0.0
          %v574 = vadd.f32 %v572, %v573
          %v575 = vsel %vm571, %v556, 0.0
          %v576 = vadd.f32 %v574, %v575
          %v577 = vsel %vm571, %v558, 0.0
          %v578 = vadd.f32 %v576, %v577
          %v579 = vsel %vm571, %v561, 0.0
          %v580 = vadd.f32 %v578, %v579
          %v581 = vsel %vm571, %v563, 0.0
          %v582 = vadd.f32 %v580, %v581
          %v583 = vsel %vm571, %v566, 0.0
          %v584 = vadd.f32 %v582, %v583
          %v585 = vsel %vm571, %v568, 0.0
          %v586 = vadd.f32 %v584, %v585
          %587 = vadd.xlane.f32.xlu0 %v586
          %v588 = vpop.xlane.xlu0 %587
          %v589 = vrot.slane %v588, 4
          %v590 = vadd.f32 %v588, %v589
          %v591 = vrot.slane %v590, 2
          %v592 = vadd.f32 %v590, %v591
          %v593 = vrot.slane %v592, 1
          %v594 = vadd.f32 %v592, %v593
          %s595 = vtos %v594
          %v596 = vstv %s595
          %v597 = vadd.f32 %v570, %v596
          %vm598 = vcmask 0
          %599 = vst.msk [vmem:[#allocation2] sm:$0x1] %vm598, %v597
          %v600 = vld [vmem:[#allocation3] sm:$0x1]
          %v601 = vmul.f32 %v551, %v551
          %v602 = vmul.f32 %v553, %v553
          %v603 = vmul.f32 %v556, %v556
          %v604 = vmul.f32 %v558, %v558
          %v605 = vmul.f32 %v561, %v561
          %v606 = vmul.f32 %v563, %v563
          %v607 = vmul.f32 %v566, %v566
          %v608 = vmul.f32 %v568, %v568
          %v609 = vsel %vm571, %v601, 0.0
          %v610 = vsel %vm571, %v602, 0.0
          %v611 = vadd.f32 %v609, %v610
          %v612 = vsel %vm571, %v603, 0.0
          %v613 = vadd.f32 %v611, %v612
          %v614 = vsel %vm571, %v604, 0.0
          %v615 = vadd.f32 %v613, %v614
          %v616 = vsel %vm571, %v605, 0.0
          %v617 = vadd.f32 %v615, %v616
          %v618 = vsel %vm571, %v606, 0.0
          %v619 = vadd.f32 %v617, %v618
          %v620 = vsel %vm571, %v607, 0.0
          %v621 = vadd.f32 %v619, %v620
          %v622 = vsel %vm571, %v608, 0.0
          %v623 = vadd.f32 %v621, %v622
          %624 = vadd.xlane.f32.xlu0 %v623
          %v625 = vpop.xlane.xlu0 %624
          %v626 = vrot.slane %v625, 4
          %v627 = vadd.f32 %v625, %v626
          %v628 = vrot.slane %v627, 2
          %v629 = vadd.f32 %v627, %v628
          %v630 = vrot.slane %v629, 1
          %v631 = vadd.f32 %v629, %v630
          %s632 = vtos %v631
          %v633 = vstv %s632
          %v634 = vadd.f32 %v600, %v633
          %635 = vst.msk [vmem:[#allocation3] sm:$0x1] %vm598, %v634
          %s636 = scalar_lea.vmem %s408, 8
          %v637 = vld [vmem:[%s636] sm:$0x7f]
          %v638 = vpack.c.bf16 %v637, %v637
          %v639 = vld [vmem:[%s1] sm:$0xf]
          %v640 = vld [vmem:[%s1 + $0x4] sm:$0xf]
          %v641 = vld [vmem:[%s1 + $0x8] sm:$0xf]
          %v642 = vld [vmem:[%s1 + $0xc] sm:$0xf]
          %v643 = vld [vmem:[%s1 + $0x10] sm:$0xf]
          %v644 = vld [vmem:[%s1 + $0x14] sm:$0xf]
          %v645 = vld [vmem:[%s1 + $0x18] sm:$0xf]
          %v646 = vld [vmem:[%s1 + $0x1c] sm:$0xf]
          %v647 = vld [vmem:[%s2] sm:$0xff]
          %v648 = vld [vmem:[%s2 + $0x8] sm:$0xff]
          %v649 = vld [vmem:[%s2 + $0x10] sm:$0xff]
          %v650 = vld [vmem:[%s2 + $0x18] sm:$0xff]
          %v651 = vld [vmem:[%s2 + $0x20] sm:$0xff]
          %v652 = vld [vmem:[%s2 + $0x28] sm:$0xff]
          %v653 = vld [vmem:[%s2 + $0x30] sm:$0xff]
          %v654 = vld [vmem:[%s2 + $0x38] sm:$0xff]
          %656 = vset.pattern.permute.xlu0 0
          %657 = vperm.xlu0 %656, %v647
          %v658 = vpop.permute.xlu0 %657
          %661 = vset.pattern.permute.xlu0 0
          %662 = vperm.xlu0 %661, %v648
          %v663 = vpop.permute.xlu0 %662
          %666 = vset.pattern.permute.xlu0 0
          %667 = vperm.xlu0 %666, %v649
          %v668 = vpop.permute.xlu0 %667
          %671 = vset.pattern.permute.xlu0 0
          %672 = vperm.xlu0 %671, %v650
          %v673 = vpop.permute.xlu0 %672
          %676 = vset.pattern.permute.xlu0 0
          %677 = vperm.xlu0 %676, %v651
          %v678 = vpop.permute.xlu0 %677
          %681 = vset.pattern.permute.xlu0 0
          %682 = vperm.xlu0 %681, %v652
          %v683 = vpop.permute.xlu0 %682
          %686 = vset.pattern.permute.xlu0 0
          %687 = vperm.xlu0 %686, %v653
          %v688 = vpop.permute.xlu0 %687
          %691 = vset.pattern.permute.xlu0 0
          %692 = vperm.xlu0 %691, %v654
          %v693 = vpop.permute.xlu0 %692
          %v703 = vunpack.c.l.b16 %v639
          %v704 = vunpack.c.l.b16 %v640
          %v705 = vunpack.c.l.b16 %v641
          %v706 = vunpack.c.l.b16 %v642
          %v707 = vunpack.c.l.b16 %v643
          %v708 = vunpack.c.l.b16 %v644
          %v709 = vunpack.c.l.b16 %v645
          %v710 = vunpack.c.l.b16 %v646
          %v711 = vpack.c.b16 %v704, %v703
          %v712 = vpack.c.b16 %v706, %v705
          %v713 = vpack.c.b16 %v708, %v707
          %v714 = vpack.c.b16 %v710, %v709
          %v716 = vsel %vm521, %v711, 0
          %v719 = vsel %vm521, %v712, 0
          %v722 = vsel %vm521, %v713, 0
          %v725 = vsel %vm521, %v714, 0
          %v728 = vand.u32 %v638, %v537
          %730 = vmatpush.bf16.msra.mxu0 0
          %731 = vmatpush.bf16.msra.mxu0 0
          %732 = vmatpush.bf16.msra.mxu0 0
          %733 = vmatpush.bf16.msra.mxu0 0
          %734 = vmatpush.bf16.msra.mxu0 0
          %735 = vmatpush.bf16.msra.mxu0 0
          %736 = vmatpush.bf16.msra.mxu0 0
          %737 = vmatpush.bf16.msra.mxu0 %v728
          %738 = vmatmul.bf16.gmra.mxu0 %v716
          %v739 = vpop.f32.mrf.mxu0
          %v740 = vadd.f32 %v658, %v739
          %v741 = vpop.f32.mrf.mxu0
          %v742 = vadd.f32 %v663, %v741
          %743 = vmatmul.bf16.gmra.mxu0 %v719
          %v744 = vpop.f32.mrf.mxu0
          %v745 = vadd.f32 %v668, %v744
          %v746 = vpop.f32.mrf.mxu0
          %v747 = vadd.f32 %v673, %v746
          %748 = vmatmul.bf16.gmra.mxu0 %v722
          %v749 = vpop.f32.mrf.mxu0
          %v750 = vadd.f32 %v678, %v749
          %v751 = vpop.f32.mrf.mxu0
          %v752 = vadd.f32 %v683, %v751
          %753 = vmatmul.bf16.gmra.mxu0 %v725
          %v754 = vpop.f32.mrf.mxu0
          %v755 = vadd.f32 %v688, %v754
          %v756 = vpop.f32.mrf.mxu0
          %v757 = vadd.f32 %v693, %v756
          %758 = vdwg.mxu0
          %s759 = scalar_lea.vmem [#allocation2], 1
          %v760 = vld [vmem:[%s759] sm:$0x1]
          %v761 = vsel %vm571, %v740, 0.0
          %v762 = vsel %vm571, %v742, 0.0
          %v763 = vadd.f32 %v761, %v762
          %v764 = vsel %vm571, %v745, 0.0
          %v765 = vadd.f32 %v763, %v764
          %v766 = vsel %vm571, %v747, 0.0
          %v767 = vadd.f32 %v765, %v766
          %v768 = vsel %vm571, %v750, 0.0
          %v769 = vadd.f32 %v767, %v768
          %v770 = vsel %vm571, %v752, 0.0
          %v771 = vadd.f32 %v769, %v770
          %v772 = vsel %vm571, %v755, 0.0
          %v773 = vadd.f32 %v771, %v772
          %v774 = vsel %vm571, %v757, 0.0
          %v775 = vadd.f32 %v773, %v774
          %776 = vadd.xlane.f32.xlu0 %v775
          %v777 = vpop.xlane.xlu0 %776
          %v778 = vrot.slane %v777, 4
          %v779 = vadd.f32 %v777, %v778
          %v780 = vrot.slane %v779, 2
          %v781 = vadd.f32 %v779, %v780
          %v782 = vrot.slane %v781, 1
          %v783 = vadd.f32 %v781, %v782
          %s784 = vtos %v783
          %v785 = vstv %s784
          %v786 = vadd.f32 %v760, %v785
          %787 = vst.msk [vmem:[%s759] sm:$0x1] %vm598, %v786
          %s788 = scalar_lea.vmem [#allocation3], 1
          %v789 = vld [vmem:[%s788] sm:$0x1]
          %v790 = vmul.f32 %v740, %v740
          %v791 = vmul.f32 %v742, %v742
          %v792 = vmul.f32 %v745, %v745
          %v793 = vmul.f32 %v747, %v747
          %v794 = vmul.f32 %v750, %v750
          %v795 = vmul.f32 %v752, %v752
          %v796 = vmul.f32 %v755, %v755
          %v797 = vmul.f32 %v757, %v757
          %v798 = vsel %vm571, %v790, 0.0
          %v799 = vsel %vm571, %v791, 0.0
          %v800 = vadd.f32 %v798, %v799
          %v801 = vsel %vm571, %v792, 0.0
          %v802 = vadd.f32 %v800, %v801
          %v803 = vsel %vm571, %v793, 0.0
          %v804 = vadd.f32 %v802, %v803
          %v805 = vsel %vm571, %v794, 0.0
          %v806 = vadd.f32 %v804, %v805
          %v807 = vsel %vm571, %v795, 0.0
          %v808 = vadd.f32 %v806, %v807
          %v809 = vsel %vm571, %v796, 0.0
          %v810 = vadd.f32 %v808, %v809
          %v811 = vsel %vm571, %v797, 0.0
          %v812 = vadd.f32 %v810, %v811
          %813 = vadd.xlane.f32.xlu0 %v812
          %v814 = vpop.xlane.xlu0 %813
          %v815 = vrot.slane %v814, 4
          %v816 = vadd.f32 %v814, %v815
          %v817 = vrot.slane %v816, 2
          %v818 = vadd.f32 %v816, %v817
          %v819 = vrot.slane %v818, 1
          %v820 = vadd.f32 %v818, %v819
          %s821 = vtos %v820
          %v822 = vstv %s821
          %v823 = vadd.f32 %v789, %v822
          %824 = vst.msk [vmem:[%s788] sm:$0x1] %vm598, %v823
        $region80: #{tpu_custom_call.1} parent=63 // pred_fallthru
          _
        // Predicated region
        $region81: #{tpu_custom_call.1} parent=63 // pred_check
          %p825 = pneg %p423
        $region82: #{tpu_custom_call.1} parent=63 // pred_check_branch
          %827 = sbr.rel (%p825) target = $region84
        $region83: #{tpu_custom_call.1} parent=63 // pred_region
          %v828 = vld [vmem:[%s408] sm:$0x7f]
          %v829 = vpack.c.bf16 %v828, %v828
          %v830 = vld [vmem:[%s1] sm:$0xf]
          %v831 = vld [vmem:[%s1 + $0x4] sm:$0xf]
          %v832 = vld [vmem:[%s1 + $0x8] sm:$0xf]
          %v833 = vld [vmem:[%s1 + $0xc] sm:$0xf]
          %v834 = vld [vmem:[%s1 + $0x10] sm:$0xf]
          %v835 = vld [vmem:[%s1 + $0x14] sm:$0xf]
          %v836 = vld [vmem:[%s1 + $0x18] sm:$0xf]
          %v837 = vld [vmem:[%s1 + $0x1c] sm:$0xf]
          %v838 = vld [vmem:[%s2] sm:$0xff]
          %v839 = vld [vmem:[%s2 + $0x8] sm:$0xff]
          %v840 = vld [vmem:[%s2 + $0x10] sm:$0xff]
          %v841 = vld [vmem:[%s2 + $0x18] sm:$0xff]
          %v842 = vld [vmem:[%s2 + $0x20] sm:$0xff]
          %v843 = vld [vmem:[%s2 + $0x28] sm:$0xff]
          %v844 = vld [vmem:[%s2 + $0x30] sm:$0xff]
          %v845 = vld [vmem:[%s2 + $0x38] sm:$0xff]
          %847 = vset.pattern.permute.xlu0 0
          %848 = vperm.xlu0 %847, %v838
          %v849 = vpop.permute.xlu0 %848
          %852 = vset.pattern.permute.xlu0 0
          %853 = vperm.xlu0 %852, %v839
          %v854 = vpop.permute.xlu0 %853
          %857 = vset.pattern.permute.xlu0 0
          %858 = vperm.xlu0 %857, %v840
          %v859 = vpop.permute.xlu0 %858
          %862 = vset.pattern.permute.xlu0 0
          %863 = vperm.xlu0 %862, %v841
          %v864 = vpop.permute.xlu0 %863
          %867 = vset.pattern.permute.xlu0 0
          %868 = vperm.xlu0 %867, %v842
          %v869 = vpop.permute.xlu0 %868
          %872 = vset.pattern.permute.xlu0 0
          %873 = vperm.xlu0 %872, %v843
          %v874 = vpop.permute.xlu0 %873
          %877 = vset.pattern.permute.xlu0 0
          %878 = vperm.xlu0 %877, %v844
          %v879 = vpop.permute.xlu0 %878
          %882 = vset.pattern.permute.xlu0 0
          %883 = vperm.xlu0 %882, %v845
          %v884 = vpop.permute.xlu0 %883
          %v894 = vunpack.c.l.b16 %v830
          %v895 = vunpack.c.l.b16 %v831
          %v896 = vunpack.c.l.b16 %v832
          %v897 = vunpack.c.l.b16 %v833
          %v898 = vunpack.c.l.b16 %v834
          %v899 = vunpack.c.l.b16 %v835
          %v900 = vunpack.c.l.b16 %v836
          %v901 = vunpack.c.l.b16 %v837
          %v902 = vpack.c.b16 %v895, %v894
          %v903 = vpack.c.b16 %v897, %v896
          %v904 = vpack.c.b16 %v899, %v898
          %v905 = vpack.c.b16 %v901, %v900
          %vm906 = vcmask 56320
          %v908 = vsel %vm906, %v902, 0
          %v911 = vsel %vm906, %v903, 0
          %v914 = vsel %vm906, %v904, 0
          %v917 = vsel %vm906, %v905, 0
          %vm919 = vcmask 1042432
          %vm920 = vcmask 1043456
          %v921 = vsel %vm919, 4294967295, 65535
          %v922 = vsel %vm920, %v921, 0
          %v924 = vand.u32 %v829, %v922
          %926 = vmatpush.bf16.msra.mxu0 0
          %927 = vmatpush.bf16.msra.mxu0 0
          %928 = vmatpush.bf16.msra.mxu0 0
          %929 = vmatpush.bf16.msra.mxu0 0
          %930 = vmatpush.bf16.msra.mxu0 0
          %931 = vmatpush.bf16.msra.mxu0 0
          %932 = vmatpush.bf16.msra.mxu0 0
          %933 = vmatpush.bf16.msra.mxu0 %v924
          %934 = vmatmul.bf16.gmra.mxu0 %v908
          %v935 = vpop.f32.mrf.mxu0
          %v936 = vadd.f32 %v849, %v935
          %v937 = vpop.f32.mrf.mxu0
          %v938 = vadd.f32 %v854, %v937
          %939 = vmatmul.bf16.gmra.mxu0 %v911
          %v940 = vpop.f32.mrf.mxu0
          %v941 = vadd.f32 %v859, %v940
          %v942 = vpop.f32.mrf.mxu0
          %v943 = vadd.f32 %v864, %v942
          %944 = vmatmul.bf16.gmra.mxu0 %v914
          %v945 = vpop.f32.mrf.mxu0
          %v946 = vadd.f32 %v869, %v945
          %v947 = vpop.f32.mrf.mxu0
          %v948 = vadd.f32 %v874, %v947
          %949 = vmatmul.bf16.gmra.mxu0 %v917
          %v950 = vpop.f32.mrf.mxu0
          %v951 = vadd.f32 %v879, %v950
          %v952 = vpop.f32.mrf.mxu0
          %v953 = vadd.f32 %v884, %v952
          %954 = vdwg.mxu0
          %v955 = vld [vmem:[#allocation2] sm:$0x1]
          %v956 = vmul.f32 %v955, 0.0009765625
          %v957 = vld [vmem:[#allocation3] sm:$0x1]
          %v958 = vmul.f32 %v957, 0.0009765625
          %v959 = vmul.f32 %v956, %v956
          %v960 = vsub.f32 %v958, %v959
          %v962 = vperm.slane %v956, 0
          %963 = vset.pattern.permute.xlu0 0
          %964 = vperm.xlu0 %963, %v962
          %v965 = vpop.permute.xlu0 %964
          %v967 = vsub.f32 %v936, %v965
          %v968 = vsub.f32 %v938, %v965
          %v969 = vsub.f32 %v941, %v965
          %v970 = vsub.f32 %v943, %v965
          %v971 = vsub.f32 %v946, %v965
          %v972 = vsub.f32 %v948, %v965
          %v973 = vsub.f32 %v951, %v965
          %v974 = vsub.f32 %v953, %v965
          %v975 = vadd.f32 %v960, 1e-05
          %v976 = vrsqrt.pop %v975
          %v977 = vmul.f32 %v976, %v975
          %v978 = vmul.f32 %v977, %v976
          %v979 = vmul.f32 0.5, %v978
          %v980 = vsub.f32 1.5, %v979
          %v981 = vmul.f32 %v976, %v980
          %vm982 = vweird.f32 %v975
          %vm983 = vweird.f32 %v976
          %vm984 = vmor %vm982, %vm983
          %v985 = vsel %vm984, %v976, %v981
          %v987 = vperm.slane %v985, 0
          %988 = vset.pattern.permute.xlu0 0
          %989 = vperm.xlu0 %988, %v987
          %v990 = vpop.permute.xlu0 %989
          %v992 = vmul.f32 %v967, %v990
          %v993 = vmul.f32 %v968, %v990
          %v994 = vmul.f32 %v969, %v990
          %v995 = vmul.f32 %v970, %v990
          %v996 = vmul.f32 %v971, %v990
          %v997 = vmul.f32 %v972, %v990
          %v998 = vmul.f32 %v973, %v990
          %v999 = vmul.f32 %v974, %v990
          %v1000 = vld [vmem:[%s3] sm:$0xff]
          %v1001 = vld [vmem:[%s3 + $0x8] sm:$0xff]
          %v1002 = vld [vmem:[%s3 + $0x10] sm:$0xff]
          %v1003 = vld [vmem:[%s3 + $0x18] sm:$0xff]
          %v1004 = vld [vmem:[%s3 + $0x20] sm:$0xff]
          %v1005 = vld [vmem:[%s3 + $0x28] sm:$0xff]
          %v1006 = vld [vmem:[%s3 + $0x30] sm:$0xff]
          %v1007 = vld [vmem:[%s3 + $0x38] sm:$0xff]
          %1009 = vset.pattern.permute.xlu0 0
          %1010 = vperm.xlu0 %1009, %v1000
          %v1011 = vpop.permute.xlu0 %1010
          %1014 = vset.pattern.permute.xlu0 0
          %1015 = vperm.xlu0 %1014, %v1001
          %v1016 = vpop.permute.xlu0 %1015
          %1019 = vset.pattern.permute.xlu0 0
          %1020 = vperm.xlu0 %1019, %v1002
          %v1021 = vpop.permute.xlu0 %1020
          %1024 = vset.pattern.permute.xlu0 0
          %1025 = vperm.xlu0 %1024, %v1003
          %v1026 = vpop.permute.xlu0 %1025
          %1029 = vset.pattern.permute.xlu0 0
          %1030 = vperm.xlu0 %1029, %v1004
          %v1031 = vpop.permute.xlu0 %1030
          %1034 = vset.pattern.permute.xlu0 0
          %1035 = vperm.xlu0 %1034, %v1005
          %v1036 = vpop.permute.xlu0 %1035
          %1039 = vset.pattern.permute.xlu0 0
          %1040 = vperm.xlu0 %1039, %v1006
          %v1041 = vpop.permute.xlu0 %1040
          %1044 = vset.pattern.permute.xlu0 0
          %1045 = vperm.xlu0 %1044, %v1007
          %v1046 = vpop.permute.xlu0 %1045
          %v1048 = vmul.f32 %v992, %v1011
          %v1049 = vmul.f32 %v993, %v1016
          %v1050 = vmul.f32 %v994, %v1021
          %v1051 = vmul.f32 %v995, %v1026
          %v1052 = vmul.f32 %v996, %v1031
          %v1053 = vmul.f32 %v997, %v1036
          %v1054 = vmul.f32 %v998, %v1041
          %v1055 = vmul.f32 %v999, %v1046
          %v1056 = vld [vmem:[%s4] sm:$0xff]
          %v1057 = vld [vmem:[%s4 + $0x8] sm:$0xff]
          %v1058 = vld [vmem:[%s4 + $0x10] sm:$0xff]
          %v1059 = vld [vmem:[%s4 + $0x18] sm:$0xff]
          %v1060 = vld [vmem:[%s4 + $0x20] sm:$0xff]
          %v1061 = vld [vmem:[%s4 + $0x28] sm:$0xff]
          %v1062 = vld [vmem:[%s4 + $0x30] sm:$0xff]
          %v1063 = vld [vmem:[%s4 + $0x38] sm:$0xff]
          %1065 = vset.pattern.permute.xlu0 0
          %1066 = vperm.xlu0 %1065, %v1056
          %v1067 = vpop.permute.xlu0 %1066
          %1070 = vset.pattern.permute.xlu0 0
          %1071 = vperm.xlu0 %1070, %v1057
          %v1072 = vpop.permute.xlu0 %1071
          %1075 = vset.pattern.permute.xlu0 0
          %1076 = vperm.xlu0 %1075, %v1058
          %v1077 = vpop.permute.xlu0 %1076
          %1080 = vset.pattern.permute.xlu0 0
          %1081 = vperm.xlu0 %1080, %v1059
          %v1082 = vpop.permute.xlu0 %1081
          %1085 = vset.pattern.permute.xlu0 0
          %1086 = vperm.xlu0 %1085, %v1060
          %v1087 = vpop.permute.xlu0 %1086
          %1090 = vset.pattern.permute.xlu0 0
          %1091 = vperm.xlu0 %1090, %v1061
          %v1092 = vpop.permute.xlu0 %1091
          %1095 = vset.pattern.permute.xlu0 0
          %1096 = vperm.xlu0 %1095, %v1062
          %v1097 = vpop.permute.xlu0 %1096
          %1100 = vset.pattern.permute.xlu0 0
          %1101 = vperm.xlu0 %1100, %v1063
          %v1102 = vpop.permute.xlu0 %1101
          %v1104 = vadd.f32 %v1048, %v1067
          %v1105 = vadd.f32 %v1049, %v1072
          %v1106 = vadd.f32 %v1050, %v1077
          %v1107 = vadd.f32 %v1051, %v1082
          %v1108 = vadd.f32 %v1052, %v1087
          %v1109 = vadd.f32 %v1053, %v1092
          %v1110 = vadd.f32 %v1054, %v1097
          %v1111 = vadd.f32 %v1055, %v1102
          %v1112 = vmax.f32 %v1104, 0.0
          %v1113 = vmax.f32 %v1105, 0.0
          %v1114 = vmax.f32 %v1106, 0.0
          %v1115 = vmax.f32 %v1107, 0.0
          %v1116 = vmax.f32 %v1108, 0.0
          %v1117 = vmax.f32 %v1109, 0.0
          %v1118 = vmax.f32 %v1110, 0.0
          %v1119 = vmax.f32 %v1111, 0.0
          %v1120 = vpack.c.bf16 %v1113, %v1112
          %v1121 = vpack.c.bf16 %v1115, %v1114
          %v1122 = vpack.c.bf16 %v1117, %v1116
          %v1123 = vpack.c.bf16 %v1119, %v1118
          %v1124 = vld [vmem:[%s5] sm:$0xf]
          %v1125 = vld [vmem:[%s5 + $0x4] sm:$0xf]
          %v1126 = vld [vmem:[%s5 + $0x8] sm:$0xf]
          %v1127 = vld [vmem:[%s5 + $0xc] sm:$0xf]
          %v1128 = vld [vmem:[%s5 + $0x10] sm:$0xf]
          %v1129 = vld [vmem:[%s5 + $0x14] sm:$0xf]
          %v1130 = vld [vmem:[%s5 + $0x18] sm:$0xf]
          %v1131 = vld [vmem:[%s5 + $0x1c] sm:$0xf]
          %v1132 = vld [vmem:[%s5 + $0x20] sm:$0xf]
          %v1133 = vld [vmem:[%s5 + $0x24] sm:$0xf]
          %v1134 = vld [vmem:[%s5 + $0x28] sm:$0xf]
          %v1135 = vld [vmem:[%s5 + $0x2c] sm:$0xf]
          %v1136 = vld [vmem:[%s5 + $0x30] sm:$0xf]
          %v1137 = vld [vmem:[%s5 + $0x34] sm:$0xf]
          %v1138 = vld [vmem:[%s5 + $0x38] sm:$0xf]
          %v1139 = vld [vmem:[%s5 + $0x3c] sm:$0xf]
          %v1140 = vld [vmem:[%s6] sm:$0xff]
          %v1141 = vld [vmem:[%s6 + $0x8] sm:$0xff]
          %v1142 = vld [vmem:[%s6 + $0x10] sm:$0xff]
          %v1143 = vld [vmem:[%s6 + $0x18] sm:$0xff]
          %v1144 = vld [vmem:[%s6 + $0x20] sm:$0xff]
          %v1145 = vld [vmem:[%s6 + $0x28] sm:$0xff]
          %v1146 = vld [vmem:[%s6 + $0x30] sm:$0xff]
          %v1147 = vld [vmem:[%s6 + $0x38] sm:$0xff]
          %v1148 = vld [vmem:[%s6 + $0x40] sm:$0xff]
          %v1149 = vld [vmem:[%s6 + $0x48] sm:$0xff]
          %v1150 = vld [vmem:[%s6 + $0x50] sm:$0xff]
          %v1151 = vld [vmem:[%s6 + $0x58] sm:$0xff]
          %v1152 = vld [vmem:[%s6 + $0x60] sm:$0xff]
          %v1153 = vld [vmem:[%s6 + $0x68] sm:$0xff]
          %v1154 = vld [vmem:[%s6 + $0x70] sm:$0xff]
          %v1155 = vld [vmem:[%s6 + $0x78] sm:$0xff]
          %1157 = vset.pattern.permute.xlu0 0
          %1158 = vperm.xlu0 %1157, %v1140
          %v1159 = vpop.permute.xlu0 %1158
          %1162 = vset.pattern.permute.xlu0 0
          %1163 = vperm.xlu0 %1162, %v1141
          %v1164 = vpop.permute.xlu0 %1163
          %1167 = vset.pattern.permute.xlu0 0
          %1168 = vperm.xlu0 %1167, %v1142
          %v1169 = vpop.permute.xlu0 %1168
          %1172 = vset.pattern.permute.xlu0 0
          %1173 = vperm.xlu0 %1172, %v1143
          %v1174 = vpop.permute.xlu0 %1173
          %1177 = vset.pattern.permute.xlu0 0
          %1178 = vperm.xlu0 %1177, %v1144
          %v1179 = vpop.permute.xlu0 %1178
          %1182 = vset.pattern.permute.xlu0 0
          %1183 = vperm.xlu0 %1182, %v1145
          %v1184 = vpop.permute.xlu0 %1183
          %1187 = vset.pattern.permute.xlu0 0
          %1188 = vperm.xlu0 %1187, %v1146
          %v1189 = vpop.permute.xlu0 %1188
          %1192 = vset.pattern.permute.xlu0 0
          %1193 = vperm.xlu0 %1192, %v1147
          %v1194 = vpop.permute.xlu0 %1193
          %1197 = vset.pattern.permute.xlu0 0
          %1198 = vperm.xlu0 %1197, %v1148
          %v1199 = vpop.permute.xlu0 %1198
          %1202 = vset.pattern.permute.xlu0 0
          %1203 = vperm.xlu0 %1202, %v1149
          %v1204 = vpop.permute.xlu0 %1203
          %1207 = vset.pattern.permute.xlu0 0
          %1208 = vperm.xlu0 %1207, %v1150
          %v1209 = vpop.permute.xlu0 %1208
          %1212 = vset.pattern.permute.xlu0 0
          %1213 = vperm.xlu0 %1212, %v1151
          %v1214 = vpop.permute.xlu0 %1213
          %1217 = vset.pattern.permute.xlu0 0
          %1218 = vperm.xlu0 %1217, %v1152
          %v1219 = vpop.permute.xlu0 %1218
          %1222 = vset.pattern.permute.xlu0 0
          %1223 = vperm.xlu0 %1222, %v1153
          %v1224 = vpop.permute.xlu0 %1223
          %1227 = vset.pattern.permute.xlu0 0
          %1228 = vperm.xlu0 %1227, %v1154
          %v1229 = vpop.permute.xlu0 %1228
          %1232 = vset.pattern.permute.xlu0 0
          %1233 = vperm.xlu0 %1232, %v1155
          %v1234 = vpop.permute.xlu0 %1233
          %v1252 = vunpack.c.l.b16 %v1124
          %v1253 = vunpack.c.l.b16 %v1125
          %v1254 = vunpack.c.l.b16 %v1126
          %v1255 = vunpack.c.l.b16 %v1127
          %v1256 = vunpack.c.l.b16 %v1128
          %v1257 = vunpack.c.l.b16 %v1129
          %v1258 = vunpack.c.l.b16 %v1130
          %v1259 = vunpack.c.l.b16 %v1131
          %v1260 = vunpack.c.l.b16 %v1132
          %v1261 = vunpack.c.l.b16 %v1133
          %v1262 = vunpack.c.l.b16 %v1134
          %v1263 = vunpack.c.l.b16 %v1135
          %v1264 = vunpack.c.l.b16 %v1136
          %v1265 = vunpack.c.l.b16 %v1137
          %v1266 = vunpack.c.l.b16 %v1138
          %v1267 = vunpack.c.l.b16 %v1139
          %v1268 = vpack.c.b16 %v1253, %v1252
          %v1269 = vpack.c.b16 %v1255, %v1254
          %v1270 = vpack.c.b16 %v1257, %v1256
          %v1271 = vpack.c.b16 %v1259, %v1258
          %v1272 = vpack.c.b16 %v1261, %v1260
          %v1273 = vpack.c.b16 %v1263, %v1262
          %v1274 = vpack.c.b16 %v1265, %v1264
          %v1275 = vpack.c.b16 %v1267, %v1266
          %vm1276 = vcmask 523264
          %v1278 = vsel %vm1276, %v1268, 0
          %v1281 = vsel %vm1276, %v1269, 0
          %v1284 = vsel %vm1276, %v1270, 0
          %v1287 = vsel %vm1276, %v1271, 0
          %v1290 = vsel %vm1276, %v1272, 0
          %v1293 = vsel %vm1276, %v1273, 0
          %v1296 = vsel %vm1276, %v1274, 0
          %v1299 = vsel %vm1276, %v1275, 0
          %1301 = vmatpush.bf16.msra.mxu0 0
          %1302 = vmatpush.bf16.msra.mxu0 0
          %1303 = vmatpush.bf16.msra.mxu0 0
          %1304 = vmatpush.bf16.msra.mxu0 0
          %1305 = vmatpush.bf16.msra.mxu0 %v1123
          %1306 = vmatpush.bf16.msra.mxu0 %v1122
          %1307 = vmatpush.bf16.msra.mxu0 %v1121
          %1308 = vmatpush.bf16.msra.mxu0 %v1120
          %1309 = vmatmul.bf16.gmra.mxu0 %v1278
          %v1310 = vpop.f32.mrf.mxu0
          %v1311 = vadd.f32 %v1159, %v1310
          %v1312 = vpop.f32.mrf.mxu0
          %v1313 = vadd.f32 %v1164, %v1312
          %1314 = vmatmul.bf16.gmra.mxu0 %v1281
          %v1315 = vpop.f32.mrf.mxu0
          %v1316 = vadd.f32 %v1169, %v1315
          %v1317 = vpop.f32.mrf.mxu0
          %v1318 = vadd.f32 %v1174, %v1317
          %1319 = vmatmul.bf16.gmra.mxu0 %v1284
          %v1320 = vpop.f32.mrf.mxu0
          %v1321 = vadd.f32 %v1179, %v1320
          %v1322 = vpop.f32.mrf.mxu0
          %v1323 = vadd.f32 %v1184, %v1322
          %1324 = vmatmul.bf16.gmra.mxu0 %v1287
          %v1325 = vpop.f32.mrf.mxu0
          %v1326 = vadd.f32 %v1189, %v1325
          %v1327 = vpop.f32.mrf.mxu0
          %v1328 = vadd.f32 %v1194, %v1327
          %1329 = vmatmul.bf16.gmra.mxu0 %v1290
          %v1330 = vpop.f32.mrf.mxu0
          %v1331 = vadd.f32 %v1199, %v1330
          %v1332 = vpop.f32.mrf.mxu0
          %v1333 = vadd.f32 %v1204, %v1332
          %1334 = vmatmul.bf16.gmra.mxu0 %v1293
          %v1335 = vpop.f32.mrf.mxu0
          %v1336 = vadd.f32 %v1209, %v1335
          %v1337 = vpop.f32.mrf.mxu0
          %v1338 = vadd.f32 %v1214, %v1337
          %1339 = vmatmul.bf16.gmra.mxu0 %v1296
          %v1340 = vpop.f32.mrf.mxu0
          %v1341 = vadd.f32 %v1219, %v1340
          %v1342 = vpop.f32.mrf.mxu0
          %v1343 = vadd.f32 %v1224, %v1342
          %1344 = vmatmul.bf16.gmra.mxu0 %v1299
          %v1345 = vpop.f32.mrf.mxu0
          %v1346 = vadd.f32 %v1229, %v1345
          %v1347 = vpop.f32.mrf.mxu0
          %v1348 = vadd.f32 %v1234, %v1347
          %1349 = vdwg.mxu0
          %v1350 = vld [vmem:[#allocation4] sm:$0x1]
          %vm1351 = vcmask 130048
          %v1352 = vsel %vm1351, %v1311, 0.0
          %v1353 = vsel %vm1351, %v1313, 0.0
          %v1354 = vadd.f32 %v1352, %v1353
          %v1355 = vsel %vm1351, %v1316, 0.0
          %v1356 = vadd.f32 %v1354, %v1355
          %v1357 = vsel %vm1351, %v1318, 0.0
          %v1358 = vadd.f32 %v1356, %v1357
          %v1359 = vsel %vm1351, %v1321, 0.0
          %v1360 = vadd.f32 %v1358, %v1359
          %v1361 = vsel %vm1351, %v1323, 0.0
          %v1362 = vadd.f32 %v1360, %v1361
          %v1363 = vsel %vm1351, %v1326, 0.0
          %v1364 = vadd.f32 %v1362, %v1363
          %v1365 = vsel %vm1351, %v1328, 0.0
          %v1366 = vadd.f32 %v1364, %v1365
          %v1367 = vsel %vm1351, %v1331, 0.0
          %v1368 = vadd.f32 %v1366, %v1367
          %v1369 = vsel %vm1351, %v1333, 0.0
          %v1370 = vadd.f32 %v1368, %v1369
          %v1371 = vsel %vm1351, %v1336, 0.0
          %v1372 = vadd.f32 %v1370, %v1371
          %v1373 = vsel %vm1351, %v1338, 0.0
          %v1374 = vadd.f32 %v1372, %v1373
          %v1375 = vsel %vm1351, %v1341, 0.0
          %v1376 = vadd.f32 %v1374, %v1375
          %v1377 = vsel %vm1351, %v1343, 0.0
          %v1378 = vadd.f32 %v1376, %v1377
          %v1379 = vsel %vm1351, %v1346, 0.0
          %v1380 = vadd.f32 %v1378, %v1379
          %v1381 = vsel %vm1351, %v1348, 0.0
          %v1382 = vadd.f32 %v1380, %v1381
          %1383 = vadd.xlane.f32.xlu0 %v1382
          %v1384 = vpop.xlane.xlu0 %1383
          %v1385 = vrot.slane %v1384, 4
          %v1386 = vadd.f32 %v1384, %v1385
          %v1387 = vrot.slane %v1386, 2
          %v1388 = vadd.f32 %v1386, %v1387
          %v1389 = vrot.slane %v1388, 1
          %v1390 = vadd.f32 %v1388, %v1389
          %s1391 = vtos %v1390
          %v1392 = vstv %s1391
          %v1393 = vadd.f32 %v1350, %v1392
          %vm1394 = vcmask 0
          %1395 = vst.msk [vmem:[#allocation4] sm:$0x1] %vm1394, %v1393
          %v1396 = vld [vmem:[#allocation5] sm:$0x1]
          %v1397 = vmul.f32 %v1311, %v1311
          %v1398 = vmul.f32 %v1313, %v1313
          %v1399 = vmul.f32 %v1316, %v1316
          %v1400 = vmul.f32 %v1318, %v1318
          %v1401 = vmul.f32 %v1321, %v1321
          %v1402 = vmul.f32 %v1323, %v1323
          %v1403 = vmul.f32 %v1326, %v1326
          %v1404 = vmul.f32 %v1328, %v1328
          %v1405 = vmul.f32 %v1331, %v1331
          %v1406 = vmul.f32 %v1333, %v1333
          %v1407 = vmul.f32 %v1336, %v1336
          %v1408 = vmul.f32 %v1338, %v1338
          %v1409 = vmul.f32 %v1341, %v1341
          %v1410 = vmul.f32 %v1343, %v1343
          %v1411 = vmul.f32 %v1346, %v1346
          %v1412 = vmul.f32 %v1348, %v1348
          %v1413 = vsel %vm1351, %v1397, 0.0
          %v1414 = vsel %vm1351, %v1398, 0.0
          %v1415 = vadd.f32 %v1413, %v1414
          %v1416 = vsel %vm1351, %v1399, 0.0
          %v1417 = vadd.f32 %v1415, %v1416
          %v1418 = vsel %vm1351, %v1400, 0.0
          %v1419 = vadd.f32 %v1417, %v1418
          %v1420 = vsel %vm1351, %v1401, 0.0
          %v1421 = vadd.f32 %v1419, %v1420
          %v1422 = vsel %vm1351, %v1402, 0.0
          %v1423 = vadd.f32 %v1421, %v1422
          %v1424 = vsel %vm1351, %v1403, 0.0
          %v1425 = vadd.f32 %v1423, %v1424
          %v1426 = vsel %vm1351, %v1404, 0.0
          %v1427 = vadd.f32 %v1425, %v1426
          %v1428 = vsel %vm1351, %v1405, 0.0
          %v1429 = vadd.f32 %v1427, %v1428
          %v1430 = vsel %vm1351, %v1406, 0.0
          %v1431 = vadd.f32 %v1429, %v1430
          %v1432 = vsel %vm1351, %v1407, 0.0
          %v1433 = vadd.f32 %v1431, %v1432
          %v1434 = vsel %vm1351, %v1408, 0.0
          %v1435 = vadd.f32 %v1433, %v1434
          %v1436 = vsel %vm1351, %v1409, 0.0
          %v1437 = vadd.f32 %v1435, %v1436
          %v1438 = vsel %vm1351, %v1410, 0.0
          %v1439 = vadd.f32 %v1437, %v1438
          %v1440 = vsel %vm1351, %v1411, 0.0
          %v1441 = vadd.f32 %v1439, %v1440
          %v1442 = vsel %vm1351, %v1412, 0.0
          %v1443 = vadd.f32 %v1441, %v1442
          %1444 = vadd.xlane.f32.xlu0 %v1443
          %v1445 = vpop.xlane.xlu0 %1444
          %v1446 = vrot.slane %v1445, 4
          %v1447 = vadd.f32 %v1445, %v1446
          %v1448 = vrot.slane %v1447, 2
          %v1449 = vadd.f32 %v1447, %v1448
          %v1450 = vrot.slane %v1449, 1
          %v1451 = vadd.f32 %v1449, %v1450
          %s1452 = vtos %v1451
          %v1453 = vstv %s1452
          %v1454 = vadd.f32 %v1396, %v1453
          %1455 = vst.msk [vmem:[#allocation5] sm:$0x1] %vm1394, %v1454
          %s1456 = scalar_lea.vmem %s408, 8
          %v1457 = vld [vmem:[%s1456] sm:$0x7f]
          %v1458 = vpack.c.bf16 %v1457, %v1457
          %v1459 = vld [vmem:[%s1] sm:$0xf]
          %v1460 = vld [vmem:[%s1 + $0x4] sm:$0xf]
          %v1461 = vld [vmem:[%s1 + $0x8] sm:$0xf]
          %v1462 = vld [vmem:[%s1 + $0xc] sm:$0xf]
          %v1463 = vld [vmem:[%s1 + $0x10] sm:$0xf]
          %v1464 = vld [vmem:[%s1 + $0x14] sm:$0xf]
          %v1465 = vld [vmem:[%s1 + $0x18] sm:$0xf]
          %v1466 = vld [vmem:[%s1 + $0x1c] sm:$0xf]
          %v1467 = vld [vmem:[%s2] sm:$0xff]
          %v1468 = vld [vmem:[%s2 + $0x8] sm:$0xff]
          %v1469 = vld [vmem:[%s2 + $0x10] sm:$0xff]
          %v1470 = vld [vmem:[%s2 + $0x18] sm:$0xff]
          %v1471 = vld [vmem:[%s2 + $0x20] sm:$0xff]
          %v1472 = vld [vmem:[%s2 + $0x28] sm:$0xff]
          %v1473 = vld [vmem:[%s2 + $0x30] sm:$0xff]
          %v1474 = vld [vmem:[%s2 + $0x38] sm:$0xff]
          %1476 = vset.pattern.permute.xlu0 0
          %1477 = vperm.xlu0 %1476, %v1467
          %v1478 = vpop.permute.xlu0 %1477
          %1481 = vset.pattern.permute.xlu0 0
          %1482 = vperm.xlu0 %1481, %v1468
          %v1483 = vpop.permute.xlu0 %1482
          %1486 = vset.pattern.permute.xlu0 0
          %1487 = vperm.xlu0 %1486, %v1469
          %v1488 = vpop.permute.xlu0 %1487
          %1491 = vset.pattern.permute.xlu0 0
          %1492 = vperm.xlu0 %1491, %v1470
          %v1493 = vpop.permute.xlu0 %1492
          %1496 = vset.pattern.permute.xlu0 0
          %1497 = vperm.xlu0 %1496, %v1471
          %v1498 = vpop.permute.xlu0 %1497
          %1501 = vset.pattern.permute.xlu0 0
          %1502 = vperm.xlu0 %1501, %v1472
          %v1503 = vpop.permute.xlu0 %1502
          %1506 = vset.pattern.permute.xlu0 0
          %1507 = vperm.xlu0 %1506, %v1473
          %v1508 = vpop.permute.xlu0 %1507
          %1511 = vset.pattern.permute.xlu0 0
          %1512 = vperm.xlu0 %1511, %v1474
          %v1513 = vpop.permute.xlu0 %1512
          %v1523 = vunpack.c.l.b16 %v1459
          %v1524 = vunpack.c.l.b16 %v1460
          %v1525 = vunpack.c.l.b16 %v1461
          %v1526 = vunpack.c.l.b16 %v1462
          %v1527 = vunpack.c.l.b16 %v1463
          %v1528 = vunpack.c.l.b16 %v1464
          %v1529 = vunpack.c.l.b16 %v1465
          %v1530 = vunpack.c.l.b16 %v1466
          %v1531 = vpack.c.b16 %v1524, %v1523
          %v1532 = vpack.c.b16 %v1526, %v1525
          %v1533 = vpack.c.b16 %v1528, %v1527
          %v1534 = vpack.c.b16 %v1530, %v1529
          %v1536 = vsel %vm906, %v1531, 0
          %v1539 = vsel %vm906, %v1532, 0
          %v1542 = vsel %vm906, %v1533, 0
          %v1545 = vsel %vm906, %v1534, 0
          %v1548 = vand.u32 %v1458, %v922
          %1550 = vmatpush.bf16.msra.mxu0 0
          %1551 = vmatpush.bf16.msra.mxu0 0
          %1552 = vmatpush.bf16.msra.mxu0 0
          %1553 = vmatpush.bf16.msra.mxu0 0
          %1554 = vmatpush.bf16.msra.mxu0 0
          %1555 = vmatpush.bf16.msra.mxu0 0
          %1556 = vmatpush.bf16.msra.mxu0 0
          %1557 = vmatpush.bf16.msra.mxu0 %v1548
          %1558 = vmatmul.bf16.gmra.mxu0 %v1536
          %v1559 = vpop.f32.mrf.mxu0
          %v1560 = vadd.f32 %v1478, %v1559
          %v1561 = vpop.f32.mrf.mxu0
          %v1562 = vadd.f32 %v1483, %v1561
          %1563 = vmatmul.bf16.gmra.mxu0 %v1539
          %v1564 = vpop.f32.mrf.mxu0
          %v1565 = vadd.f32 %v1488, %v1564
          %v1566 = vpop.f32.mrf.mxu0
          %v1567 = vadd.f32 %v1493, %v1566
          %1568 = vmatmul.bf16.gmra.mxu0 %v1542
          %v1569 = vpop.f32.mrf.mxu0
          %v1570 = vadd.f32 %v1498, %v1569
          %v1571 = vpop.f32.mrf.mxu0
          %v1572 = vadd.f32 %v1503, %v1571
          %1573 = vmatmul.bf16.gmra.mxu0 %v1545
          %v1574 = vpop.f32.mrf.mxu0
          %v1575 = vadd.f32 %v1508, %v1574
          %v1576 = vpop.f32.mrf.mxu0
          %v1577 = vadd.f32 %v1513, %v1576
          %1578 = vdwg.mxu0
          %s1579 = scalar_lea.vmem [#allocation2], 1
          %v1580 = vld [vmem:[%s1579] sm:$0x1]
          %v1581 = vmul.f32 %v1580, 0.0009765625
          %s1582 = scalar_lea.vmem [#allocation3], 1
          %v1583 = vld [vmem:[%s1582] sm:$0x1]
          %v1584 = vmul.f32 %v1583, 0.0009765625
          %v1585 = vmul.f32 %v1581, %v1581
          %v1586 = vsub.f32 %v1584, %v1585
          %v1588 = vperm.slane %v1581, 0
          %1589 = vset.pattern.permute.xlu0 0
          %1590 = vperm.xlu0 %1589, %v1588
          %v1591 = vpop.permute.xlu0 %1590
          %v1593 = vsub.f32 %v1560, %v1591
          %v1594 = vsub.f32 %v1562, %v1591
          %v1595 = vsub.f32 %v1565, %v1591
          %v1596 = vsub.f32 %v1567, %v1591
          %v1597 = vsub.f32 %v1570, %v1591
          %v1598 = vsub.f32 %v1572, %v1591
          %v1599 = vsub.f32 %v1575, %v1591
          %v1600 = vsub.f32 %v1577, %v1591
          %v1601 = vadd.f32 %v1586, 1e-05
          %v1602 = vrsqrt.pop %v1601
          %v1603 = vmul.f32 %v1602, %v1601
          %v1604 = vmul.f32 %v1603, %v1602
          %v1605 = vmul.f32 0.5, %v1604
          %v1606 = vsub.f32 1.5, %v1605
          %v1607 = vmul.f32 %v1602, %v1606
          %vm1608 = vweird.f32 %v1601
          %vm1609 = vweird.f32 %v1602
          %vm1610 = vmor %vm1608, %vm1609
          %v1611 = vsel %vm1610, %v1602, %v1607
          %v1613 = vperm.slane %v1611, 0
          %1614 = vset.pattern.permute.xlu0 0
          %1615 = vperm.xlu0 %1614, %v1613
          %v1616 = vpop.permute.xlu0 %1615
          %v1618 = vmul.f32 %v1593, %v1616
          %v1619 = vmul.f32 %v1594, %v1616
          %v1620 = vmul.f32 %v1595, %v1616
          %v1621 = vmul.f32 %v1596, %v1616
          %v1622 = vmul.f32 %v1597, %v1616
          %v1623 = vmul.f32 %v1598, %v1616
          %v1624 = vmul.f32 %v1599, %v1616
          %v1625 = vmul.f32 %v1600, %v1616
          %v1626 = vld [vmem:[%s3] sm:$0xff]
          %v1627 = vld [vmem:[%s3 + $0x8] sm:$0xff]
          %v1628 = vld [vmem:[%s3 + $0x10] sm:$0xff]
          %v1629 = vld [vmem:[%s3 + $0x18] sm:$0xff]
          %v1630 = vld [vmem:[%s3 + $0x20] sm:$0xff]
          %v1631 = vld [vmem:[%s3 + $0x28] sm:$0xff]
          %v1632 = vld [vmem:[%s3 + $0x30] sm:$0xff]
          %v1633 = vld [vmem:[%s3 + $0x38] sm:$0xff]
          %1635 = vset.pattern.permute.xlu0 0
          %1636 = vperm.xlu0 %1635, %v1626
          %v1637 = vpop.permute.xlu0 %1636
          %1640 = vset.pattern.permute.xlu0 0
          %1641 = vperm.xlu0 %1640, %v1627
          %v1642 = vpop.permute.xlu0 %1641
          %1645 = vset.pattern.permute.xlu0 0
          %1646 = vperm.xlu0 %1645, %v1628
          %v1647 = vpop.permute.xlu0 %1646
          %1650 = vset.pattern.permute.xlu0 0
          %1651 = vperm.xlu0 %1650, %v1629
          %v1652 = vpop.permute.xlu0 %1651
          %1655 = vset.pattern.permute.xlu0 0
          %1656 = vperm.xlu0 %1655, %v1630
          %v1657 = vpop.permute.xlu0 %1656
          %1660 = vset.pattern.permute.xlu0 0
          %1661 = vperm.xlu0 %1660, %v1631
          %v1662 = vpop.permute.xlu0 %1661
          %1665 = vset.pattern.permute.xlu0 0
          %1666 = vperm.xlu0 %1665, %v1632
          %v1667 = vpop.permute.xlu0 %1666
          %1670 = vset.pattern.permute.xlu0 0
          %1671 = vperm.xlu0 %1670, %v1633
          %v1672 = vpop.permute.xlu0 %1671
          %v1674 = vmul.f32 %v1618, %v1637
          %v1675 = vmul.f32 %v1619, %v1642
          %v1676 = vmul.f32 %v1620, %v1647
          %v1677 = vmul.f32 %v1621, %v1652
          %v1678 = vmul.f32 %v1622, %v1657
          %v1679 = vmul.f32 %v1623, %v1662
          %v1680 = vmul.f32 %v1624, %v1667
          %v1681 = vmul.f32 %v1625, %v1672
          %v1682 = vld [vmem:[%s4] sm:$0xff]
          %v1683 = vld [vmem:[%s4 + $0x8] sm:$0xff]
          %v1684 = vld [vmem:[%s4 + $0x10] sm:$0xff]
          %v1685 = vld [vmem:[%s4 + $0x18] sm:$0xff]
          %v1686 = vld [vmem:[%s4 + $0x20] sm:$0xff]
          %v1687 = vld [vmem:[%s4 + $0x28] sm:$0xff]
          %v1688 = vld [vmem:[%s4 + $0x30] sm:$0xff]
          %v1689 = vld [vmem:[%s4 + $0x38] sm:$0xff]
          %1691 = vset.pattern.permute.xlu0 0
          %1692 = vperm.xlu0 %1691, %v1682
          %v1693 = vpop.permute.xlu0 %1692
          %1696 = vset.pattern.permute.xlu0 0
          %1697 = vperm.xlu0 %1696, %v1683
          %v1698 = vpop.permute.xlu0 %1697
          %1701 = vset.pattern.permute.xlu0 0
          %1702 = vperm.xlu0 %1701, %v1684
          %v1703 = vpop.permute.xlu0 %1702
          %1706 = vset.pattern.permute.xlu0 0
          %1707 = vperm.xlu0 %1706, %v1685
          %v1708 = vpop.permute.xlu0 %1707
          %1711 = vset.pattern.permute.xlu0 0
          %1712 = vperm.xlu0 %1711, %v1686
          %v1713 = vpop.permute.xlu0 %1712
          %1716 = vset.pattern.permute.xlu0 0
          %1717 = vperm.xlu0 %1716, %v1687
          %v1718 = vpop.permute.xlu0 %1717
          %1721 = vset.pattern.permute.xlu0 0
          %1722 = vperm.xlu0 %1721, %v1688
          %v1723 = vpop.permute.xlu0 %1722
          %1726 = vset.pattern.permute.xlu0 0
          %1727 = vperm.xlu0 %1726, %v1689
          %v1728 = vpop.permute.xlu0 %1727
          %v1730 = vadd.f32 %v1674, %v1693
          %v1731 = vadd.f32 %v1675, %v1698
          %v1732 = vadd.f32 %v1676, %v1703
          %v1733 = vadd.f32 %v1677, %v1708
          %v1734 = vadd.f32 %v1678, %v1713
          %v1735 = vadd.f32 %v1679, %v1718
          %v1736 = vadd.f32 %v1680, %v1723
          %v1737 = vadd.f32 %v1681, %v1728
          %v1738 = vmax.f32 %v1730, 0.0
          %v1739 = vmax.f32 %v1731, 0.0
          %v1740 = vmax.f32 %v1732, 0.0
          %v1741 = vmax.f32 %v1733, 0.0
          %v1742 = vmax.f32 %v1734, 0.0
          %v1743 = vmax.f32 %v1735, 0.0
          %v1744 = vmax.f32 %v1736, 0.0
          %v1745 = vmax.f32 %v1737, 0.0
          %v1746 = vpack.c.bf16 %v1739, %v1738
          %v1747 = vpack.c.bf16 %v1741, %v1740
          %v1748 = vpack.c.bf16 %v1743, %v1742
          %v1749 = vpack.c.bf16 %v1745, %v1744
          %v1750 = vld [vmem:[%s5] sm:$0xf]
          %v1751 = vld [vmem:[%s5 + $0x4] sm:$0xf]
          %v1752 = vld [vmem:[%s5 + $0x8] sm:$0xf]
          %v1753 = vld [vmem:[%s5 + $0xc] sm:$0xf]
          %v1754 = vld [vmem:[%s5 + $0x10] sm:$0xf]
          %v1755 = vld [vmem:[%s5 + $0x14] sm:$0xf]
          %v1756 = vld [vmem:[%s5 + $0x18] sm:$0xf]
          %v1757 = vld [vmem:[%s5 + $0x1c] sm:$0xf]
          %v1758 = vld [vmem:[%s5 + $0x20] sm:$0xf]
          %v1759 = vld [vmem:[%s5 + $0x24] sm:$0xf]
          %v1760 = vld [vmem:[%s5 + $0x28] sm:$0xf]
          %v1761 = vld [vmem:[%s5 + $0x2c] sm:$0xf]
          %v1762 = vld [vmem:[%s5 + $0x30] sm:$0xf]
          %v1763 = vld [vmem:[%s5 + $0x34] sm:$0xf]
          %v1764 = vld [vmem:[%s5 + $0x38] sm:$0xf]
          %v1765 = vld [vmem:[%s5 + $0x3c] sm:$0xf]
          %v1766 = vld [vmem:[%s6] sm:$0xff]
          %v1767 = vld [vmem:[%s6 + $0x8] sm:$0xff]
          %v1768 = vld [vmem:[%s6 + $0x10] sm:$0xff]
          %v1769 = vld [vmem:[%s6 + $0x18] sm:$0xff]
          %v1770 = vld [vmem:[%s6 + $0x20] sm:$0xff]
          %v1771 = vld [vmem:[%s6 + $0x28] sm:$0xff]
          %v1772 = vld [vmem:[%s6 + $0x30] sm:$0xff]
          %v1773 = vld [vmem:[%s6 + $0x38] sm:$0xff]
          %v1774 = vld [vmem:[%s6 + $0x40] sm:$0xff]
          %v1775 = vld [vmem:[%s6 + $0x48] sm:$0xff]
          %v1776 = vld [vmem:[%s6 + $0x50] sm:$0xff]
          %v1777 = vld [vmem:[%s6 + $0x58] sm:$0xff]
          %v1778 = vld [vmem:[%s6 + $0x60] sm:$0xff]
          %v1779 = vld [vmem:[%s6 + $0x68] sm:$0xff]
          %v1780 = vld [vmem:[%s6 + $0x70] sm:$0xff]
          %v1781 = vld [vmem:[%s6 + $0x78] sm:$0xff]
          %1783 = vset.pattern.permute.xlu0 0
          %1784 = vperm.xlu0 %1783, %v1766
          %v1785 = vpop.permute.xlu0 %1784
          %1788 = vset.pattern.permute.xlu0 0
          %1789 = vperm.xlu0 %1788, %v1767
          %v1790 = vpop.permute.xlu0 %1789
          %1793 = vset.pattern.permute.xlu0 0
          %1794 = vperm.xlu0 %1793, %v1768
          %v1795 = vpop.permute.xlu0 %1794
          %1798 = vset.pattern.permute.xlu0 0
          %1799 = vperm.xlu0 %1798, %v1769
          %v1800 = vpop.permute.xlu0 %1799
          %1803 = vset.pattern.permute.xlu0 0
          %1804 = vperm.xlu0 %1803, %v1770
          %v1805 = vpop.permute.xlu0 %1804
          %1808 = vset.pattern.permute.xlu0 0
          %1809 = vperm.xlu0 %1808, %v1771
          %v1810 = vpop.permute.xlu0 %1809
          %1813 = vset.pattern.permute.xlu0 0
          %1814 = vperm.xlu0 %1813, %v1772
          %v1815 = vpop.permute.xlu0 %1814
          %1818 = vset.pattern.permute.xlu0 0
          %1819 = vperm.xlu0 %1818, %v1773
          %v1820 = vpop.permute.xlu0 %1819
          %1823 = vset.pattern.permute.xlu0 0
          %1824 = vperm.xlu0 %1823, %v1774
          %v1825 = vpop.permute.xlu0 %1824
          %1828 = vset.pattern.permute.xlu0 0
          %1829 = vperm.xlu0 %1828, %v1775
          %v1830 = vpop.permute.xlu0 %1829
          %1833 = vset.pattern.permute.xlu0 0
          %1834 = vperm.xlu0 %1833, %v1776
          %v1835 = vpop.permute.xlu0 %1834
          %1838 = vset.pattern.permute.xlu0 0
          %1839 = vperm.xlu0 %1838, %v1777
          %v1840 = vpop.permute.xlu0 %1839
          %1843 = vset.pattern.permute.xlu0 0
          %1844 = vperm.xlu0 %1843, %v1778
          %v1845 = vpop.permute.xlu0 %1844
          %1848 = vset.pattern.permute.xlu0 0
          %1849 = vperm.xlu0 %1848, %v1779
          %v1850 = vpop.permute.xlu0 %1849
          %1853 = vset.pattern.permute.xlu0 0
          %1854 = vperm.xlu0 %1853, %v1780
          %v1855 = vpop.permute.xlu0 %1854
          %1858 = vset.pattern.permute.xlu0 0
          %1859 = vperm.xlu0 %1858, %v1781
          %v1860 = vpop.permute.xlu0 %1859
          %v1878 = vunpack.c.l.b16 %v1750
          %v1879 = vunpack.c.l.b16 %v1751
          %v1880 = vunpack.c.l.b16 %v1752
          %v1881 = vunpack.c.l.b16 %v1753
          %v1882 = vunpack.c.l.b16 %v1754
          %v1883 = vunpack.c.l.b16 %v1755
          %v1884 = vunpack.c.l.b16 %v1756
          %v1885 = vunpack.c.l.b16 %v1757
          %v1886 = vunpack.c.l.b16 %v1758
          %v1887 = vunpack.c.l.b16 %v1759
          %v1888 = vunpack.c.l.b16 %v1760
          %v1889 = vunpack.c.l.b16 %v1761
          %v1890 = vunpack.c.l.b16 %v1762
          %v1891 = vunpack.c.l.b16 %v1763
          %v1892 = vunpack.c.l.b16 %v1764
          %v1893 = vunpack.c.l.b16 %v1765
          %v1894 = vpack.c.b16 %v1879, %v1878
          %v1895 = vpack.c.b16 %v1881, %v1880
          %v1896 = vpack.c.b16 %v1883, %v1882
          %v1897 = vpack.c.b16 %v1885, %v1884
          %v1898 = vpack.c.b16 %v1887, %v1886
          %v1899 = vpack.c.b16 %v1889, %v1888
          %v1900 = vpack.c.b16 %v1891, %v1890
          %v1901 = vpack.c.b16 %v1893, %v1892
          %v1903 = vsel %vm1276, %v1894, 0
          %v1906 = vsel %vm1276, %v1895, 0
          %v1909 = vsel %vm1276, %v1896, 0
          %v1912 = vsel %vm1276, %v1897, 0
          %v1915 = vsel %vm1276, %v1898, 0
          %v1918 = vsel %vm1276, %v1899, 0
          %v1921 = vsel %vm1276, %v1900, 0
          %v1924 = vsel %vm1276, %v1901, 0
          %1926 = vmatpush.bf16.msra.mxu0 0
          %1927 = vmatpush.bf16.msra.mxu0 0
          %1928 = vmatpush.bf16.msra.mxu0 0
          %1929 = vmatpush.bf16.msra.mxu0 0
          %1930 = vmatpush.bf16.msra.mxu0 %v1749
          %1931 = vmatpush.bf16.msra.mxu0 %v1748
          %1932 = vmatpush.bf16.msra.mxu0 %v1747
          %1933 = vmatpush.bf16.msra.mxu0 %v1746
          %1934 = vmatmul.bf16.gmra.mxu0 %v1903
          %v1935 = vpop.f32.mrf.mxu0
          %v1936 = vadd.f32 %v1785, %v1935
          %v1937 = vpop.f32.mrf.mxu0
          %v1938 = vadd.f32 %v1790, %v1937
          %1939 = vmatmul.bf16.gmra.mxu0 %v1906
          %v1940 = vpop.f32.mrf.mxu0
          %v1941 = vadd.f32 %v1795, %v1940
          %v1942 = vpop.f32.mrf.mxu0
          %v1943 = vadd.f32 %v1800, %v1942
          %1944 = vmatmul.bf16.gmra.mxu0 %v1909
          %v1945 = vpop.f32.mrf.mxu0
          %v1946 = vadd.f32 %v1805, %v1945
          %v1947 = vpop.f32.mrf.mxu0
          %v1948 = vadd.f32 %v1810, %v1947
          %1949 = vmatmul.bf16.gmra.mxu0 %v1912
          %v1950 = vpop.f32.mrf.mxu0
          %v1951 = vadd.f32 %v1815, %v1950
          %v1952 = vpop.f32.mrf.mxu0
          %v1953 = vadd.f32 %v1820, %v1952
          %1954 = vmatmul.bf16.gmra.mxu0 %v1915
          %v1955 = vpop.f32.mrf.mxu0
          %v1956 = vadd.f32 %v1825, %v1955
          %v1957 = vpop.f32.mrf.mxu0
          %v1958 = vadd.f32 %v1830, %v1957
          %1959 = vmatmul.bf16.gmra.mxu0 %v1918
          %v1960 = vpop.f32.mrf.mxu0
          %v1961 = vadd.f32 %v1835, %v1960
          %v1962 = vpop.f32.mrf.mxu0
          %v1963 = vadd.f32 %v1840, %v1962
          %1964 = vmatmul.bf16.gmra.mxu0 %v1921
          %v1965 = vpop.f32.mrf.mxu0
          %v1966 = vadd.f32 %v1845, %v1965
          %v1967 = vpop.f32.mrf.mxu0
          %v1968 = vadd.f32 %v1850, %v1967
          %1969 = vmatmul.bf16.gmra.mxu0 %v1924
          %v1970 = vpop.f32.mrf.mxu0
          %v1971 = vadd.f32 %v1855, %v1970
          %v1972 = vpop.f32.mrf.mxu0
          %v1973 = vadd.f32 %v1860, %v1972
          %1974 = vdwg.mxu0
          %s1975 = scalar_lea.vmem [#allocation4], 1
          %v1976 = vld [vmem:[%s1975] sm:$0x1]
          %v1977 = vsel %vm1351, %v1936, 0.0
          %v1978 = vsel %vm1351, %v1938, 0.0
          %v1979 = vadd.f32 %v1977, %v1978
          %v1980 = vsel %vm1351, %v1941, 0.0
          %v1981 = vadd.f32 %v1979, %v1980
          %v1982 = vsel %vm1351, %v1943, 0.0
          %v1983 = vadd.f32 %v1981, %v1982
          %v1984 = vsel %vm1351, %v1946, 0.0
          %v1985 = vadd.f32 %v1983, %v1984
          %v1986 = vsel %vm1351, %v1948, 0.0
          %v1987 = vadd.f32 %v1985, %v1986
          %v1988 = vsel %vm1351, %v1951, 0.0
          %v1989 = vadd.f32 %v1987, %v1988
          %v1990 = vsel %vm1351, %v1953, 0.0
          %v1991 = vadd.f32 %v1989, %v1990
          %v1992 = vsel %vm1351, %v1956, 0.0
          %v1993 = vadd.f32 %v1991, %v1992
          %v1994 = vsel %vm1351, %v1958, 0.0
          %v1995 = vadd.f32 %v1993, %v1994
          %v1996 = vsel %vm1351, %v1961, 0.0
          %v1997 = vadd.f32 %v1995, %v1996
          %v1998 = vsel %vm1351, %v1963, 0.0
          %v1999 = vadd.f32 %v1997, %v1998
          %v2000 = vsel %vm1351, %v1966, 0.0
          %v2001 = vadd.f32 %v1999, %v2000
          %v2002 = vsel %vm1351, %v1968, 0.0
          %v2003 = vadd.f32 %v2001, %v2002
          %v2004 = vsel %vm1351, %v1971, 0.0
          %v2005 = vadd.f32 %v2003, %v2004
          %v2006 = vsel %vm1351, %v1973, 0.0
          %v2007 = vadd.f32 %v2005, %v2006
          %2008 = vadd.xlane.f32.xlu0 %v2007
          %v2009 = vpop.xlane.xlu0 %2008
          %v2010 = vrot.slane %v2009, 4
          %v2011 = vadd.f32 %v2009, %v2010
          %v2012 = vrot.slane %v2011, 2
          %v2013 = vadd.f32 %v2011, %v2012
          %v2014 = vrot.slane %v2013, 1
          %v2015 = vadd.f32 %v2013, %v2014
          %s2016 = vtos %v2015
          %v2017 = vstv %s2016
          %v2018 = vadd.f32 %v1976, %v2017
          %2019 = vst.msk [vmem:[%s1975] sm:$0x1] %vm1394, %v2018
          %s2020 = scalar_lea.vmem [#allocation5], 1
          %v2021 = vld [vmem:[%s2020] sm:$0x1]
          %v2022 = vmul.f32 %v1936, %v1936
          %v2023 = vmul.f32 %v1938, %v1938
          %v2024 = vmul.f32 %v1941, %v1941
          %v2025 = vmul.f32 %v1943, %v1943
          %v2026 = vmul.f32 %v1946, %v1946
          %v2027 = vmul.f32 %v1948, %v1948
          %v2028 = vmul.f32 %v1951, %v1951
          %v2029 = vmul.f32 %v1953, %v1953
          %v2030 = vmul.f32 %v1956, %v1956
          %v2031 = vmul.f32 %v1958, %v1958
          %v2032 = vmul.f32 %v1961, %v1961
          %v2033 = vmul.f32 %v1963, %v1963
          %v2034 = vmul.f32 %v1966, %v1966
          %v2035 = vmul.f32 %v1968, %v1968
          %v2036 = vmul.f32 %v1971, %v1971
          %v2037 = vmul.f32 %v1973, %v1973
          %v2038 = vsel %vm1351, %v2022, 0.0
          %v2039 = vsel %vm1351, %v2023, 0.0
          %v2040 = vadd.f32 %v2038, %v2039
          %v2041 = vsel %vm1351, %v2024, 0.0
          %v2042 = vadd.f32 %v2040, %v2041
          %v2043 = vsel %vm1351, %v2025, 0.0
          %v2044 = vadd.f32 %v2042, %v2043
          %v2045 = vsel %vm1351, %v2026, 0.0
          %v2046 = vadd.f32 %v2044, %v2045
          %v2047 = vsel %vm1351, %v2027, 0.0
          %v2048 = vadd.f32 %v2046, %v2047
          %v2049 = vsel %vm1351, %v2028, 0.0
          %v2050 = vadd.f32 %v2048, %v2049
          %v2051 = vsel %vm1351, %v2029, 0.0
          %v2052 = vadd.f32 %v2050, %v2051
          %v2053 = vsel %vm1351, %v2030, 0.0
          %v2054 = vadd.f32 %v2052, %v2053
          %v2055 = vsel %vm1351, %v2031, 0.0
          %v2056 = vadd.f32 %v2054, %v2055
          %v2057 = vsel %vm1351, %v2032, 0.0
          %v2058 = vadd.f32 %v2056, %v2057
          %v2059 = vsel %vm1351, %v2033, 0.0
          %v2060 = vadd.f32 %v2058, %v2059
          %v2061 = vsel %vm1351, %v2034, 0.0
          %v2062 = vadd.f32 %v2060, %v2061
          %v2063 = vsel %vm1351, %v2035, 0.0
          %v2064 = vadd.f32 %v2062, %v2063
          %v2065 = vsel %vm1351, %v2036, 0.0
          %v2066 = vadd.f32 %v2064, %v2065
          %v2067 = vsel %vm1351, %v2037, 0.0
          %v2068 = vadd.f32 %v2066, %v2067
          %2069 = vadd.xlane.f32.xlu0 %v2068
          %v2070 = vpop.xlane.xlu0 %2069
          %v2071 = vrot.slane %v2070, 4
          %v2072 = vadd.f32 %v2070, %v2071
          %v2073 = vrot.slane %v2072, 2
          %v2074 = vadd.f32 %v2072, %v2073
          %v2075 = vrot.slane %v2074, 1
          %v2076 = vadd.f32 %v2074, %v2075
          %s2077 = vtos %v2076
          %v2078 = vstv %s2077
          %v2079 = vadd.f32 %v2021, %v2078
          %2080 = vst.msk [vmem:[%s2020] sm:$0x1] %vm1394, %v2079
        $region84: #{tpu_custom_call.1} parent=63 // pred_fallthru
          _
        // Predicated region
        $region85: #{tpu_custom_call.1} parent=63 // pred_check
          %p2081 = pneg %p433
        $region86: #{tpu_custom_call.1} parent=63 // pred_check_branch
          %2083 = sbr.rel (%p2081) target = $region88
        $region87: #{tpu_custom_call.1} parent=63 // pred_region
          %v2084 = vld [vmem:[%s408] sm:$0x7f]
          %v2085 = vpack.c.bf16 %v2084, %v2084
          %v2086 = vld [vmem:[%s1] sm:$0xf]
          %v2087 = vld [vmem:[%s1 + $0x4] sm:$0xf]
          %v2088 = vld [vmem:[%s1 + $0x8] sm:$0xf]
          %v2089 = vld [vmem:[%s1 + $0xc] sm:$0xf]
          %v2090 = vld [vmem:[%s1 + $0x10] sm:$0xf]
          %v2091 = vld [vmem:[%s1 + $0x14] sm:$0xf]
          %v2092 = vld [vmem:[%s1 + $0x18] sm:$0xf]
          %v2093 = vld [vmem:[%s1 + $0x1c] sm:$0xf]
          %v2094 = vld [vmem:[%s2] sm:$0xff]
          %v2095 = vld [vmem:[%s2 + $0x8] sm:$0xff]
          %v2096 = vld [vmem:[%s2 + $0x10] sm:$0xff]
          %v2097 = vld [vmem:[%s2 + $0x18] sm:$0xff]
          %v2098 = vld [vmem:[%s2 + $0x20] sm:$0xff]
          %v2099 = vld [vmem:[%s2 + $0x28] sm:$0xff]
          %v2100 = vld [vmem:[%s2 + $0x30] sm:$0xff]
          %v2101 = vld [vmem:[%s2 + $0x38] sm:$0xff]
          %2103 = vset.pattern.permute.xlu0 0
          %2104 = vperm.xlu0 %2103, %v2094
          %v2105 = vpop.permute.xlu0 %2104
          %2108 = vset.pattern.permute.xlu0 0
          %2109 = vperm.xlu0 %2108, %v2095
          %v2110 = vpop.permute.xlu0 %2109
          %2113 = vset.pattern.permute.xlu0 0
          %2114 = vperm.xlu0 %2113, %v2096
          %v2115 = vpop.permute.xlu0 %2114
          %2118 = vset.pattern.permute.xlu0 0
          %2119 = vperm.xlu0 %2118, %v2097
          %v2120 = vpop.permute.xlu0 %2119
          %2123 = vset.pattern.permute.xlu0 0
          %2124 = vperm.xlu0 %2123, %v2098
          %v2125 = vpop.permute.xlu0 %2124
          %2128 = vset.pattern.permute.xlu0 0
          %2129 = vperm.xlu0 %2128, %v2099
          %v2130 = vpop.permute.xlu0 %2129
          %2133 = vset.pattern.permute.xlu0 0
          %2134 = vperm.xlu0 %2133, %v2100
          %v2135 = vpop.permute.xlu0 %2134
          %2138 = vset.pattern.permute.xlu0 0
          %2139 = vperm.xlu0 %2138, %v2101
          %v2140 = vpop.permute.xlu0 %2139
          %v2150 = vunpack.c.l.b16 %v2086
          %v2151 = vunpack.c.l.b16 %v2087
          %v2152 = vunpack.c.l.b16 %v2088
          %v2153 = vunpack.c.l.b16 %v2089
          %v2154 = vunpack.c.l.b16 %v2090
          %v2155 = vunpack.c.l.b16 %v2091
          %v2156 = vunpack.c.l.b16 %v2092
          %v2157 = vunpack.c.l.b16 %v2093
          %v2158 = vpack.c.b16 %v2151, %v2150
          %v2159 = vpack.c.b16 %v2153, %v2152
          %v2160 = vpack.c.b16 %v2155, %v2154
          %v2161 = vpack.c.b16 %v2157, %v2156
          %vm2162 = vcmask 56320
          %v2164 = vsel %vm2162, %v2158, 0
          %v2167 = vsel %vm2162, %v2159, 0
          %v2170 = vsel %vm2162, %v2160, 0
          %v2173 = vsel %vm2162, %v2161, 0
          %vm2175 = vcmask 1042432
          %vm2176 = vcmask 1043456
          %v2177 = vsel %vm2175, 4294967295, 65535
          %v2178 = vsel %vm2176, %v2177, 0
          %v2180 = vand.u32 %v2085, %v2178
          %2182 = vmatpush.bf16.msra.mxu0 0
          %2183 = vmatpush.bf16.msra.mxu0 0
          %2184 = vmatpush.bf16.msra.mxu0 0
          %2185 = vmatpush.bf16.msra.mxu0 0
          %2186 = vmatpush.bf16.msra.mxu0 0
          %2187 = vmatpush.bf16.msra.mxu0 0
          %2188 = vmatpush.bf16.msra.mxu0 0
          %2189 = vmatpush.bf16.msra.mxu0 %v2180
          %2190 = vmatmul.bf16.gmra.mxu0 %v2164
          %v2191 = vpop.f32.mrf.mxu0
          %v2192 = vadd.f32 %v2105, %v2191
          %v2193 = vpop.f32.mrf.mxu0
          %v2194 = vadd.f32 %v2110, %v2193
          %2195 = vmatmul.bf16.gmra.mxu0 %v2167
          %v2196 = vpop.f32.mrf.mxu0
          %v2197 = vadd.f32 %v2115, %v2196
          %v2198 = vpop.f32.mrf.mxu0
          %v2199 = vadd.f32 %v2120, %v2198
          %2200 = vmatmul.bf16.gmra.mxu0 %v2170
          %v2201 = vpop.f32.mrf.mxu0
          %v2202 = vadd.f32 %v2125, %v2201
          %v2203 = vpop.f32.mrf.mxu0
          %v2204 = vadd.f32 %v2130, %v2203
          %2205 = vmatmul.bf16.gmra.mxu0 %v2173
          %v2206 = vpop.f32.mrf.mxu0
          %v2207 = vadd.f32 %v2135, %v2206
          %v2208 = vpop.f32.mrf.mxu0
          %v2209 = vadd.f32 %v2140, %v2208
          %2210 = vdwg.mxu0
          %v2211 = vld [vmem:[#allocation2] sm:$0x1]
          %v2212 = vmul.f32 %v2211, 0.0009765625
          %v2213 = vld [vmem:[#allocation3] sm:$0x1]
          %v2214 = vmul.f32 %v2213, 0.0009765625
          %v2215 = vmul.f32 %v2212, %v2212
          %v2216 = vsub.f32 %v2214, %v2215
          %v2218 = vperm.slane %v2212, 0
          %2219 = vset.pattern.permute.xlu0 0
          %2220 = vperm.xlu0 %2219, %v2218
          %v2221 = vpop.permute.xlu0 %2220
          %v2223 = vsub.f32 %v2192, %v2221
          %v2224 = vsub.f32 %v2194, %v2221
          %v2225 = vsub.f32 %v2197, %v2221
          %v2226 = vsub.f32 %v2199, %v2221
          %v2227 = vsub.f32 %v2202, %v2221
          %v2228 = vsub.f32 %v2204, %v2221
          %v2229 = vsub.f32 %v2207, %v2221
          %v2230 = vsub.f32 %v2209, %v2221
          %v2231 = vadd.f32 %v2216, 1e-05
          %v2232 = vrsqrt.pop %v2231
          %v2233 = vmul.f32 %v2232, %v2231
          %v2234 = vmul.f32 %v2233, %v2232
          %v2235 = vmul.f32 0.5, %v2234
          %v2236 = vsub.f32 1.5, %v2235
          %v2237 = vmul.f32 %v2232, %v2236
          %vm2238 = vweird.f32 %v2231
          %vm2239 = vweird.f32 %v2232
          %vm2240 = vmor %vm2238, %vm2239
          %v2241 = vsel %vm2240, %v2232, %v2237
          %v2243 = vperm.slane %v2241, 0
          %2244 = vset.pattern.permute.xlu0 0
          %2245 = vperm.xlu0 %2244, %v2243
          %v2246 = vpop.permute.xlu0 %2245
          %v2248 = vmul.f32 %v2223, %v2246
          %v2249 = vmul.f32 %v2224, %v2246
          %v2250 = vmul.f32 %v2225, %v2246
          %v2251 = vmul.f32 %v2226, %v2246
          %v2252 = vmul.f32 %v2227, %v2246
          %v2253 = vmul.f32 %v2228, %v2246
          %v2254 = vmul.f32 %v2229, %v2246
          %v2255 = vmul.f32 %v2230, %v2246
          %v2256 = vld [vmem:[%s3] sm:$0xff]
          %v2257 = vld [vmem:[%s3 + $0x8] sm:$0xff]
          %v2258 = vld [vmem:[%s3 + $0x10] sm:$0xff]
          %v2259 = vld [vmem:[%s3 + $0x18] sm:$0xff]
          %v2260 = vld [vmem:[%s3 + $0x20] sm:$0xff]
          %v2261 = vld [vmem:[%s3 + $0x28] sm:$0xff]
          %v2262 = vld [vmem:[%s3 + $0x30] sm:$0xff]
          %v2263 = vld [vmem:[%s3 + $0x38] sm:$0xff]
          %2265 = vset.pattern.permute.xlu0 0
          %2266 = vperm.xlu0 %2265, %v2256
          %v2267 = vpop.permute.xlu0 %2266
          %2270 = vset.pattern.permute.xlu0 0
          %2271 = vperm.xlu0 %2270, %v2257
          %v2272 = vpop.permute.xlu0 %2271
          %2275 = vset.pattern.permute.xlu0 0
          %2276 = vperm.xlu0 %2275, %v2258
          %v2277 = vpop.permute.xlu0 %2276
          %2280 = vset.pattern.permute.xlu0 0
          %2281 = vperm.xlu0 %2280, %v2259
          %v2282 = vpop.permute.xlu0 %2281
          %2285 = vset.pattern.permute.xlu0 0
          %2286 = vperm.xlu0 %2285, %v2260
          %v2287 = vpop.permute.xlu0 %2286
          %2290 = vset.pattern.permute.xlu0 0
          %2291 = vperm.xlu0 %2290, %v2261
          %v2292 = vpop.permute.xlu0 %2291
          %2295 = vset.pattern.permute.xlu0 0
          %2296 = vperm.xlu0 %2295, %v2262
          %v2297 = vpop.permute.xlu0 %2296
          %2300 = vset.pattern.permute.xlu0 0
          %2301 = vperm.xlu0 %2300, %v2263
          %v2302 = vpop.permute.xlu0 %2301
          %v2304 = vmul.f32 %v2248, %v2267
          %v2305 = vmul.f32 %v2249, %v2272
          %v2306 = vmul.f32 %v2250, %v2277
          %v2307 = vmul.f32 %v2251, %v2282
          %v2308 = vmul.f32 %v2252, %v2287
          %v2309 = vmul.f32 %v2253, %v2292
          %v2310 = vmul.f32 %v2254, %v2297
          %v2311 = vmul.f32 %v2255, %v2302
          %v2312 = vld [vmem:[%s4] sm:$0xff]
          %v2313 = vld [vmem:[%s4 + $0x8] sm:$0xff]
          %v2314 = vld [vmem:[%s4 + $0x10] sm:$0xff]
          %v2315 = vld [vmem:[%s4 + $0x18] sm:$0xff]
          %v2316 = vld [vmem:[%s4 + $0x20] sm:$0xff]
          %v2317 = vld [vmem:[%s4 + $0x28] sm:$0xff]
          %v2318 = vld [vmem:[%s4 + $0x30] sm:$0xff]
          %v2319 = vld [vmem:[%s4 + $0x38] sm:$0xff]
          %2321 = vset.pattern.permute.xlu0 0
          %2322 = vperm.xlu0 %2321, %v2312
          %v2323 = vpop.permute.xlu0 %2322
          %2326 = vset.pattern.permute.xlu0 0
          %2327 = vperm.xlu0 %2326, %v2313
          %v2328 = vpop.permute.xlu0 %2327
          %2331 = vset.pattern.permute.xlu0 0
          %2332 = vperm.xlu0 %2331, %v2314
          %v2333 = vpop.permute.xlu0 %2332
          %2336 = vset.pattern.permute.xlu0 0
          %2337 = vperm.xlu0 %2336, %v2315
          %v2338 = vpop.permute.xlu0 %2337
          %2341 = vset.pattern.permute.xlu0 0
          %2342 = vperm.xlu0 %2341, %v2316
          %v2343 = vpop.permute.xlu0 %2342
          %2346 = vset.pattern.permute.xlu0 0
          %2347 = vperm.xlu0 %2346, %v2317
          %v2348 = vpop.permute.xlu0 %2347
          %2351 = vset.pattern.permute.xlu0 0
          %2352 = vperm.xlu0 %2351, %v2318
          %v2353 = vpop.permute.xlu0 %2352
          %2356 = vset.pattern.permute.xlu0 0
          %2357 = vperm.xlu0 %2356, %v2319
          %v2358 = vpop.permute.xlu0 %2357
          %v2360 = vadd.f32 %v2304, %v2323
          %v2361 = vadd.f32 %v2305, %v2328
          %v2362 = vadd.f32 %v2306, %v2333
          %v2363 = vadd.f32 %v2307, %v2338
          %v2364 = vadd.f32 %v2308, %v2343
          %v2365 = vadd.f32 %v2309, %v2348
          %v2366 = vadd.f32 %v2310, %v2353
          %v2367 = vadd.f32 %v2311, %v2358
          %v2368 = vmax.f32 %v2360, 0.0
          %v2369 = vmax.f32 %v2361, 0.0
          %v2370 = vmax.f32 %v2362, 0.0
          %v2371 = vmax.f32 %v2363, 0.0
          %v2372 = vmax.f32 %v2364, 0.0
          %v2373 = vmax.f32 %v2365, 0.0
          %v2374 = vmax.f32 %v2366, 0.0
          %v2375 = vmax.f32 %v2367, 0.0
          %v2376 = vpack.c.bf16 %v2369, %v2368
          %v2377 = vpack.c.bf16 %v2371, %v2370
          %v2378 = vpack.c.bf16 %v2373, %v2372
          %v2379 = vpack.c.bf16 %v2375, %v2374
          %v2380 = vld [vmem:[%s5] sm:$0xf]
          %v2381 = vld [vmem:[%s5 + $0x4] sm:$0xf]
          %v2382 = vld [vmem:[%s5 + $0x8] sm:$0xf]
          %v2383 = vld [vmem:[%s5 + $0xc] sm:$0xf]
          %v2384 = vld [vmem:[%s5 + $0x10] sm:$0xf]
          %v2385 = vld [vmem:[%s5 + $0x14] sm:$0xf]
          %v2386 = vld [vmem:[%s5 + $0x18] sm:$0xf]
          %v2387 = vld [vmem:[%s5 + $0x1c] sm:$0xf]
          %v2388 = vld [vmem:[%s5 + $0x20] sm:$0xf]
          %v2389 = vld [vmem:[%s5 + $0x24] sm:$0xf]
          %v2390 = vld [vmem:[%s5 + $0x28] sm:$0xf]
          %v2391 = vld [vmem:[%s5 + $0x2c] sm:$0xf]
          %v2392 = vld [vmem:[%s5 + $0x30] sm:$0xf]
          %v2393 = vld [vmem:[%s5 + $0x34] sm:$0xf]
          %v2394 = vld [vmem:[%s5 + $0x38] sm:$0xf]
          %v2395 = vld [vmem:[%s5 + $0x3c] sm:$0xf]
          %v2396 = vld [vmem:[%s6] sm:$0xff]
          %v2397 = vld [vmem:[%s6 + $0x8] sm:$0xff]
          %v2398 = vld [vmem:[%s6 + $0x10] sm:$0xff]
          %v2399 = vld [vmem:[%s6 + $0x18] sm:$0xff]
          %v2400 = vld [vmem:[%s6 + $0x20] sm:$0xff]
          %v2401 = vld [vmem:[%s6 + $0x28] sm:$0xff]
          %v2402 = vld [vmem:[%s6 + $0x30] sm:$0xff]
          %v2403 = vld [vmem:[%s6 + $0x38] sm:$0xff]
          %v2404 = vld [vmem:[%s6 + $0x40] sm:$0xff]
          %v2405 = vld [vmem:[%s6 + $0x48] sm:$0xff]
          %v2406 = vld [vmem:[%s6 + $0x50] sm:$0xff]
          %v2407 = vld [vmem:[%s6 + $0x58] sm:$0xff]
          %v2408 = vld [vmem:[%s6 + $0x60] sm:$0xff]
          %v2409 = vld [vmem:[%s6 + $0x68] sm:$0xff]
          %v2410 = vld [vmem:[%s6 + $0x70] sm:$0xff]
          %v2411 = vld [vmem:[%s6 + $0x78] sm:$0xff]
          %2413 = vset.pattern.permute.xlu0 0
          %2414 = vperm.xlu0 %2413, %v2396
          %v2415 = vpop.permute.xlu0 %2414
          %2418 = vset.pattern.permute.xlu0 0
          %2419 = vperm.xlu0 %2418, %v2397
          %v2420 = vpop.permute.xlu0 %2419
          %2423 = vset.pattern.permute.xlu0 0
          %2424 = vperm.xlu0 %2423, %v2398
          %v2425 = vpop.permute.xlu0 %2424
          %2428 = vset.pattern.permute.xlu0 0
          %2429 = vperm.xlu0 %2428, %v2399
          %v2430 = vpop.permute.xlu0 %2429
          %2433 = vset.pattern.permute.xlu0 0
          %2434 = vperm.xlu0 %2433, %v2400
          %v2435 = vpop.permute.xlu0 %2434
          %2438 = vset.pattern.permute.xlu0 0
          %2439 = vperm.xlu0 %2438, %v2401
          %v2440 = vpop.permute.xlu0 %2439
          %2443 = vset.pattern.permute.xlu0 0
          %2444 = vperm.xlu0 %2443, %v2402
          %v2445 = vpop.permute.xlu0 %2444
          %2448 = vset.pattern.permute.xlu0 0
          %2449 = vperm.xlu0 %2448, %v2403
          %v2450 = vpop.permute.xlu0 %2449
          %2453 = vset.pattern.permute.xlu0 0
          %2454 = vperm.xlu0 %2453, %v2404
          %v2455 = vpop.permute.xlu0 %2454
          %2458 = vset.pattern.permute.xlu0 0
          %2459 = vperm.xlu0 %2458, %v2405
          %v2460 = vpop.permute.xlu0 %2459
          %2463 = vset.pattern.permute.xlu0 0
          %2464 = vperm.xlu0 %2463, %v2406
          %v2465 = vpop.permute.xlu0 %2464
          %2468 = vset.pattern.permute.xlu0 0
          %2469 = vperm.xlu0 %2468, %v2407
          %v2470 = vpop.permute.xlu0 %2469
          %2473 = vset.pattern.permute.xlu0 0
          %2474 = vperm.xlu0 %2473, %v2408
          %v2475 = vpop.permute.xlu0 %2474
          %2478 = vset.pattern.permute.xlu0 0
          %2479 = vperm.xlu0 %2478, %v2409
          %v2480 = vpop.permute.xlu0 %2479
          %2483 = vset.pattern.permute.xlu0 0
          %2484 = vperm.xlu0 %2483, %v2410
          %v2485 = vpop.permute.xlu0 %2484
          %2488 = vset.pattern.permute.xlu0 0
          %2489 = vperm.xlu0 %2488, %v2411
          %v2490 = vpop.permute.xlu0 %2489
          %v2508 = vunpack.c.l.b16 %v2380
          %v2509 = vunpack.c.l.b16 %v2381
          %v2510 = vunpack.c.l.b16 %v2382
          %v2511 = vunpack.c.l.b16 %v2383
          %v2512 = vunpack.c.l.b16 %v2384
          %v2513 = vunpack.c.l.b16 %v2385
          %v2514 = vunpack.c.l.b16 %v2386
          %v2515 = vunpack.c.l.b16 %v2387
          %v2516 = vunpack.c.l.b16 %v2388
          %v2517 = vunpack.c.l.b16 %v2389
          %v2518 = vunpack.c.l.b16 %v2390
          %v2519 = vunpack.c.l.b16 %v2391
          %v2520 = vunpack.c.l.b16 %v2392
          %v2521 = vunpack.c.l.b16 %v2393
          %v2522 = vunpack.c.l.b16 %v2394
          %v2523 = vunpack.c.l.b16 %v2395
          %v2524 = vpack.c.b16 %v2509, %v2508
          %v2525 = vpack.c.b16 %v2511, %v2510
          %v2526 = vpack.c.b16 %v2513, %v2512
          %v2527 = vpack.c.b16 %v2515, %v2514
          %v2528 = vpack.c.b16 %v2517, %v2516
          %v2529 = vpack.c.b16 %v2519, %v2518
          %v2530 = vpack.c.b16 %v2521, %v2520
          %v2531 = vpack.c.b16 %v2523, %v2522
          %vm2532 = vcmask 523264
          %v2534 = vsel %vm2532, %v2524, 0
          %v2537 = vsel %vm2532, %v2525, 0
          %v2540 = vsel %vm2532, %v2526, 0
          %v2543 = vsel %vm2532, %v2527, 0
          %v2546 = vsel %vm2532, %v2528, 0
          %v2549 = vsel %vm2532, %v2529, 0
          %v2552 = vsel %vm2532, %v2530, 0
          %v2555 = vsel %vm2532, %v2531, 0
          %2557 = vmatpush.bf16.msra.mxu0 0
          %2558 = vmatpush.bf16.msra.mxu0 0
          %2559 = vmatpush.bf16.msra.mxu0 0
          %2560 = vmatpush.bf16.msra.mxu0 0
          %2561 = vmatpush.bf16.msra.mxu0 %v2379
          %2562 = vmatpush.bf16.msra.mxu0 %v2378
          %2563 = vmatpush.bf16.msra.mxu0 %v2377
          %2564 = vmatpush.bf16.msra.mxu0 %v2376
          %2565 = vmatmul.bf16.gmra.mxu0 %v2534
          %v2566 = vpop.f32.mrf.mxu0
          %v2567 = vadd.f32 %v2415, %v2566
          %v2568 = vpop.f32.mrf.mxu0
          %v2569 = vadd.f32 %v2420, %v2568
          %2570 = vmatmul.bf16.gmra.mxu0 %v2537
          %v2571 = vpop.f32.mrf.mxu0
          %v2572 = vadd.f32 %v2425, %v2571
          %v2573 = vpop.f32.mrf.mxu0
          %v2574 = vadd.f32 %v2430, %v2573
          %2575 = vmatmul.bf16.gmra.mxu0 %v2540
          %v2576 = vpop.f32.mrf.mxu0
          %v2577 = vadd.f32 %v2435, %v2576
          %v2578 = vpop.f32.mrf.mxu0
          %v2579 = vadd.f32 %v2440, %v2578
          %2580 = vmatmul.bf16.gmra.mxu0 %v2543
          %v2581 = vpop.f32.mrf.mxu0
          %v2582 = vadd.f32 %v2445, %v2581
          %v2583 = vpop.f32.mrf.mxu0
          %v2584 = vadd.f32 %v2450, %v2583
          %2585 = vmatmul.bf16.gmra.mxu0 %v2546
          %v2586 = vpop.f32.mrf.mxu0
          %v2587 = vadd.f32 %v2455, %v2586
          %v2588 = vpop.f32.mrf.mxu0
          %v2589 = vadd.f32 %v2460, %v2588
          %2590 = vmatmul.bf16.gmra.mxu0 %v2549
          %v2591 = vpop.f32.mrf.mxu0
          %v2592 = vadd.f32 %v2465, %v2591
          %v2593 = vpop.f32.mrf.mxu0
          %v2594 = vadd.f32 %v2470, %v2593
          %2595 = vmatmul.bf16.gmra.mxu0 %v2552
          %v2596 = vpop.f32.mrf.mxu0
          %v2597 = vadd.f32 %v2475, %v2596
          %v2598 = vpop.f32.mrf.mxu0
          %v2599 = vadd.f32 %v2480, %v2598
          %2600 = vmatmul.bf16.gmra.mxu0 %v2555
          %v2601 = vpop.f32.mrf.mxu0
          %v2602 = vadd.f32 %v2485, %v2601
          %v2603 = vpop.f32.mrf.mxu0
          %v2604 = vadd.f32 %v2490, %v2603
          %2605 = vdwg.mxu0
          %v2606 = vld [vmem:[#allocation4] sm:$0x1]
          %v2607 = vmul.f32 %v2606, 0.00048828125
          %v2608 = vld [vmem:[#allocation5] sm:$0x1]
          %v2609 = vmul.f32 %v2608, 0.00048828125
          %v2610 = vmul.f32 %v2607, %v2607
          %v2611 = vsub.f32 %v2609, %v2610
          %v2613 = vperm.slane %v2607, 0
          %2614 = vset.pattern.permute.xlu0 0
          %2615 = vperm.xlu0 %2614, %v2613
          %v2616 = vpop.permute.xlu0 %2615
          %v2618 = vsub.f32 %v2567, %v2616
          %v2619 = vsub.f32 %v2569, %v2616
          %v2620 = vsub.f32 %v2572, %v2616
          %v2621 = vsub.f32 %v2574, %v2616
          %v2622 = vsub.f32 %v2577, %v2616
          %v2623 = vsub.f32 %v2579, %v2616
          %v2624 = vsub.f32 %v2582, %v2616
          %v2625 = vsub.f32 %v2584, %v2616
          %v2626 = vsub.f32 %v2587, %v2616
          %v2627 = vsub.f32 %v2589, %v2616
          %v2628 = vsub.f32 %v2592, %v2616
          %v2629 = vsub.f32 %v2594, %v2616
          %v2630 = vsub.f32 %v2597, %v2616
          %v2631 = vsub.f32 %v2599, %v2616
          %v2632 = vsub.f32 %v2602, %v2616
          %v2633 = vsub.f32 %v2604, %v2616
          %v2634 = vadd.f32 %v2611, 1e-05
          %v2635 = vrsqrt.pop %v2634
          %v2636 = vmul.f32 %v2635, %v2634
          %v2637 = vmul.f32 %v2636, %v2635
          %v2638 = vmul.f32 0.5, %v2637
          %v2639 = vsub.f32 1.5, %v2638
          %v2640 = vmul.f32 %v2635, %v2639
          %vm2641 = vweird.f32 %v2634
          %vm2642 = vweird.f32 %v2635
          %vm2643 = vmor %vm2641, %vm2642
          %v2644 = vsel %vm2643, %v2635, %v2640
          %v2646 = vperm.slane %v2644, 0
          %2647 = vset.pattern.permute.xlu0 0
          %2648 = vperm.xlu0 %2647, %v2646
          %v2649 = vpop.permute.xlu0 %2648
          %v2651 = vmul.f32 %v2618, %v2649
          %v2652 = vmul.f32 %v2619, %v2649
          %v2653 = vmul.f32 %v2620, %v2649
          %v2654 = vmul.f32 %v2621, %v2649
          %v2655 = vmul.f32 %v2622, %v2649
          %v2656 = vmul.f32 %v2623, %v2649
          %v2657 = vmul.f32 %v2624, %v2649
          %v2658 = vmul.f32 %v2625, %v2649
          %v2659 = vmul.f32 %v2626, %v2649
          %v2660 = vmul.f32 %v2627, %v2649
          %v2661 = vmul.f32 %v2628, %v2649
          %v2662 = vmul.f32 %v2629, %v2649
          %v2663 = vmul.f32 %v2630, %v2649
          %v2664 = vmul.f32 %v2631, %v2649
          %v2665 = vmul.f32 %v2632, %v2649
          %v2666 = vmul.f32 %v2633, %v2649
          %v2667 = vld [vmem:[%s7] sm:$0xff]
          %v2668 = vld [vmem:[%s7 + $0x8] sm:$0xff]
          %v2669 = vld [vmem:[%s7 + $0x10] sm:$0xff]
          %v2670 = vld [vmem:[%s7 + $0x18] sm:$0xff]
          %v2671 = vld [vmem:[%s7 + $0x20] sm:$0xff]
          %v2672 = vld [vmem:[%s7 + $0x28] sm:$0xff]
          %v2673 = vld [vmem:[%s7 + $0x30] sm:$0xff]
          %v2674 = vld [vmem:[%s7 + $0x38] sm:$0xff]
          %v2675 = vld [vmem:[%s7 + $0x40] sm:$0xff]
          %v2676 = vld [vmem:[%s7 + $0x48] sm:$0xff]
          %v2677 = vld [vmem:[%s7 + $0x50] sm:$0xff]
          %v2678 = vld [vmem:[%s7 + $0x58] sm:$0xff]
          %v2679 = vld [vmem:[%s7 + $0x60] sm:$0xff]
          %v2680 = vld [vmem:[%s7 + $0x68] sm:$0xff]
          %v2681 = vld [vmem:[%s7 + $0x70] sm:$0xff]
          %v2682 = vld [vmem:[%s7 + $0x78] sm:$0xff]
          %2684 = vset.pattern.permute.xlu0 0
          %2685 = vperm.xlu0 %2684, %v2667
          %v2686 = vpop.permute.xlu0 %2685
          %2689 = vset.pattern.permute.xlu0 0
          %2690 = vperm.xlu0 %2689, %v2668
          %v2691 = vpop.permute.xlu0 %2690
          %2694 = vset.pattern.permute.xlu0 0
          %2695 = vperm.xlu0 %2694, %v2669
          %v2696 = vpop.permute.xlu0 %2695
          %2699 = vset.pattern.permute.xlu0 0
          %2700 = vperm.xlu0 %2699, %v2670
          %v2701 = vpop.permute.xlu0 %2700
          %2704 = vset.pattern.permute.xlu0 0
          %2705 = vperm.xlu0 %2704, %v2671
          %v2706 = vpop.permute.xlu0 %2705
          %2709 = vset.pattern.permute.xlu0 0
          %2710 = vperm.xlu0 %2709, %v2672
          %v2711 = vpop.permute.xlu0 %2710
          %2714 = vset.pattern.permute.xlu0 0
          %2715 = vperm.xlu0 %2714, %v2673
          %v2716 = vpop.permute.xlu0 %2715
          %2719 = vset.pattern.permute.xlu0 0
          %2720 = vperm.xlu0 %2719, %v2674
          %v2721 = vpop.permute.xlu0 %2720
          %2724 = vset.pattern.permute.xlu0 0
          %2725 = vperm.xlu0 %2724, %v2675
          %v2726 = vpop.permute.xlu0 %2725
          %2729 = vset.pattern.permute.xlu0 0
          %2730 = vperm.xlu0 %2729, %v2676
          %v2731 = vpop.permute.xlu0 %2730
          %2734 = vset.pattern.permute.xlu0 0
          %2735 = vperm.xlu0 %2734, %v2677
          %v2736 = vpop.permute.xlu0 %2735
          %2739 = vset.pattern.permute.xlu0 0
          %2740 = vperm.xlu0 %2739, %v2678
          %v2741 = vpop.permute.xlu0 %2740
          %2744 = vset.pattern.permute.xlu0 0
          %2745 = vperm.xlu0 %2744, %v2679
          %v2746 = vpop.permute.xlu0 %2745
          %2749 = vset.pattern.permute.xlu0 0
          %2750 = vperm.xlu0 %2749, %v2680
          %v2751 = vpop.permute.xlu0 %2750
          %2754 = vset.pattern.permute.xlu0 0
          %2755 = vperm.xlu0 %2754, %v2681
          %v2756 = vpop.permute.xlu0 %2755
          %2759 = vset.pattern.permute.xlu0 0
          %2760 = vperm.xlu0 %2759, %v2682
          %v2761 = vpop.permute.xlu0 %2760
          %v2763 = vmul.f32 %v2651, %v2686
          %v2764 = vmul.f32 %v2652, %v2691
          %v2765 = vmul.f32 %v2653, %v2696
          %v2766 = vmul.f32 %v2654, %v2701
          %v2767 = vmul.f32 %v2655, %v2706
          %v2768 = vmul.f32 %v2656, %v2711
          %v2769 = vmul.f32 %v2657, %v2716
          %v2770 = vmul.f32 %v2658, %v2721
          %v2771 = vmul.f32 %v2659, %v2726
          %v2772 = vmul.f32 %v2660, %v2731
          %v2773 = vmul.f32 %v2661, %v2736
          %v2774 = vmul.f32 %v2662, %v2741
          %v2775 = vmul.f32 %v2663, %v2746
          %v2776 = vmul.f32 %v2664, %v2751
          %v2777 = vmul.f32 %v2665, %v2756
          %v2778 = vmul.f32 %v2666, %v2761
          %v2779 = vld [vmem:[%s8] sm:$0xff]
          %v2780 = vld [vmem:[%s8 + $0x8] sm:$0xff]
          %v2781 = vld [vmem:[%s8 + $0x10] sm:$0xff]
          %v2782 = vld [vmem:[%s8 + $0x18] sm:$0xff]
          %v2783 = vld [vmem:[%s8 + $0x20] sm:$0xff]
          %v2784 = vld [vmem:[%s8 + $0x28] sm:$0xff]
          %v2785 = vld [vmem:[%s8 + $0x30] sm:$0xff]
          %v2786 = vld [vmem:[%s8 + $0x38] sm:$0xff]
          %v2787 = vld [vmem:[%s8 + $0x40] sm:$0xff]
          %v2788 = vld [vmem:[%s8 + $0x48] sm:$0xff]
          %v2789 = vld [vmem:[%s8 + $0x50] sm:$0xff]
          %v2790 = vld [vmem:[%s8 + $0x58] sm:$0xff]
          %v2791 = vld [vmem:[%s8 + $0x60] sm:$0xff]
          %v2792 = vld [vmem:[%s8 + $0x68] sm:$0xff]
          %v2793 = vld [vmem:[%s8 + $0x70] sm:$0xff]
          %v2794 = vld [vmem:[%s8 + $0x78] sm:$0xff]
          %2796 = vset.pattern.permute.xlu0 0
          %2797 = vperm.xlu0 %2796, %v2779
          %v2798 = vpop.permute.xlu0 %2797
          %2801 = vset.pattern.permute.xlu0 0
          %2802 = vperm.xlu0 %2801, %v2780
          %v2803 = vpop.permute.xlu0 %2802
          %2806 = vset.pattern.permute.xlu0 0
          %2807 = vperm.xlu0 %2806, %v2781
          %v2808 = vpop.permute.xlu0 %2807
          %2811 = vset.pattern.permute.xlu0 0
          %2812 = vperm.xlu0 %2811, %v2782
          %v2813 = vpop.permute.xlu0 %2812
          %2816 = vset.pattern.permute.xlu0 0
          %2817 = vperm.xlu0 %2816, %v2783
          %v2818 = vpop.permute.xlu0 %2817
          %2821 = vset.pattern.permute.xlu0 0
          %2822 = vperm.xlu0 %2821, %v2784
          %v2823 = vpop.permute.xlu0 %2822
          %2826 = vset.pattern.permute.xlu0 0
          %2827 = vperm.xlu0 %2826, %v2785
          %v2828 = vpop.permute.xlu0 %2827
          %2831 = vset.pattern.permute.xlu0 0
          %2832 = vperm.xlu0 %2831, %v2786
          %v2833 = vpop.permute.xlu0 %2832
          %2836 = vset.pattern.permute.xlu0 0
          %2837 = vperm.xlu0 %2836, %v2787
          %v2838 = vpop.permute.xlu0 %2837
          %2841 = vset.pattern.permute.xlu0 0
          %2842 = vperm.xlu0 %2841, %v2788
          %v2843 = vpop.permute.xlu0 %2842
          %2846 = vset.pattern.permute.xlu0 0
          %2847 = vperm.xlu0 %2846, %v2789
          %v2848 = vpop.permute.xlu0 %2847
          %2851 = vset.pattern.permute.xlu0 0
          %2852 = vperm.xlu0 %2851, %v2790
          %v2853 = vpop.permute.xlu0 %2852
          %2856 = vset.pattern.permute.xlu0 0
          %2857 = vperm.xlu0 %2856, %v2791
          %v2858 = vpop.permute.xlu0 %2857
          %2861 = vset.pattern.permute.xlu0 0
          %2862 = vperm.xlu0 %2861, %v2792
          %v2863 = vpop.permute.xlu0 %2862
          %2866 = vset.pattern.permute.xlu0 0
          %2867 = vperm.xlu0 %2866, %v2793
          %v2868 = vpop.permute.xlu0 %2867
          %2871 = vset.pattern.permute.xlu0 0
          %2872 = vperm.xlu0 %2871, %v2794
          %v2873 = vpop.permute.xlu0 %2872
          %v2875 = vadd.f32 %v2763, %v2798
          %v2876 = vadd.f32 %v2764, %v2803
          %v2877 = vadd.f32 %v2765, %v2808
          %v2878 = vadd.f32 %v2766, %v2813
          %v2879 = vadd.f32 %v2767, %v2818
          %v2880 = vadd.f32 %v2768, %v2823
          %v2881 = vadd.f32 %v2769, %v2828
          %v2882 = vadd.f32 %v2770, %v2833
          %v2883 = vadd.f32 %v2771, %v2838
          %v2884 = vadd.f32 %v2772, %v2843
          %v2885 = vadd.f32 %v2773, %v2848
          %v2886 = vadd.f32 %v2774, %v2853
          %v2887 = vadd.f32 %v2775, %v2858
          %v2888 = vadd.f32 %v2776, %v2863
          %v2889 = vadd.f32 %v2777, %v2868
          %v2890 = vadd.f32 %v2778, %v2873
          %v2891 = vmax.f32 %v2875, 0.0
          %v2892 = vmax.f32 %v2876, 0.0
          %v2893 = vmax.f32 %v2877, 0.0
          %v2894 = vmax.f32 %v2878, 0.0
          %v2895 = vmax.f32 %v2879, 0.0
          %v2896 = vmax.f32 %v2880, 0.0
          %v2897 = vmax.f32 %v2881, 0.0
          %v2898 = vmax.f32 %v2882, 0.0
          %v2899 = vmax.f32 %v2883, 0.0
          %v2900 = vmax.f32 %v2884, 0.0
          %v2901 = vmax.f32 %v2885, 0.0
          %v2902 = vmax.f32 %v2886, 0.0
          %v2903 = vmax.f32 %v2887, 0.0
          %v2904 = vmax.f32 %v2888, 0.0
          %v2905 = vmax.f32 %v2889, 0.0
          %v2906 = vmax.f32 %v2890, 0.0
          %v2907 = vpack.c.bf16 %v2892, %v2891
          %v2908 = vpack.c.bf16 %v2894, %v2893
          %v2909 = vpack.c.bf16 %v2896, %v2895
          %v2910 = vpack.c.bf16 %v2898, %v2897
          %v2911 = vpack.c.bf16 %v2900, %v2899
          %v2912 = vpack.c.bf16 %v2902, %v2901
          %v2913 = vpack.c.bf16 %v2904, %v2903
          %v2914 = vpack.c.bf16 %v2906, %v2905
          %v2915 = vld [vmem:[%s9] sm:$0xf]
          %v2916 = vld [vmem:[%s9 + $0x4] sm:$0xf]
          %v2917 = vld [vmem:[%s9 + $0x8] sm:$0xf]
          %v2918 = vld [vmem:[%s9 + $0xc] sm:$0xf]
          %v2919 = vld [vmem:[%s9 + $0x10] sm:$0xf]
          %v2920 = vld [vmem:[%s9 + $0x14] sm:$0xf]
          %v2921 = vld [vmem:[%s9 + $0x18] sm:$0xf]
          %v2922 = vld [vmem:[%s9 + $0x1c] sm:$0xf]
          %v2923 = vld [vmem:[%s9 + $0x20] sm:$0xf]
          %v2924 = vld [vmem:[%s9 + $0x24] sm:$0xf]
          %v2925 = vld [vmem:[%s9 + $0x28] sm:$0xf]
          %v2926 = vld [vmem:[%s9 + $0x2c] sm:$0xf]
          %v2927 = vld [vmem:[%s9 + $0x30] sm:$0xf]
          %v2928 = vld [vmem:[%s9 + $0x34] sm:$0xf]
          %v2929 = vld [vmem:[%s9 + $0x38] sm:$0xf]
          %v2930 = vld [vmem:[%s9 + $0x3c] sm:$0xf]
          %v2931 = vld [vmem:[%s10] sm:$0xff]
          %v2932 = vld [vmem:[%s10 + $0x8] sm:$0xff]
          %v2933 = vld [vmem:[%s10 + $0x10] sm:$0xff]
          %v2934 = vld [vmem:[%s10 + $0x18] sm:$0xff]
          %v2935 = vld [vmem:[%s10 + $0x20] sm:$0xff]
          %v2936 = vld [vmem:[%s10 + $0x28] sm:$0xff]
          %v2937 = vld [vmem:[%s10 + $0x30] sm:$0xff]
          %v2938 = vld [vmem:[%s10 + $0x38] sm:$0xff]
          %v2939 = vld [vmem:[%s10 + $0x40] sm:$0xff]
          %v2940 = vld [vmem:[%s10 + $0x48] sm:$0xff]
          %v2941 = vld [vmem:[%s10 + $0x50] sm:$0xff]
          %v2942 = vld [vmem:[%s10 + $0x58] sm:$0xff]
          %v2943 = vld [vmem:[%s10 + $0x60] sm:$0xff]
          %v2944 = vld [vmem:[%s10 + $0x68] sm:$0xff]
          %v2945 = vld [vmem:[%s10 + $0x70] sm:$0xff]
          %v2946 = vld [vmem:[%s10 + $0x78] sm:$0xff]
          %2948 = vset.pattern.permute.xlu0 0
          %2949 = vperm.xlu0 %2948, %v2931
          %v2950 = vpop.permute.xlu0 %2949
          %2953 = vset.pattern.permute.xlu0 0
          %2954 = vperm.xlu0 %2953, %v2932
          %v2955 = vpop.permute.xlu0 %2954
          %2958 = vset.pattern.permute.xlu0 0
          %2959 = vperm.xlu0 %2958, %v2933
          %v2960 = vpop.permute.xlu0 %2959
          %2963 = vset.pattern.permute.xlu0 0
          %2964 = vperm.xlu0 %2963, %v2934
          %v2965 = vpop.permute.xlu0 %2964
          %2968 = vset.pattern.permute.xlu0 0
          %2969 = vperm.xlu0 %2968, %v2935
          %v2970 = vpop.permute.xlu0 %2969
          %2973 = vset.pattern.permute.xlu0 0
          %2974 = vperm.xlu0 %2973, %v2936
          %v2975 = vpop.permute.xlu0 %2974
          %2978 = vset.pattern.permute.xlu0 0
          %2979 = vperm.xlu0 %2978, %v2937
          %v2980 = vpop.permute.xlu0 %2979
          %2983 = vset.pattern.permute.xlu0 0
          %2984 = vperm.xlu0 %2983, %v2938
          %v2985 = vpop.permute.xlu0 %2984
          %2988 = vset.pattern.permute.xlu0 0
          %2989 = vperm.xlu0 %2988, %v2939
          %v2990 = vpop.permute.xlu0 %2989
          %2993 = vset.pattern.permute.xlu0 0
          %2994 = vperm.xlu0 %2993, %v2940
          %v2995 = vpop.permute.xlu0 %2994
          %2998 = vset.pattern.permute.xlu0 0
          %2999 = vperm.xlu0 %2998, %v2941
          %v3000 = vpop.permute.xlu0 %2999
          %3003 = vset.pattern.permute.xlu0 0
          %3004 = vperm.xlu0 %3003, %v2942
          %v3005 = vpop.permute.xlu0 %3004
          %3008 = vset.pattern.permute.xlu0 0
          %3009 = vperm.xlu0 %3008, %v2943
          %v3010 = vpop.permute.xlu0 %3009
          %3013 = vset.pattern.permute.xlu0 0
          %3014 = vperm.xlu0 %3013, %v2944
          %v3015 = vpop.permute.xlu0 %3014
          %3018 = vset.pattern.permute.xlu0 0
          %3019 = vperm.xlu0 %3018, %v2945
          %v3020 = vpop.permute.xlu0 %3019
          %3023 = vset.pattern.permute.xlu0 0
          %3024 = vperm.xlu0 %3023, %v2946
          %v3025 = vpop.permute.xlu0 %3024
          %v3043 = vunpack.c.l.b16 %v2915
          %v3044 = vunpack.c.l.b16 %v2916
          %v3045 = vunpack.c.l.b16 %v2917
          %v3046 = vunpack.c.l.b16 %v2918
          %v3047 = vunpack.c.l.b16 %v2919
          %v3048 = vunpack.c.l.b16 %v2920
          %v3049 = vunpack.c.l.b16 %v2921
          %v3050 = vunpack.c.l.b16 %v2922
          %v3051 = vunpack.c.l.b16 %v2923
          %v3052 = vunpack.c.l.b16 %v2924
          %v3053 = vunpack.c.l.b16 %v2925
          %v3054 = vunpack.c.l.b16 %v2926
          %v3055 = vunpack.c.l.b16 %v2927
          %v3056 = vunpack.c.l.b16 %v2928
          %v3057 = vunpack.c.l.b16 %v2929
          %v3058 = vunpack.c.l.b16 %v2930
          %v3059 = vpack.c.b16 %v3044, %v3043
          %v3060 = vpack.c.b16 %v3046, %v3045
          %v3061 = vpack.c.b16 %v3048, %v3047
          %v3062 = vpack.c.b16 %v3050, %v3049
          %v3063 = vpack.c.b16 %v3052, %v3051
          %v3064 = vpack.c.b16 %v3054, %v3053
          %v3065 = vpack.c.b16 %v3056, %v3055
          %v3066 = vpack.c.b16 %v3058, %v3057
          %3075 = vmatpush.bf16.msra.mxu0 %v2914
          %3076 = vmatpush.bf16.msra.mxu0 %v2913
          %3077 = vmatpush.bf16.msra.mxu0 %v2912
          %3078 = vmatpush.bf16.msra.mxu0 %v2911
          %3079 = vmatpush.bf16.msra.mxu0 %v2910
          %3080 = vmatpush.bf16.msra.mxu0 %v2909
          %3081 = vmatpush.bf16.msra.mxu0 %v2908
          %3082 = vmatpush.bf16.msra.mxu0 %v2907
          %3083 = vmatmul.bf16.gmra.mxu0 %v3059
          %v3084 = vpop.f32.mrf.mxu0
          %v3085 = vadd.f32 %v2950, %v3084
          %v3086 = vpop.f32.mrf.mxu0
          %v3087 = vadd.f32 %v2955, %v3086
          %3088 = vmatmul.bf16.gmra.mxu0 %v3060
          %v3089 = vpop.f32.mrf.mxu0
          %v3090 = vadd.f32 %v2960, %v3089
          %v3091 = vpop.f32.mrf.mxu0
          %v3092 = vadd.f32 %v2965, %v3091
          %3093 = vmatmul.bf16.gmra.mxu0 %v3061
          %v3094 = vpop.f32.mrf.mxu0
          %v3095 = vadd.f32 %v2970, %v3094
          %v3096 = vpop.f32.mrf.mxu0
          %v3097 = vadd.f32 %v2975, %v3096
          %3098 = vmatmul.bf16.gmra.mxu0 %v3062
          %v3099 = vpop.f32.mrf.mxu0
          %v3100 = vadd.f32 %v2980, %v3099
          %v3101 = vpop.f32.mrf.mxu0
          %v3102 = vadd.f32 %v2985, %v3101
          %3103 = vmatmul.bf16.gmra.mxu0 %v3063
          %v3104 = vpop.f32.mrf.mxu0
          %v3105 = vadd.f32 %v2990, %v3104
          %v3106 = vpop.f32.mrf.mxu0
          %v3107 = vadd.f32 %v2995, %v3106
          %3108 = vmatmul.bf16.gmra.mxu0 %v3064
          %v3109 = vpop.f32.mrf.mxu0
          %v3110 = vadd.f32 %v3000, %v3109
          %v3111 = vpop.f32.mrf.mxu0
          %v3112 = vadd.f32 %v3005, %v3111
          %3113 = vmatmul.bf16.gmra.mxu0 %v3065
          %v3114 = vpop.f32.mrf.mxu0
          %v3115 = vadd.f32 %v3010, %v3114
          %v3116 = vpop.f32.mrf.mxu0
          %v3117 = vadd.f32 %v3015, %v3116
          %3118 = vmatmul.bf16.gmra.mxu0 %v3066
          %v3119 = vpop.f32.mrf.mxu0
          %v3120 = vadd.f32 %v3020, %v3119
          %v3121 = vpop.f32.mrf.mxu0
          %v3122 = vadd.f32 %v3025, %v3121
          %3123 = vdwg.mxu0
          %v3124 = vld [vmem:[#allocation6] sm:$0x1]
          %vm3125 = vcmask 130048
          %v3126 = vsel %vm3125, %v3085, -inf
          %3127 = vmax.xlane.f32.xlu0 %v3126
          %v3128 = vpop.xlane.xlu0 %3127
          %v3129 = vsel %vm3125, %v3087, -inf
          %3130 = vmax.xlane.f32.xlu0 %v3129
          %v3131 = vpop.xlane.xlu0 %3130
          %v3132 = vsel %vm3125, %v3090, -inf
          %3133 = vmax.xlane.f32.xlu0 %v3132
          %v3134 = vpop.xlane.xlu0 %3133
          %v3135 = vsel %vm3125, %v3092, -inf
          %3136 = vmax.xlane.f32.xlu0 %v3135
          %v3137 = vpop.xlane.xlu0 %3136
          %v3138 = vsel %vm3125, %v3095, -inf
          %3139 = vmax.xlane.f32.xlu0 %v3138
          %v3140 = vpop.xlane.xlu0 %3139
          %v3141 = vsel %vm3125, %v3097, -inf
          %3142 = vmax.xlane.f32.xlu0 %v3141
          %v3143 = vpop.xlane.xlu0 %3142
          %v3144 = vsel %vm3125, %v3100, -inf
          %3145 = vmax.xlane.f32.xlu0 %v3144
          %v3146 = vpop.xlane.xlu0 %3145
          %v3147 = vsel %vm3125, %v3102, -inf
          %3148 = vmax.xlane.f32.xlu0 %v3147
          %v3149 = vpop.xlane.xlu0 %3148
          %v3150 = vsel %vm3125, %v3105, -inf
          %3151 = vmax.xlane.f32.xlu0 %v3150
          %v3152 = vpop.xlane.xlu0 %3151
          %v3153 = vsel %vm3125, %v3107, -inf
          %3154 = vmax.xlane.f32.xlu0 %v3153
          %v3155 = vpop.xlane.xlu0 %3154
          %v3156 = vsel %vm3125, %v3110, -inf
          %3157 = vmax.xlane.f32.xlu0 %v3156
          %v3158 = vpop.xlane.xlu0 %3157
          %v3159 = vsel %vm3125, %v3112, -inf
          %3160 = vmax.xlane.f32.xlu0 %v3159
          %v3161 = vpop.xlane.xlu0 %3160
          %v3162 = vsel %vm3125, %v3115, -inf
          %3163 = vmax.xlane.f32.xlu0 %v3162
          %v3164 = vpop.xlane.xlu0 %3163
          %v3165 = vsel %vm3125, %v3117, -inf
          %3166 = vmax.xlane.f32.xlu0 %v3165
          %v3167 = vpop.xlane.xlu0 %3166
          %v3168 = vsel %vm3125, %v3120, -inf
          %3169 = vmax.xlane.f32.xlu0 %v3168
          %v3170 = vpop.xlane.xlu0 %3169
          %v3171 = vsel %vm3125, %v3122, -inf
          %3172 = vmax.xlane.f32.xlu0 %v3171
          %v3173 = vpop.xlane.xlu0 %3172
          %v3190 = vperm.slane %v3128, 0
          %v3191 = vperm.slane %v3128, 1
          %v3192 = vperm.slane %v3128, 2
          %v3193 = vperm.slane %v3128, 3
          %v3194 = vperm.slane %v3128, 4
          %v3195 = vperm.slane %v3128, 5
          %v3196 = vperm.slane %v3128, 6
          %v3197 = vperm.slane %v3128, 7
          %v3198 = vperm.slane %v3131, 0
          %v3199 = vperm.slane %v3131, 1
          %v3200 = vperm.slane %v3131, 2
          %v3201 = vperm.slane %v3131, 3
          %v3202 = vperm.slane %v3131, 4
          %v3203 = vperm.slane %v3131, 5
          %v3204 = vperm.slane %v3131, 6
          %v3205 = vperm.slane %v3131, 7
          %v3206 = vperm.slane %v3134, 0
          %v3207 = vperm.slane %v3134, 1
          %v3208 = vperm.slane %v3134, 2
          %v3209 = vperm.slane %v3134, 3
          %v3210 = vperm.slane %v3134, 4
          %v3211 = vperm.slane %v3134, 5
          %v3212 = vperm.slane %v3134, 6
          %v3213 = vperm.slane %v3134, 7
          %v3214 = vperm.slane %v3137, 0
          %v3215 = vperm.slane %v3137, 1
          %v3216 = vperm.slane %v3137, 2
          %v3217 = vperm.slane %v3137, 3
          %v3218 = vperm.slane %v3137, 4
          %v3219 = vperm.slane %v3137, 5
          %v3220 = vperm.slane %v3137, 6
          %v3221 = vperm.slane %v3137, 7
          %v3222 = vperm.slane %v3140, 0
          %v3223 = vperm.slane %v3140, 1
          %v3224 = vperm.slane %v3140, 2
          %v3225 = vperm.slane %v3140, 3
          %v3226 = vperm.slane %v3140, 4
          %v3227 = vperm.slane %v3140, 5
          %v3228 = vperm.slane %v3140, 6
          %v3229 = vperm.slane %v3140, 7
          %v3230 = vperm.slane %v3143, 0
          %v3231 = vperm.slane %v3143, 1
          %v3232 = vperm.slane %v3143, 2
          %v3233 = vperm.slane %v3143, 3
          %v3234 = vperm.slane %v3143, 4
          %v3235 = vperm.slane %v3143, 5
          %v3236 = vperm.slane %v3143, 6
          %v3237 = vperm.slane %v3143, 7
          %v3238 = vperm.slane %v3146, 0
          %v3239 = vperm.slane %v3146, 1
          %v3240 = vperm.slane %v3146, 2
          %v3241 = vperm.slane %v3146, 3
          %v3242 = vperm.slane %v3146, 4
          %v3243 = vperm.slane %v3146, 5
          %v3244 = vperm.slane %v3146, 6
          %v3245 = vperm.slane %v3146, 7
          %v3246 = vperm.slane %v3149, 0
          %v3247 = vperm.slane %v3149, 1
          %v3248 = vperm.slane %v3149, 2
          %v3249 = vperm.slane %v3149, 3
          %v3250 = vperm.slane %v3149, 4
          %v3251 = vperm.slane %v3149, 5
          %v3252 = vperm.slane %v3149, 6
          %v3253 = vperm.slane %v3149, 7
          %v3254 = vperm.slane %v3152, 0
          %v3255 = vperm.slane %v3152, 1
          %v3256 = vperm.slane %v3152, 2
          %v3257 = vperm.slane %v3152, 3
          %v3258 = vperm.slane %v3152, 4
          %v3259 = vperm.slane %v3152, 5
          %v3260 = vperm.slane %v3152, 6
          %v3261 = vperm.slane %v3152, 7
          %v3262 = vperm.slane %v3155, 0
          %v3263 = vperm.slane %v3155, 1
          %v3264 = vperm.slane %v3155, 2
          %v3265 = vperm.slane %v3155, 3
          %v3266 = vperm.slane %v3155, 4
          %v3267 = vperm.slane %v3155, 5
          %v3268 = vperm.slane %v3155, 6
          %v3269 = vperm.slane %v3155, 7
          %v3270 = vperm.slane %v3158, 0
          %v3271 = vperm.slane %v3158, 1
          %v3272 = vperm.slane %v3158, 2
          %v3273 = vperm.slane %v3158, 3
          %v3274 = vperm.slane %v3158, 4
          %v3275 = vperm.slane %v3158, 5
          %v3276 = vperm.slane %v3158, 6
          %v3277 = vperm.slane %v3158, 7
          %v3278 = vperm.slane %v3161, 0
          %v3279 = vperm.slane %v3161, 1
          %v3280 = vperm.slane %v3161, 2
          %v3281 = vperm.slane %v3161, 3
          %v3282 = vperm.slane %v3161, 4
          %v3283 = vperm.slane %v3161, 5
          %v3284 = vperm.slane %v3161, 6
          %v3285 = vperm.slane %v3161, 7
          %v3286 = vperm.slane %v3164, 0
          %v3287 = vperm.slane %v3164, 1
          %v3288 = vperm.slane %v3164, 2
          %v3289 = vperm.slane %v3164, 3
          %v3290 = vperm.slane %v3164, 4
          %v3291 = vperm.slane %v3164, 5
          %v3292 = vperm.slane %v3164, 6
          %v3293 = vperm.slane %v3164, 7
          %v3294 = vperm.slane %v3167, 0
          %v3295 = vperm.slane %v3167, 1
          %v3296 = vperm.slane %v3167, 2
          %v3297 = vperm.slane %v3167, 3
          %v3298 = vperm.slane %v3167, 4
          %v3299 = vperm.slane %v3167, 5
          %v3300 = vperm.slane %v3167, 6
          %v3301 = vperm.slane %v3167, 7
          %v3302 = vperm.slane %v3170, 0
          %v3303 = vperm.slane %v3170, 1
          %v3304 = vperm.slane %v3170, 2
          %v3305 = vperm.slane %v3170, 3
          %v3306 = vperm.slane %v3170, 4
          %v3307 = vperm.slane %v3170, 5
          %v3308 = vperm.slane %v3170, 6
          %v3309 = vperm.slane %v3170, 7
          %v3310 = vperm.slane %v3173, 0
          %v3311 = vperm.slane %v3173, 1
          %v3312 = vperm.slane %v3173, 2
          %v3313 = vperm.slane %v3173, 3
          %v3314 = vperm.slane %v3173, 4
          %v3315 = vperm.slane %v3173, 5
          %v3316 = vperm.slane %v3173, 6
          %v3317 = vperm.slane %v3173, 7
          %3318 = vst [vmem:[#allocation1] ss:$9 sm:$0xff] %v3190
          %s3319 = scalar_lea.vmem [#allocation1], 1
          %3320 = vst [vmem:[%s3319] ss:$9 sm:$0xff] %v3191
          %s3321 = scalar_lea.vmem [#allocation1], 2
          %3322 = vst [vmem:[%s3321] ss:$9 sm:$0xff] %v3192
          %s3323 = scalar_lea.vmem [#allocation1], 3
          %3324 = vst [vmem:[%s3323] ss:$9 sm:$0xff] %v3193
          %s3325 = scalar_lea.vmem [#allocation1], 4
          %3326 = vst [vmem:[%s3325] ss:$9 sm:$0xff] %v3194
          %s3327 = scalar_lea.vmem [#allocation1], 5
          %3328 = vst [vmem:[%s3327] ss:$9 sm:$0xff] %v3195
          %s3329 = scalar_lea.vmem [#allocation1], 6
          %3330 = vst [vmem:[%s3329] ss:$9 sm:$0xff] %v3196
          %s3331 = scalar_lea.vmem [#allocation1], 7
          %3332 = vst [vmem:[%s3331] ss:$9 sm:$0xff] %v3197
          %v3333 = vld [vmem:[#allocation1] sm:$0xff]
          %3334 = vst [vmem:[#allocation1] ss:$9 sm:$0xff] %v3198
          %3335 = vst [vmem:[%s3319] ss:$9 sm:$0xff] %v3199
          %3336 = vst [vmem:[%s3321] ss:$9 sm:$0xff] %v3200
          %3337 = vst [vmem:[%s3323] ss:$9 sm:$0xff] %v3201
          %3338 = vst [vmem:[%s3325] ss:$9 sm:$0xff] %v3202
          %3339 = vst [vmem:[%s3327] ss:$9 sm:$0xff] %v3203
          %3340 = vst [vmem:[%s3329] ss:$9 sm:$0xff] %v3204
          %3341 = vst [vmem:[%s3331] ss:$9 sm:$0xff] %v3205
          %v3342 = vld [vmem:[#allocation1] sm:$0xff]
          %3343 = vst [vmem:[#allocation1] ss:$9 sm:$0xff] %v3206
          %3344 = vst [vmem:[%s3319] ss:$9 sm:$0xff] %v3207
          %3345 = vst [vmem:[%s3321] ss:$9 sm:$0xff] %v3208
          %3346 = vst [vmem:[%s3323] ss:$9 sm:$0xff] %v3209
          %3347 = vst [vmem:[%s3325] ss:$9 sm:$0xff] %v3210
          %3348 = vst [vmem:[%s3327] ss:$9 sm:$0xff] %v3211
          %3349 = vst [vmem:[%s3329] ss:$9 sm:$0xff] %v3212
          %3350 = vst [vmem:[%s3331] ss:$9 sm:$0xff] %v3213
          %v3351 = vld [vmem:[#allocation1] sm:$0xff]
          %3352 = vst [vmem:[#allocation1] ss:$9 sm:$0xff] %v3214
          %3353 = vst [vmem:[%s3319] ss:$9 sm:$0xff] %v3215
          %3354 = vst [vmem:[%s3321] ss:$9 sm:$0xff] %v3216
          %3355 = vst [vmem:[%s3323] ss:$9 sm:$0xff] %v3217
          %3356 = vst [vmem:[%s3325] ss:$9 sm:$0xff] %v3218
          %3357 = vst [vmem:[%s3327] ss:$9 sm:$0xff] %v3219
          %3358 = vst [vmem:[%s3329] ss:$9 sm:$0xff] %v3220
          %3359 = vst [vmem:[%s3331] ss:$9 sm:$0xff] %v3221
          %v3360 = vld [vmem:[#allocation1] sm:$0xff]
          %3361 = vst [vmem:[#allocation1] ss:$9 sm:$0xff] %v3222
          %3362 = vst [vmem:[%s3319] ss:$9 sm:$0xff] %v3223
          %3363 = vst [vmem:[%s3321] ss:$9 sm:$0xff] %v3224
          %3364 = vst [vmem:[%s3323] ss:$9 sm:$0xff] %v3225
          %3365 = vst [vmem:[%s3325] ss:$9 sm:$0xff] %v3226
          %3366 = vst [vmem:[%s3327] ss:$9 sm:$0xff] %v3227
          %3367 = vst [vmem:[%s3329] ss:$9 sm:$0xff] %v3228
          %3368 = vst [vmem:[%s3331] ss:$9 sm:$0xff] %v3229
          %v3369 = vld [vmem:[#allocation1] sm:$0xff]
          %3370 = vst [vmem:[#allocation1] ss:$9 sm:$0xff] %v3230
          %3371 = vst [vmem:[%s3319] ss:$9 sm:$0xff] %v3231
          %3372 = vst [vmem:[%s3321] ss:$9 sm:$0xff] %v3232
          %3373 = vst [vmem:[%s3323] ss:$9 sm:$0xff] %v3233
          %3374 = vst [vmem:[%s3325] ss:$9 sm:$0xff] %v3234
          %3375 = vst [vmem:[%s3327] ss:$9 sm:$0xff] %v3235
          %3376 = vst [vmem:[%s3329] ss:$9 sm:$0xff] %v3236
          %3377 = vst [vmem:[%s3331] ss:$9 sm:$0xff] %v3237
          %v3378 = vld [vmem:[#allocation1] sm:$0xff]
          %3379 = vst [vmem:[#allocation1] ss:$9 sm:$0xff] %v3238
          %3380 = vst [vmem:[%s3319] ss:$9 sm:$0xff] %v3239
          %3381 = vst [vmem:[%s3321] ss:$9 sm:$0xff] %v3240
          %3382 = vst [vmem:[%s3323] ss:$9 sm:$0xff] %v3241
          %3383 = vst [vmem:[%s3325] ss:$9 sm:$0xff] %v3242
          %3384 = vst [vmem:[%s3327] ss:$9 sm:$0xff] %v3243
          %3385 = vst [vmem:[%s3329] ss:$9 sm:$0xff] %v3244
          %3386 = vst [vmem:[%s3331] ss:$9 sm:$0xff] %v3245
          %v3387 = vld [vmem:[#allocation1] sm:$0xff]
          %3388 = vst [vmem:[#allocation1] ss:$9 sm:$0xff] %v3246
          %3389 = vst [vmem:[%s3319] ss:$9 sm:$0xff] %v3247
          %3390 = vst [vmem:[%s3321] ss:$9 sm:$0xff] %v3248
          %3391 = vst [vmem:[%s3323] ss:$9 sm:$0xff] %v3249
          %3392 = vst [vmem:[%s3325] ss:$9 sm:$0xff] %v3250
          %3393 = vst [vmem:[%s3327] ss:$9 sm:$0xff] %v3251
          %3394 = vst [vmem:[%s3329] ss:$9 sm:$0xff] %v3252
          %3395 = vst [vmem:[%s3331] ss:$9 sm:$0xff] %v3253
          %v3396 = vld [vmem:[#allocation1] sm:$0xff]
          %3397 = vst [vmem:[#allocation1] ss:$9 sm:$0xff] %v3254
          %3398 = vst [vmem:[%s3319] ss:$9 sm:$0xff] %v3255
          %3399 = vst [vmem:[%s3321] ss:$9 sm:$0xff] %v3256
          %3400 = vst [vmem:[%s3323] ss:$9 sm:$0xff] %v3257
          %3401 = vst [vmem:[%s3325] ss:$9 sm:$0xff] %v3258
          %3402 = vst [vmem:[%s3327] ss:$9 sm:$0xff] %v3259
          %3403 = vst [vmem:[%s3329] ss:$9 sm:$0xff] %v3260
          %3404 = vst [vmem:[%s3331] ss:$9 sm:$0xff] %v3261
          %v3405 = vld [vmem:[#allocation1] sm:$0xff]
          %3406 = vst [vmem:[#allocation1] ss:$9 sm:$0xff] %v3262
          %3407 = vst [vmem:[%s3319] ss:$9 sm:$0xff] %v3263
          %3408 = vst [vmem:[%s3321] ss:$9 sm:$0xff] %v3264
          %3409 = vst [vmem:[%s3323] ss:$9 sm:$0xff] %v3265
          %3410 = vst [vmem:[%s3325] ss:$9 sm:$0xff] %v3266
          %3411 = vst [vmem:[%s3327] ss:$9 sm:$0xff] %v3267
          %3412 = vst [vmem:[%s3329] ss:$9 sm:$0xff] %v3268
          %3413 = vst [vmem:[%s3331] ss:$9 sm:$0xff] %v3269
          %v3414 = vld [vmem:[#allocation1] sm:$0xff]
          %3415 = vst [vmem:[#allocation1] ss:$9 sm:$0xff] %v3270
          %3416 = vst [vmem:[%s3319] ss:$9 sm:$0xff] %v3271
          %3417 = vst [vmem:[%s3321] ss:$9 sm:$0xff] %v3272
          %3418 = vst [vmem:[%s3323] ss:$9 sm:$0xff] %v3273
          %3419 = vst [vmem:[%s3325] ss:$9 sm:$0xff] %v3274
          %3420 = vst [vmem:[%s3327] ss:$9 sm:$0xff] %v3275
          %3421 = vst [vmem:[%s3329] ss:$9 sm:$0xff] %v3276
          %3422 = vst [vmem:[%s3331] ss:$9 sm:$0xff] %v3277
          %v3423 = vld [vmem:[#allocation1] sm:$0xff]
          %3424 = vst [vmem:[#allocation1] ss:$9 sm:$0xff] %v3278
          %3425 = vst [vmem:[%s3319] ss:$9 sm:$0xff] %v3279
          %3426 = vst [vmem:[%s3321] ss:$9 sm:$0xff] %v3280
          %3427 = vst [vmem:[%s3323] ss:$9 sm:$0xff] %v3281
          %3428 = vst [vmem:[%s3325] ss:$9 sm:$0xff] %v3282
          %3429 = vst [vmem:[%s3327] ss:$9 sm:$0xff] %v3283
          %3430 = vst [vmem:[%s3329] ss:$9 sm:$0xff] %v3284
          %3431 = vst [vmem:[%s3331] ss:$9 sm:$0xff] %v3285
          %v3432 = vld [vmem:[#allocation1] sm:$0xff]
          %3433 = vst [vmem:[#allocation1] ss:$9 sm:$0xff] %v3286
          %3434 = vst [vmem:[%s3319] ss:$9 sm:$0xff] %v3287
          %3435 = vst [vmem:[%s3321] ss:$9 sm:$0xff] %v3288
          %3436 = vst [vmem:[%s3323] ss:$9 sm:$0xff] %v3289
          %3437 = vst [vmem:[%s3325] ss:$9 sm:$0xff] %v3290
          %3438 = vst [vmem:[%s3327] ss:$9 sm:$0xff] %v3291
          %3439 = vst [vmem:[%s3329] ss:$9 sm:$0xff] %v3292
          %3440 = vst [vmem:[%s3331] ss:$9 sm:$0xff] %v3293
          %v3441 = vld [vmem:[#allocation1] sm:$0xff]
          %3442 = vst [vmem:[#allocation1] ss:$9 sm:$0xff] %v3294
          %3443 = vst [vmem:[%s3319] ss:$9 sm:$0xff] %v3295
          %3444 = vst [vmem:[%s3321] ss:$9 sm:$0xff] %v3296
          %3445 = vst [vmem:[%s3323] ss:$9 sm:$0xff] %v3297
          %3446 = vst [vmem:[%s3325] ss:$9 sm:$0xff] %v3298
          %3447 = vst [vmem:[%s3327] ss:$9 sm:$0xff] %v3299
          %3448 = vst [vmem:[%s3329] ss:$9 sm:$0xff] %v3300
          %3449 = vst [vmem:[%s3331] ss:$9 sm:$0xff] %v3301
          %v3450 = vld [vmem:[#allocation1] sm:$0xff]
          %3451 = vst [vmem:[#allocation1] ss:$9 sm:$0xff] %v3302
          %3452 = vst [vmem:[%s3319] ss:$9 sm:$0xff] %v3303
          %3453 = vst [vmem:[%s3321] ss:$9 sm:$0xff] %v3304
          %3454 = vst [vmem:[%s3323] ss:$9 sm:$0xff] %v3305
          %3455 = vst [vmem:[%s3325] ss:$9 sm:$0xff] %v3306
          %3456 = vst [vmem:[%s3327] ss:$9 sm:$0xff] %v3307
          %3457 = vst [vmem:[%s3329] ss:$9 sm:$0xff] %v3308
          %3458 = vst [vmem:[%s3331] ss:$9 sm:$0xff] %v3309
          %v3459 = vld [vmem:[#allocation1] sm:$0xff]
          %3460 = vst [vmem:[#allocation1] ss:$9 sm:$0xff] %v3310
          %3461 = vst [vmem:[%s3319] ss:$9 sm:$0xff] %v3311
          %3462 = vst [vmem:[%s3321] ss:$9 sm:$0xff] %v3312
          %3463 = vst [vmem:[%s3323] ss:$9 sm:$0xff] %v3313
          %3464 = vst [vmem:[%s3325] ss:$9 sm:$0xff] %v3314
          %3465 = vst [vmem:[%s3327] ss:$9 sm:$0xff] %v3315
          %3466 = vst [vmem:[%s3329] ss:$9 sm:$0xff] %v3316
          %3467 = vst [vmem:[%s3331] ss:$9 sm:$0xff] %v3317
          %v3468 = vld [vmem:[#allocation1] sm:$0xff]
          %3469 = vset.pattern.permute.xlu0 0
          %3470 = vperm.xlu0 %3469, %v3333
          %v3471 = vpop.permute.xlu0 %3470
          %3472 = vset.pattern.permute.xlu0 0
          %3473 = vperm.xlu0 %3472, %v3342
          %v3474 = vpop.permute.xlu0 %3473
          %3475 = vset.pattern.permute.xlu0 0
          %3476 = vperm.xlu0 %3475, %v3351
          %v3477 = vpop.permute.xlu0 %3476
          %3478 = vset.pattern.permute.xlu0 0
          %3479 = vperm.xlu0 %3478, %v3360
          %v3480 = vpop.permute.xlu0 %3479
          %3481 = vset.pattern.permute.xlu0 0
          %3482 = vperm.xlu0 %3481, %v3369
          %v3483 = vpop.permute.xlu0 %3482
          %3484 = vset.pattern.permute.xlu0 0
          %3485 = vperm.xlu0 %3484, %v3378
          %v3486 = vpop.permute.xlu0 %3485
          %3487 = vset.pattern.permute.xlu0 0
          %3488 = vperm.xlu0 %3487, %v3387
          %v3489 = vpop.permute.xlu0 %3488
          %3490 = vset.pattern.permute.xlu0 0
          %3491 = vperm.xlu0 %3490, %v3396
          %v3492 = vpop.permute.xlu0 %3491
          %3493 = vset.pattern.permute.xlu0 0
          %3494 = vperm.xlu0 %3493, %v3405
          %v3495 = vpop.permute.xlu0 %3494
          %3496 = vset.pattern.permute.xlu0 0
          %3497 = vperm.xlu0 %3496, %v3414
          %v3498 = vpop.permute.xlu0 %3497
          %3499 = vset.pattern.permute.xlu0 0
          %3500 = vperm.xlu0 %3499, %v3423
          %v3501 = vpop.permute.xlu0 %3500
          %3502 = vset.pattern.permute.xlu0 0
          %3503 = vperm.xlu0 %3502, %v3432
          %v3504 = vpop.permute.xlu0 %3503
          %3505 = vset.pattern.permute.xlu0 0
          %3506 = vperm.xlu0 %3505, %v3441
          %v3507 = vpop.permute.xlu0 %3506
          %3508 = vset.pattern.permute.xlu0 0
          %3509 = vperm.xlu0 %3508, %v3450
          %v3510 = vpop.permute.xlu0 %3509
          %3511 = vset.pattern.permute.xlu0 0
          %3512 = vperm.xlu0 %3511, %v3459
          %v3513 = vpop.permute.xlu0 %3512
          %3514 = vset.pattern.permute.xlu0 0
          %3515 = vperm.xlu0 %3514, %v3468
          %v3516 = vpop.permute.xlu0 %3515
          %v3517 = vlaneseq
          %v3518 = vand.u32 %v3517, 127
          %v3519 = vperm.slane %v3471, %v3518
          %v3520 = vadd.s32 %v3518, 4294967288
          %v3521 = vperm.slane %v3474, %v3520
          %vm3522 = vcmask 130112
          %v3523 = vsel %vm3522, %v3521, %v3519
          %v3524 = vadd.s32 %v3518, 4294967280
          %v3525 = vperm.slane %v3477, %v3524
          %vm3526 = vcmask 195712
          %v3527 = vsel %vm3526, %v3525, %v3523
          %v3528 = vadd.s32 %v3518, 4294967272
          %v3529 = vperm.slane %v3480, %v3528
          %vm3530 = vcmask 261312
          %v3531 = vsel %vm3530, %v3529, %v3527
          %v3532 = vadd.s32 %v3518, 4294967264
          %v3533 = vperm.slane %v3483, %v3532
          %vm3534 = vcmask 326912
          %v3535 = vsel %vm3534, %v3533, %v3531
          %v3536 = vadd.s32 %v3518, 4294967256
          %v3537 = vperm.slane %v3486, %v3536
          %vm3538 = vcmask 392512
          %v3539 = vsel %vm3538, %v3537, %v3535
          %v3540 = vadd.s32 %v3518, 4294967248
          %v3541 = vperm.slane %v3489, %v3540
          %vm3542 = vcmask 458112
          %v3543 = vsel %vm3542, %v3541, %v3539
          %v3544 = vadd.s32 %v3518, 4294967240
          %v3545 = vperm.slane %v3492, %v3544
          %vm3546 = vcmask 523712
          %v3547 = vsel %vm3546, %v3545, %v3543
          %v3548 = vadd.s32 %v3518, 4294967232
          %v3549 = vperm.slane %v3495, %v3548
          %vm3550 = vcmask 589312
          %v3551 = vsel %vm3550, %v3549, %v3547
          %v3552 = vadd.s32 %v3518, 4294967224
          %v3553 = vperm.slane %v3498, %v3552
          %vm3554 = vcmask 654912
          %v3555 = vsel %vm3554, %v3553, %v3551
          %v3556 = vadd.s32 %v3518, 4294967216
          %v3557 = vperm.slane %v3501, %v3556
          %vm3558 = vcmask 720512
          %v3559 = vsel %vm3558, %v3557, %v3555
          %v3560 = vadd.s32 %v3518, 4294967208
          %v3561 = vperm.slane %v3504, %v3560
          %vm3562 = vcmask 786112
          %v3563 = vsel %vm3562, %v3561, %v3559
          %v3564 = vadd.s32 %v3518, 4294967200
          %v3565 = vperm.slane %v3507, %v3564
          %vm3566 = vcmask 851712
          %v3567 = vsel %vm3566, %v3565, %v3563
          %v3568 = vadd.s32 %v3518, 4294967192
          %v3569 = vperm.slane %v3510, %v3568
          %vm3570 = vcmask 917312
          %v3571 = vsel %vm3570, %v3569, %v3567
          %v3572 = vadd.s32 %v3518, 4294967184
          %v3573 = vperm.slane %v3513, %v3572
          %vm3574 = vcmask 982912
          %v3575 = vsel %vm3574, %v3573, %v3571
          %v3576 = vadd.s32 %v3518, 4294967176
          %v3577 = vperm.slane %v3516, %v3576
          %vm3578 = vcmask 1048512
          %v3579 = vsel %vm3578, %v3577, %v3575
          %v3581 = vmax.f32 %v3124, %v3579
          %3582 = vst [vmem:[#allocation6] sm:$0x1] %v3581
          %s3583 = scalar_lea.vmem %s408, 8
          %v3584 = vld [vmem:[%s3583] sm:$0x7f]
          %v3585 = vpack.c.bf16 %v3584, %v3584
          %v3586 = vld [vmem:[%s1] sm:$0xf]
          %v3587 = vld [vmem:[%s1 + $0x4] sm:$0xf]
          %v3588 = vld [vmem:[%s1 + $0x8] sm:$0xf]
          %v3589 = vld [vmem:[%s1 + $0xc] sm:$0xf]
          %v3590 = vld [vmem:[%s1 + $0x10] sm:$0xf]
          %v3591 = vld [vmem:[%s1 + $0x14] sm:$0xf]
          %v3592 = vld [vmem:[%s1 + $0x18] sm:$0xf]
          %v3593 = vld [vmem:[%s1 + $0x1c] sm:$0xf]
          %v3594 = vld [vmem:[%s2] sm:$0xff]
          %v3595 = vld [vmem:[%s2 + $0x8] sm:$0xff]
          %v3596 = vld [vmem:[%s2 + $0x10] sm:$0xff]
          %v3597 = vld [vmem:[%s2 + $0x18] sm:$0xff]
          %v3598 = vld [vmem:[%s2 + $0x20] sm:$0xff]
          %v3599 = vld [vmem:[%s2 + $0x28] sm:$0xff]
          %v3600 = vld [vmem:[%s2 + $0x30] sm:$0xff]
          %v3601 = vld [vmem:[%s2 + $0x38] sm:$0xff]
          %3603 = vset.pattern.permute.xlu0 0
          %3604 = vperm.xlu0 %3603, %v3594
          %v3605 = vpop.permute.xlu0 %3604
          %3608 = vset.pattern.permute.xlu0 0
          %3609 = vperm.xlu0 %3608, %v3595
          %v3610 = vpop.permute.xlu0 %3609
          %3613 = vset.pattern.permute.xlu0 0
          %3614 = vperm.xlu0 %3613, %v3596
          %v3615 = vpop.permute.xlu0 %3614
          %3618 = vset.pattern.permute.xlu0 0
          %3619 = vperm.xlu0 %3618, %v3597
          %v3620 = vpop.permute.xlu0 %3619
          %3623 = vset.pattern.permute.xlu0 0
          %3624 = vperm.xlu0 %3623, %v3598
          %v3625 = vpop.permute.xlu0 %3624
          %3628 = vset.pattern.permute.xlu0 0
          %3629 = vperm.xlu0 %3628, %v3599
          %v3630 = vpop.permute.xlu0 %3629
          %3633 = vset.pattern.permute.xlu0 0
          %3634 = vperm.xlu0 %3633, %v3600
          %v3635 = vpop.permute.xlu0 %3634
          %3638 = vset.pattern.permute.xlu0 0
          %3639 = vperm.xlu0 %3638, %v3601
          %v3640 = vpop.permute.xlu0 %3639
          %v3650 = vunpack.c.l.b16 %v3586
          %v3651 = vunpack.c.l.b16 %v3587
          %v3652 = vunpack.c.l.b16 %v3588
          %v3653 = vunpack.c.l.b16 %v3589
          %v3654 = vunpack.c.l.b16 %v3590
          %v3655 = vunpack.c.l.b16 %v3591
          %v3656 = vunpack.c.l.b16 %v3592
          %v3657 = vunpack.c.l.b16 %v3593
          %v3658 = vpack.c.b16 %v3651, %v3650
          %v3659 = vpack.c.b16 %v3653, %v3652
          %v3660 = vpack.c.b16 %v3655, %v3654
          %v3661 = vpack.c.b16 %v3657, %v3656
          %v3663 = vsel %vm2162, %v3658, 0
          %v3666 = vsel %vm2162, %v3659, 0
          %v3669 = vsel %vm2162, %v3660, 0
          %v3672 = vsel %vm2162, %v3661, 0
          %v3675 = vand.u32 %v3585, %v2178
          %3677 = vmatpush.bf16.msra.mxu0 0
          %3678 = vmatpush.bf16.msra.mxu0 0
          %3679 = vmatpush.bf16.msra.mxu0 0
          %3680 = vmatpush.bf16.msra.mxu0 0
          %3681 = vmatpush.bf16.msra.mxu0 0
          %3682 = vmatpush.bf16.msra.mxu0 0
          %3683 = vmatpush.bf16.msra.mxu0 0
          %3684 = vmatpush.bf16.msra.mxu0 %v3675
          %3685 = vmatmul.bf16.gmra.mxu0 %v3663
          %v3686 = vpop.f32.mrf.mxu0
          %v3687 = vadd.f32 %v3605, %v3686
          %v3688 = vpop.f32.mrf.mxu0
          %v3689 = vadd.f32 %v3610, %v3688
          %3690 = vmatmul.bf16.gmra.mxu0 %v3666
          %v3691 = vpop.f32.mrf.mxu0
          %v3692 = vadd.f32 %v3615, %v3691
          %v3693 = vpop.f32.mrf.mxu0
          %v3694 = vadd.f32 %v3620, %v3693
          %3695 = vmatmul.bf16.gmra.mxu0 %v3669
          %v3696 = vpop.f32.mrf.mxu0
          %v3697 = vadd.f32 %v3625, %v3696
          %v3698 = vpop.f32.mrf.mxu0
          %v3699 = vadd.f32 %v3630, %v3698
          %3700 = vmatmul.bf16.gmra.mxu0 %v3672
          %v3701 = vpop.f32.mrf.mxu0
          %v3702 = vadd.f32 %v3635, %v3701
          %v3703 = vpop.f32.mrf.mxu0
          %v3704 = vadd.f32 %v3640, %v3703
          %3705 = vdwg.mxu0
          %s3706 = scalar_lea.vmem [#allocation2], 1
          %v3707 = vld [vmem:[%s3706] sm:$0x1]
          %v3708 = vmul.f32 %v3707, 0.0009765625
          %s3709 = scalar_lea.vmem [#allocation3], 1
          %v3710 = vld [vmem:[%s3709] sm:$0x1]
          %v3711 = vmul.f32 %v3710, 0.0009765625
          %v3712 = vmul.f32 %v3708, %v3708
          %v3713 = vsub.f32 %v3711, %v3712
          %v3715 = vperm.slane %v3708, 0
          %3716 = vset.pattern.permute.xlu0 0
          %3717 = vperm.xlu0 %3716, %v3715
          %v3718 = vpop.permute.xlu0 %3717
          %v3720 = vsub.f32 %v3687, %v3718
          %v3721 = vsub.f32 %v3689, %v3718
          %v3722 = vsub.f32 %v3692, %v3718
          %v3723 = vsub.f32 %v3694, %v3718
          %v3724 = vsub.f32 %v3697, %v3718
          %v3725 = vsub.f32 %v3699, %v3718
          %v3726 = vsub.f32 %v3702, %v3718
          %v3727 = vsub.f32 %v3704, %v3718
          %v3728 = vadd.f32 %v3713, 1e-05
          %v3729 = vrsqrt.pop %v3728
          %v3730 = vmul.f32 %v3729, %v3728
          %v3731 = vmul.f32 %v3730, %v3729
          %v3732 = vmul.f32 0.5, %v3731
          %v3733 = vsub.f32 1.5, %v3732
          %v3734 = vmul.f32 %v3729, %v3733
          %vm3735 = vweird.f32 %v3728
          %vm3736 = vweird.f32 %v3729
          %vm3737 = vmor %vm3735, %vm3736
          %v3738 = vsel %vm3737, %v3729, %v3734
          %v3740 = vperm.slane %v3738, 0
          %3741 = vset.pattern.permute.xlu0 0
          %3742 = vperm.xlu0 %3741, %v3740
          %v3743 = vpop.permute.xlu0 %3742
          %v3745 = vmul.f32 %v3720, %v3743
          %v3746 = vmul.f32 %v3721, %v3743
          %v3747 = vmul.f32 %v3722, %v3743
          %v3748 = vmul.f32 %v3723, %v3743
          %v3749 = vmul.f32 %v3724, %v3743
          %v3750 = vmul.f32 %v3725, %v3743
          %v3751 = vmul.f32 %v3726, %v3743
          %v3752 = vmul.f32 %v3727, %v3743
          %v3753 = vld [vmem:[%s3] sm:$0xff]
          %v3754 = vld [vmem:[%s3 + $0x8] sm:$0xff]
          %v3755 = vld [vmem:[%s3 + $0x10] sm:$0xff]
          %v3756 = vld [vmem:[%s3 + $0x18] sm:$0xff]
          %v3757 = vld [vmem:[%s3 + $0x20] sm:$0xff]
          %v3758 = vld [vmem:[%s3 + $0x28] sm:$0xff]
          %v3759 = vld [vmem:[%s3 + $0x30] sm:$0xff]
          %v3760 = vld [vmem:[%s3 + $0x38] sm:$0xff]
          %3762 = vset.pattern.permute.xlu0 0
          %3763 = vperm.xlu0 %3762, %v3753
          %v3764 = vpop.permute.xlu0 %3763
          %3767 = vset.pattern.permute.xlu0 0
          %3768 = vperm.xlu0 %3767, %v3754
          %v3769 = vpop.permute.xlu0 %3768
          %3772 = vset.pattern.permute.xlu0 0
          %3773 = vperm.xlu0 %3772, %v3755
          %v3774 = vpop.permute.xlu0 %3773
          %3777 = vset.pattern.permute.xlu0 0
          %3778 = vperm.xlu0 %3777, %v3756
          %v3779 = vpop.permute.xlu0 %3778
          %3782 = vset.pattern.permute.xlu0 0
          %3783 = vperm.xlu0 %3782, %v3757
          %v3784 = vpop.permute.xlu0 %3783
          %3787 = vset.pattern.permute.xlu0 0
          %3788 = vperm.xlu0 %3787, %v3758
          %v3789 = vpop.permute.xlu0 %3788
          %3792 = vset.pattern.permute.xlu0 0
          %3793 = vperm.xlu0 %3792, %v3759
          %v3794 = vpop.permute.xlu0 %3793
          %3797 = vset.pattern.permute.xlu0 0
          %3798 = vperm.xlu0 %3797, %v3760
          %v3799 = vpop.permute.xlu0 %3798
          %v3801 = vmul.f32 %v3745, %v3764
          %v3802 = vmul.f32 %v3746, %v3769
          %v3803 = vmul.f32 %v3747, %v3774
          %v3804 = vmul.f32 %v3748, %v3779
          %v3805 = vmul.f32 %v3749, %v3784
          %v3806 = vmul.f32 %v3750, %v3789
          %v3807 = vmul.f32 %v3751, %v3794
          %v3808 = vmul.f32 %v3752, %v3799
          %v3809 = vld [vmem:[%s4] sm:$0xff]
          %v3810 = vld [vmem:[%s4 + $0x8] sm:$0xff]
          %v3811 = vld [vmem:[%s4 + $0x10] sm:$0xff]
          %v3812 = vld [vmem:[%s4 + $0x18] sm:$0xff]
          %v3813 = vld [vmem:[%s4 + $0x20] sm:$0xff]
          %v3814 = vld [vmem:[%s4 + $0x28] sm:$0xff]
          %v3815 = vld [vmem:[%s4 + $0x30] sm:$0xff]
          %v3816 = vld [vmem:[%s4 + $0x38] sm:$0xff]
          %3818 = vset.pattern.permute.xlu0 0
          %3819 = vperm.xlu0 %3818, %v3809
          %v3820 = vpop.permute.xlu0 %3819
          %3823 = vset.pattern.permute.xlu0 0
          %3824 = vperm.xlu0 %3823, %v3810
          %v3825 = vpop.permute.xlu0 %3824
          %3828 = vset.pattern.permute.xlu0 0
          %3829 = vperm.xlu0 %3828, %v3811
          %v3830 = vpop.permute.xlu0 %3829
          %3833 = vset.pattern.permute.xlu0 0
          %3834 = vperm.xlu0 %3833, %v3812
          %v3835 = vpop.permute.xlu0 %3834
          %3838 = vset.pattern.permute.xlu0 0
          %3839 = vperm.xlu0 %3838, %v3813
          %v3840 = vpop.permute.xlu0 %3839
          %3843 = vset.pattern.permute.xlu0 0
          %3844 = vperm.xlu0 %3843, %v3814
          %v3845 = vpop.permute.xlu0 %3844
          %3848 = vset.pattern.permute.xlu0 0
          %3849 = vperm.xlu0 %3848, %v3815
          %v3850 = vpop.permute.xlu0 %3849
          %3853 = vset.pattern.permute.xlu0 0
          %3854 = vperm.xlu0 %3853, %v3816
          %v3855 = vpop.permute.xlu0 %3854
          %v3857 = vadd.f32 %v3801, %v3820
          %v3858 = vadd.f32 %v3802, %v3825
          %v3859 = vadd.f32 %v3803, %v3830
          %v3860 = vadd.f32 %v3804, %v3835
          %v3861 = vadd.f32 %v3805, %v3840
          %v3862 = vadd.f32 %v3806, %v3845
          %v3863 = vadd.f32 %v3807, %v3850
          %v3864 = vadd.f32 %v3808, %v3855
          %v3865 = vmax.f32 %v3857, 0.0
          %v3866 = vmax.f32 %v3858, 0.0
          %v3867 = vmax.f32 %v3859, 0.0
          %v3868 = vmax.f32 %v3860, 0.0
          %v3869 = vmax.f32 %v3861, 0.0
          %v3870 = vmax.f32 %v3862, 0.0
          %v3871 = vmax.f32 %v3863, 0.0
          %v3872 = vmax.f32 %v3864, 0.0
          %v3873 = vpack.c.bf16 %v3866, %v3865
          %v3874 = vpack.c.bf16 %v3868, %v3867
          %v3875 = vpack.c.bf16 %v3870, %v3869
          %v3876 = vpack.c.bf16 %v3872, %v3871
          %v3877 = vld [vmem:[%s5] sm:$0xf]
          %v3878 = vld [vmem:[%s5 + $0x4] sm:$0xf]
          %v3879 = vld [vmem:[%s5 + $0x8] sm:$0xf]
          %v3880 = vld [vmem:[%s5 + $0xc] sm:$0xf]
          %v3881 = vld [vmem:[%s5 + $0x10] sm:$0xf]
          %v3882 = vld [vmem:[%s5 + $0x14] sm:$0xf]
          %v3883 = vld [vmem:[%s5 + $0x18] sm:$0xf]
          %v3884 = vld [vmem:[%s5 + $0x1c] sm:$0xf]
          %v3885 = vld [vmem:[%s5 + $0x20] sm:$0xf]
          %v3886 = vld [vmem:[%s5 + $0x24] sm:$0xf]
          %v3887 = vld [vmem:[%s5 + $0x28] sm:$0xf]
          %v3888 = vld [vmem:[%s5 + $0x2c] sm:$0xf]
          %v3889 = vld [vmem:[%s5 + $0x30] sm:$0xf]
          %v3890 = vld [vmem:[%s5 + $0x34] sm:$0xf]
          %v3891 = vld [vmem:[%s5 + $0x38] sm:$0xf]
          %v3892 = vld [vmem:[%s5 + $0x3c] sm:$0xf]
          %v3893 = vld [vmem:[%s6] sm:$0xff]
          %v3894 = vld [vmem:[%s6 + $0x8] sm:$0xff]
          %v3895 = vld [vmem:[%s6 + $0x10] sm:$0xff]
          %v3896 = vld [vmem:[%s6 + $0x18] sm:$0xff]
          %v3897 = vld [vmem:[%s6 + $0x20] sm:$0xff]
          %v3898 = vld [vmem:[%s6 + $0x28] sm:$0xff]
          %v3899 = vld [vmem:[%s6 + $0x30] sm:$0xff]
          %v3900 = vld [vmem:[%s6 + $0x38] sm:$0xff]
          %v3901 = vld [vmem:[%s6 + $0x40] sm:$0xff]
          %v3902 = vld [vmem:[%s6 + $0x48] sm:$0xff]
          %v3903 = vld [vmem:[%s6 + $0x50] sm:$0xff]
          %v3904 = vld [vmem:[%s6 + $0x58] sm:$0xff]
          %v3905 = vld [vmem:[%s6 + $0x60] sm:$0xff]
          %v3906 = vld [vmem:[%s6 + $0x68] sm:$0xff]
          %v3907 = vld [vmem:[%s6 + $0x70] sm:$0xff]
          %v3908 = vld [vmem:[%s6 + $0x78] sm:$0xff]
          %3910 = vset.pattern.permute.xlu0 0
          %3911 = vperm.xlu0 %3910, %v3893
          %v3912 = vpop.permute.xlu0 %3911
          %3915 = vset.pattern.permute.xlu0 0
          %3916 = vperm.xlu0 %3915, %v3894
          %v3917 = vpop.permute.xlu0 %3916
          %3920 = vset.pattern.permute.xlu0 0
          %3921 = vperm.xlu0 %3920, %v3895
          %v3922 = vpop.permute.xlu0 %3921
          %3925 = vset.pattern.permute.xlu0 0
          %3926 = vperm.xlu0 %3925, %v3896
          %v3927 = vpop.permute.xlu0 %3926
          %3930 = vset.pattern.permute.xlu0 0
          %3931 = vperm.xlu0 %3930, %v3897
          %v3932 = vpop.permute.xlu0 %3931
          %3935 = vset.pattern.permute.xlu0 0
          %3936 = vperm.xlu0 %3935, %v3898
          %v3937 = vpop.permute.xlu0 %3936
          %3940 = vset.pattern.permute.xlu0 0
          %3941 = vperm.xlu0 %3940, %v3899
          %v3942 = vpop.permute.xlu0 %3941
          %3945 = vset.pattern.permute.xlu0 0
          %3946 = vperm.xlu0 %3945, %v3900
          %v3947 = vpop.permute.xlu0 %3946
          %3950 = vset.pattern.permute.xlu0 0
          %3951 = vperm.xlu0 %3950, %v3901
          %v3952 = vpop.permute.xlu0 %3951
          %3955 = vset.pattern.permute.xlu0 0
          %3956 = vperm.xlu0 %3955, %v3902
          %v3957 = vpop.permute.xlu0 %3956
          %3960 = vset.pattern.permute.xlu0 0
          %3961 = vperm.xlu0 %3960, %v3903
          %v3962 = vpop.permute.xlu0 %3961
          %3965 = vset.pattern.permute.xlu0 0
          %3966 = vperm.xlu0 %3965, %v3904
          %v3967 = vpop.permute.xlu0 %3966
          %3970 = vset.pattern.permute.xlu0 0
          %3971 = vperm.xlu0 %3970, %v3905
          %v3972 = vpop.permute.xlu0 %3971
          %3975 = vset.pattern.permute.xlu0 0
          %3976 = vperm.xlu0 %3975, %v3906
          %v3977 = vpop.permute.xlu0 %3976
          %3980 = vset.pattern.permute.xlu0 0
          %3981 = vperm.xlu0 %3980, %v3907
          %v3982 = vpop.permute.xlu0 %3981
          %3985 = vset.pattern.permute.xlu0 0
          %3986 = vperm.xlu0 %3985, %v3908
          %v3987 = vpop.permute.xlu0 %3986
          %v4005 = vunpack.c.l.b16 %v3877
          %v4006 = vunpack.c.l.b16 %v3878
          %v4007 = vunpack.c.l.b16 %v3879
          %v4008 = vunpack.c.l.b16 %v3880
          %v4009 = vunpack.c.l.b16 %v3881
          %v4010 = vunpack.c.l.b16 %v3882
          %v4011 = vunpack.c.l.b16 %v3883
          %v4012 = vunpack.c.l.b16 %v3884
          %v4013 = vunpack.c.l.b16 %v3885
          %v4014 = vunpack.c.l.b16 %v3886
          %v4015 = vunpack.c.l.b16 %v3887
          %v4016 = vunpack.c.l.b16 %v3888
          %v4017 = vunpack.c.l.b16 %v3889
          %v4018 = vunpack.c.l.b16 %v3890
          %v4019 = vunpack.c.l.b16 %v3891
          %v4020 = vunpack.c.l.b16 %v3892
          %v4021 = vpack.c.b16 %v4006, %v4005
          %v4022 = vpack.c.b16 %v4008, %v4007
          %v4023 = vpack.c.b16 %v4010, %v4009
          %v4024 = vpack.c.b16 %v4012, %v4011
          %v4025 = vpack.c.b16 %v4014, %v4013
          %v4026 = vpack.c.b16 %v4016, %v4015
          %v4027 = vpack.c.b16 %v4018, %v4017
          %v4028 = vpack.c.b16 %v4020, %v4019
          %v4030 = vsel %vm2532, %v4021, 0
          %v4033 = vsel %vm2532, %v4022, 0
          %v4036 = vsel %vm2532, %v4023, 0
          %v4039 = vsel %vm2532, %v4024, 0
          %v4042 = vsel %vm2532, %v4025, 0
          %v4045 = vsel %vm2532, %v4026, 0
          %v4048 = vsel %vm2532, %v4027, 0
          %v4051 = vsel %vm2532, %v4028, 0
          %4053 = vmatpush.bf16.msra.mxu0 0
          %4054 = vmatpush.bf16.msra.mxu0 0
          %4055 = vmatpush.bf16.msra.mxu0 0
          %4056 = vmatpush.bf16.msra.mxu0 0
          %4057 = vmatpush.bf16.msra.mxu0 %v3876
          %4058 = vmatpush.bf16.msra.mxu0 %v3875
          %4059 = vmatpush.bf16.msra.mxu0 %v3874
          %4060 = vmatpush.bf16.msra.mxu0 %v3873
          %4061 = vmatmul.bf16.gmra.mxu0 %v4030
          %v4062 = vpop.f32.mrf.mxu0
          %v4063 = vadd.f32 %v3912, %v4062
          %v4064 = vpop.f32.mrf.mxu0
          %v4065 = vadd.f32 %v3917, %v4064
          %4066 = vmatmul.bf16.gmra.mxu0 %v4033
          %v4067 = vpop.f32.mrf.mxu0
          %v4068 = vadd.f32 %v3922, %v4067
          %v4069 = vpop.f32.mrf.mxu0
          %v4070 = vadd.f32 %v3927, %v4069
          %4071 = vmatmul.bf16.gmra.mxu0 %v4036
          %v4072 = vpop.f32.mrf.mxu0
          %v4073 = vadd.f32 %v3932, %v4072
          %v4074 = vpop.f32.mrf.mxu0
          %v4075 = vadd.f32 %v3937, %v4074
          %4076 = vmatmul.bf16.gmra.mxu0 %v4039
          %v4077 = vpop.f32.mrf.mxu0
          %v4078 = vadd.f32 %v3942, %v4077
          %v4079 = vpop.f32.mrf.mxu0
          %v4080 = vadd.f32 %v3947, %v4079
          %4081 = vmatmul.bf16.gmra.mxu0 %v4042
          %v4082 = vpop.f32.mrf.mxu0
          %v4083 = vadd.f32 %v3952, %v4082
          %v4084 = vpop.f32.mrf.mxu0
          %v4085 = vadd.f32 %v3957, %v4084
          %4086 = vmatmul.bf16.gmra.mxu0 %v4045
          %v4087 = vpop.f32.mrf.mxu0
          %v4088 = vadd.f32 %v3962, %v4087
          %v4089 = vpop.f32.mrf.mxu0
          %v4090 = vadd.f32 %v3967, %v4089
          %4091 = vmatmul.bf16.gmra.mxu0 %v4048
          %v4092 = vpop.f32.mrf.mxu0
          %v4093 = vadd.f32 %v3972, %v4092
          %v4094 = vpop.f32.mrf.mxu0
          %v4095 = vadd.f32 %v3977, %v4094
          %4096 = vmatmul.bf16.gmra.mxu0 %v4051
          %v4097 = vpop.f32.mrf.mxu0
          %v4098 = vadd.f32 %v3982, %v4097
          %v4099 = vpop.f32.mrf.mxu0
          %v4100 = vadd.f32 %v3987, %v4099
          %4101 = vdwg.mxu0
          %s4102 = scalar_lea.vmem [#allocation4], 1
          %v4103 = vld [vmem:[%s4102] sm:$0x1]
          %v4104 = vmul.f32 %v4103, 0.00048828125
          %s4105 = scalar_lea.vmem [#allocation5], 1
          %v4106 = vld [vmem:[%s4105] sm:$0x1]
          %v4107 = vmul.f32 %v4106, 0.00048828125
          %v4108 = vmul.f32 %v4104, %v4104
          %v4109 = vsub.f32 %v4107, %v4108
          %v4111 = vperm.slane %v4104, 0
          %4112 = vset.pattern.permute.xlu0 0
          %4113 = vperm.xlu0 %4112, %v4111
          %v4114 = vpop.permute.xlu0 %4113
          %v4116 = vsub.f32 %v4063, %v4114
          %v4117 = vsub.f32 %v4065, %v4114
          %v4118 = vsub.f32 %v4068, %v4114
          %v4119 = vsub.f32 %v4070, %v4114
          %v4120 = vsub.f32 %v4073, %v4114
          %v4121 = vsub.f32 %v4075, %v4114
          %v4122 = vsub.f32 %v4078, %v4114
          %v4123 = vsub.f32 %v4080, %v4114
          %v4124 = vsub.f32 %v4083, %v4114
          %v4125 = vsub.f32 %v4085, %v4114
          %v4126 = vsub.f32 %v4088, %v4114
          %v4127 = vsub.f32 %v4090, %v4114
          %v4128 = vsub.f32 %v4093, %v4114
          %v4129 = vsub.f32 %v4095, %v4114
          %v4130 = vsub.f32 %v4098, %v4114
          %v4131 = vsub.f32 %v4100, %v4114
          %v4132 = vadd.f32 %v4109, 1e-05
          %v4133 = vrsqrt.pop %v4132
          %v4134 = vmul.f32 %v4133, %v4132
          %v4135 = vmul.f32 %v4134, %v4133
          %v4136 = vmul.f32 0.5, %v4135
          %v4137 = vsub.f32 1.5, %v4136
          %v4138 = vmul.f32 %v4133, %v4137
          %vm4139 = vweird.f32 %v4132
          %vm4140 = vweird.f32 %v4133
          %vm4141 = vmor %vm4139, %vm4140
          %v4142 = vsel %vm4141, %v4133, %v4138
          %v4144 = vperm.slane %v4142, 0
          %4145 = vset.pattern.permute.xlu0 0
          %4146 = vperm.xlu0 %4145, %v4144
          %v4147 = vpop.permute.xlu0 %4146
          %v4149 = vmul.f32 %v4116, %v4147
          %v4150 = vmul.f32 %v4117, %v4147
          %v4151 = vmul.f32 %v4118, %v4147
          %v4152 = vmul.f32 %v4119, %v4147
          %v4153 = vmul.f32 %v4120, %v4147
          %v4154 = vmul.f32 %v4121, %v4147
          %v4155 = vmul.f32 %v4122, %v4147
          %v4156 = vmul.f32 %v4123, %v4147
          %v4157 = vmul.f32 %v4124, %v4147
          %v4158 = vmul.f32 %v4125, %v4147
          %v4159 = vmul.f32 %v4126, %v4147
          %v4160 = vmul.f32 %v4127, %v4147
          %v4161 = vmul.f32 %v4128, %v4147
          %v4162 = vmul.f32 %v4129, %v4147
          %v4163 = vmul.f32 %v4130, %v4147
          %v4164 = vmul.f32 %v4131, %v4147
          %v4165 = vld [vmem:[%s7] sm:$0xff]
          %v4166 = vld [vmem:[%s7 + $0x8] sm:$0xff]
          %v4167 = vld [vmem:[%s7 + $0x10] sm:$0xff]
          %v4168 = vld [vmem:[%s7 + $0x18] sm:$0xff]
          %v4169 = vld [vmem:[%s7 + $0x20] sm:$0xff]
          %v4170 = vld [vmem:[%s7 + $0x28] sm:$0xff]
          %v4171 = vld [vmem:[%s7 + $0x30] sm:$0xff]
          %v4172 = vld [vmem:[%s7 + $0x38] sm:$0xff]
          %v4173 = vld [vmem:[%s7 + $0x40] sm:$0xff]
          %v4174 = vld [vmem:[%s7 + $0x48] sm:$0xff]
          %v4175 = vld [vmem:[%s7 + $0x50] sm:$0xff]
          %v4176 = vld [vmem:[%s7 + $0x58] sm:$0xff]
          %v4177 = vld [vmem:[%s7 + $0x60] sm:$0xff]
          %v4178 = vld [vmem:[%s7 + $0x68] sm:$0xff]
          %v4179 = vld [vmem:[%s7 + $0x70] sm:$0xff]
          %v4180 = vld [vmem:[%s7 + $0x78] sm:$0xff]
          %4182 = vset.pattern.permute.xlu0 0
          %4183 = vperm.xlu0 %4182, %v4165
          %v4184 = vpop.permute.xlu0 %4183
          %4187 = vset.pattern.permute.xlu0 0
          %4188 = vperm.xlu0 %4187, %v4166
          %v4189 = vpop.permute.xlu0 %4188
          %4192 = vset.pattern.permute.xlu0 0
          %4193 = vperm.xlu0 %4192, %v4167
          %v4194 = vpop.permute.xlu0 %4193
          %4197 = vset.pattern.permute.xlu0 0
          %4198 = vperm.xlu0 %4197, %v4168
          %v4199 = vpop.permute.xlu0 %4198
          %4202 = vset.pattern.permute.xlu0 0
          %4203 = vperm.xlu0 %4202, %v4169
          %v4204 = vpop.permute.xlu0 %4203
          %4207 = vset.pattern.permute.xlu0 0
          %4208 = vperm.xlu0 %4207, %v4170
          %v4209 = vpop.permute.xlu0 %4208
          %4212 = vset.pattern.permute.xlu0 0
          %4213 = vperm.xlu0 %4212, %v4171
          %v4214 = vpop.permute.xlu0 %4213
          %4217 = vset.pattern.permute.xlu0 0
          %4218 = vperm.xlu0 %4217, %v4172
          %v4219 = vpop.permute.xlu0 %4218
          %4222 = vset.pattern.permute.xlu0 0
          %4223 = vperm.xlu0 %4222, %v4173
          %v4224 = vpop.permute.xlu0 %4223
          %4227 = vset.pattern.permute.xlu0 0
          %4228 = vperm.xlu0 %4227, %v4174
          %v4229 = vpop.permute.xlu0 %4228
          %4232 = vset.pattern.permute.xlu0 0
          %4233 = vperm.xlu0 %4232, %v4175
          %v4234 = vpop.permute.xlu0 %4233
          %4237 = vset.pattern.permute.xlu0 0
          %4238 = vperm.xlu0 %4237, %v4176
          %v4239 = vpop.permute.xlu0 %4238
          %4242 = vset.pattern.permute.xlu0 0
          %4243 = vperm.xlu0 %4242, %v4177
          %v4244 = vpop.permute.xlu0 %4243
          %4247 = vset.pattern.permute.xlu0 0
          %4248 = vperm.xlu0 %4247, %v4178
          %v4249 = vpop.permute.xlu0 %4248
          %4252 = vset.pattern.permute.xlu0 0
          %4253 = vperm.xlu0 %4252, %v4179
          %v4254 = vpop.permute.xlu0 %4253
          %4257 = vset.pattern.permute.xlu0 0
          %4258 = vperm.xlu0 %4257, %v4180
          %v4259 = vpop.permute.xlu0 %4258
          %v4261 = vmul.f32 %v4149, %v4184
          %v4262 = vmul.f32 %v4150, %v4189
          %v4263 = vmul.f32 %v4151, %v4194
          %v4264 = vmul.f32 %v4152, %v4199
          %v4265 = vmul.f32 %v4153, %v4204
          %v4266 = vmul.f32 %v4154, %v4209
          %v4267 = vmul.f32 %v4155, %v4214
          %v4268 = vmul.f32 %v4156, %v4219
          %v4269 = vmul.f32 %v4157, %v4224
          %v4270 = vmul.f32 %v4158, %v4229
          %v4271 = vmul.f32 %v4159, %v4234
          %v4272 = vmul.f32 %v4160, %v4239
          %v4273 = vmul.f32 %v4161, %v4244
          %v4274 = vmul.f32 %v4162, %v4249
          %v4275 = vmul.f32 %v4163, %v4254
          %v4276 = vmul.f32 %v4164, %v4259
          %v4277 = vld [vmem:[%s8] sm:$0xff]
          %v4278 = vld [vmem:[%s8 + $0x8] sm:$0xff]
          %v4279 = vld [vmem:[%s8 + $0x10] sm:$0xff]
          %v4280 = vld [vmem:[%s8 + $0x18] sm:$0xff]
          %v4281 = vld [vmem:[%s8 + $0x20] sm:$0xff]
          %v4282 = vld [vmem:[%s8 + $0x28] sm:$0xff]
          %v4283 = vld [vmem:[%s8 + $0x30] sm:$0xff]
          %v4284 = vld [vmem:[%s8 + $0x38] sm:$0xff]
          %v4285 = vld [vmem:[%s8 + $0x40] sm:$0xff]
          %v4286 = vld [vmem:[%s8 + $0x48] sm:$0xff]
          %v4287 = vld [vmem:[%s8 + $0x50] sm:$0xff]
          %v4288 = vld [vmem:[%s8 + $0x58] sm:$0xff]
          %v4289 = vld [vmem:[%s8 + $0x60] sm:$0xff]
          %v4290 = vld [vmem:[%s8 + $0x68] sm:$0xff]
          %v4291 = vld [vmem:[%s8 + $0x70] sm:$0xff]
          %v4292 = vld [vmem:[%s8 + $0x78] sm:$0xff]
          %4294 = vset.pattern.permute.xlu0 0
          %4295 = vperm.xlu0 %4294, %v4277
          %v4296 = vpop.permute.xlu0 %4295
          %4299 = vset.pattern.permute.xlu0 0
          %4300 = vperm.xlu0 %4299, %v4278
          %v4301 = vpop.permute.xlu0 %4300
          %4304 = vset.pattern.permute.xlu0 0
          %4305 = vperm.xlu0 %4304, %v4279
          %v4306 = vpop.permute.xlu0 %4305
          %4309 = vset.pattern.permute.xlu0 0
          %4310 = vperm.xlu0 %4309, %v4280
          %v4311 = vpop.permute.xlu0 %4310
          %4314 = vset.pattern.permute.xlu0 0
          %4315 = vperm.xlu0 %4314, %v4281
          %v4316 = vpop.permute.xlu0 %4315
          %4319 = vset.pattern.permute.xlu0 0
          %4320 = vperm.xlu0 %4319, %v4282
          %v4321 = vpop.permute.xlu0 %4320
          %4324 = vset.pattern.permute.xlu0 0
          %4325 = vperm.xlu0 %4324, %v4283
          %v4326 = vpop.permute.xlu0 %4325
          %4329 = vset.pattern.permute.xlu0 0
          %4330 = vperm.xlu0 %4329, %v4284
          %v4331 = vpop.permute.xlu0 %4330
          %4334 = vset.pattern.permute.xlu0 0
          %4335 = vperm.xlu0 %4334, %v4285
          %v4336 = vpop.permute.xlu0 %4335
          %4339 = vset.pattern.permute.xlu0 0
          %4340 = vperm.xlu0 %4339, %v4286
          %v4341 = vpop.permute.xlu0 %4340
          %4344 = vset.pattern.permute.xlu0 0
          %4345 = vperm.xlu0 %4344, %v4287
          %v4346 = vpop.permute.xlu0 %4345
          %4349 = vset.pattern.permute.xlu0 0
          %4350 = vperm.xlu0 %4349, %v4288
          %v4351 = vpop.permute.xlu0 %4350
          %4354 = vset.pattern.permute.xlu0 0
          %4355 = vperm.xlu0 %4354, %v4289
          %v4356 = vpop.permute.xlu0 %4355
          %4359 = vset.pattern.permute.xlu0 0
          %4360 = vperm.xlu0 %4359, %v4290
          %v4361 = vpop.permute.xlu0 %4360
          %4364 = vset.pattern.permute.xlu0 0
          %4365 = vperm.xlu0 %4364, %v4291
          %v4366 = vpop.permute.xlu0 %4365
          %4369 = vset.pattern.permute.xlu0 0
          %4370 = vperm.xlu0 %4369, %v4292
          %v4371 = vpop.permute.xlu0 %4370
          %v4373 = vadd.f32 %v4261, %v4296
          %v4374 = vadd.f32 %v4262, %v4301
          %v4375 = vadd.f32 %v4263, %v4306
          %v4376 = vadd.f32 %v4264, %v4311
          %v4377 = vadd.f32 %v4265, %v4316
          %v4378 = vadd.f32 %v4266, %v4321
          %v4379 = vadd.f32 %v4267, %v4326
          %v4380 = vadd.f32 %v4268, %v4331
          %v4381 = vadd.f32 %v4269, %v4336
          %v4382 = vadd.f32 %v4270, %v4341
          %v4383 = vadd.f32 %v4271, %v4346
          %v4384 = vadd.f32 %v4272, %v4351
          %v4385 = vadd.f32 %v4273, %v4356
          %v4386 = vadd.f32 %v4274, %v4361
          %v4387 = vadd.f32 %v4275, %v4366
          %v4388 = vadd.f32 %v4276, %v4371
          %v4389 = vmax.f32 %v4373, 0.0
          %v4390 = vmax.f32 %v4374, 0.0
          %v4391 = vmax.f32 %v4375, 0.0
          %v4392 = vmax.f32 %v4376, 0.0
          %v4393 = vmax.f32 %v4377, 0.0
          %v4394 = vmax.f32 %v4378, 0.0
          %v4395 = vmax.f32 %v4379, 0.0
          %v4396 = vmax.f32 %v4380, 0.0
          %v4397 = vmax.f32 %v4381, 0.0
          %v4398 = vmax.f32 %v4382, 0.0
          %v4399 = vmax.f32 %v4383, 0.0
          %v4400 = vmax.f32 %v4384, 0.0
          %v4401 = vmax.f32 %v4385, 0.0
          %v4402 = vmax.f32 %v4386, 0.0
          %v4403 = vmax.f32 %v4387, 0.0
          %v4404 = vmax.f32 %v4388, 0.0
          %v4405 = vpack.c.bf16 %v4390, %v4389
          %v4406 = vpack.c.bf16 %v4392, %v4391
          %v4407 = vpack.c.bf16 %v4394, %v4393
          %v4408 = vpack.c.bf16 %v4396, %v4395
          %v4409 = vpack.c.bf16 %v4398, %v4397
          %v4410 = vpack.c.bf16 %v4400, %v4399
          %v4411 = vpack.c.bf16 %v4402, %v4401
          %v4412 = vpack.c.bf16 %v4404, %v4403
          %v4413 = vld [vmem:[%s9] sm:$0xf]
          %v4414 = vld [vmem:[%s9 + $0x4] sm:$0xf]
          %v4415 = vld [vmem:[%s9 + $0x8] sm:$0xf]
          %v4416 = vld [vmem:[%s9 + $0xc] sm:$0xf]
          %v4417 = vld [vmem:[%s9 + $0x10] sm:$0xf]
          %v4418 = vld [vmem:[%s9 + $0x14] sm:$0xf]
          %v4419 = vld [vmem:[%s9 + $0x18] sm:$0xf]
          %v4420 = vld [vmem:[%s9 + $0x1c] sm:$0xf]
          %v4421 = vld [vmem:[%s9 + $0x20] sm:$0xf]
          %v4422 = vld [vmem:[%s9 + $0x24] sm:$0xf]
          %v4423 = vld [vmem:[%s9 + $0x28] sm:$0xf]
          %v4424 = vld [vmem:[%s9 + $0x2c] sm:$0xf]
          %v4425 = vld [vmem:[%s9 + $0x30] sm:$0xf]
          %v4426 = vld [vmem:[%s9 + $0x34] sm:$0xf]
          %v4427 = vld [vmem:[%s9 + $0x38] sm:$0xf]
          %v4428 = vld [vmem:[%s9 + $0x3c] sm:$0xf]
          %v4429 = vld [vmem:[%s10] sm:$0xff]
          %v4430 = vld [vmem:[%s10 + $0x8] sm:$0xff]
          %v4431 = vld [vmem:[%s10 + $0x10] sm:$0xff]
          %v4432 = vld [vmem:[%s10 + $0x18] sm:$0xff]
          %v4433 = vld [vmem:[%s10 + $0x20] sm:$0xff]
          %v4434 = vld [vmem:[%s10 + $0x28] sm:$0xff]
          %v4435 = vld [vmem:[%s10 + $0x30] sm:$0xff]
          %v4436 = vld [vmem:[%s10 + $0x38] sm:$0xff]
          %v4437 = vld [vmem:[%s10 + $0x40] sm:$0xff]
          %v4438 = vld [vmem:[%s10 + $0x48] sm:$0xff]
          %v4439 = vld [vmem:[%s10 + $0x50] sm:$0xff]
          %v4440 = vld [vmem:[%s10 + $0x58] sm:$0xff]
          %v4441 = vld [vmem:[%s10 + $0x60] sm:$0xff]
          %v4442 = vld [vmem:[%s10 + $0x68] sm:$0xff]
          %v4443 = vld [vmem:[%s10 + $0x70] sm:$0xff]
          %v4444 = vld [vmem:[%s10 + $0x78] sm:$0xff]
          %4446 = vset.pattern.permute.xlu0 0
          %4447 = vperm.xlu0 %4446, %v4429
          %v4448 = vpop.permute.xlu0 %4447
          %4451 = vset.pattern.permute.xlu0 0
          %4452 = vperm.xlu0 %4451, %v4430
          %v4453 = vpop.permute.xlu0 %4452
          %4456 = vset.pattern.permute.xlu0 0
          %4457 = vperm.xlu0 %4456, %v4431
          %v4458 = vpop.permute.xlu0 %4457
          %4461 = vset.pattern.permute.xlu0 0
          %4462 = vperm.xlu0 %4461, %v4432
          %v4463 = vpop.permute.xlu0 %4462
          %4466 = vset.pattern.permute.xlu0 0
          %4467 = vperm.xlu0 %4466, %v4433
          %v4468 = vpop.permute.xlu0 %4467
          %4471 = vset.pattern.permute.xlu0 0
          %4472 = vperm.xlu0 %4471, %v4434
          %v4473 = vpop.permute.xlu0 %4472
          %4476 = vset.pattern.permute.xlu0 0
          %4477 = vperm.xlu0 %4476, %v4435
          %v4478 = vpop.permute.xlu0 %4477
          %4481 = vset.pattern.permute.xlu0 0
          %4482 = vperm.xlu0 %4481, %v4436
          %v4483 = vpop.permute.xlu0 %4482
          %4486 = vset.pattern.permute.xlu0 0
          %4487 = vperm.xlu0 %4486, %v4437
          %v4488 = vpop.permute.xlu0 %4487
          %4491 = vset.pattern.permute.xlu0 0
          %4492 = vperm.xlu0 %4491, %v4438
          %v4493 = vpop.permute.xlu0 %4492
          %4496 = vset.pattern.permute.xlu0 0
          %4497 = vperm.xlu0 %4496, %v4439
          %v4498 = vpop.permute.xlu0 %4497
          %4501 = vset.pattern.permute.xlu0 0
          %4502 = vperm.xlu0 %4501, %v4440
          %v4503 = vpop.permute.xlu0 %4502
          %4506 = vset.pattern.permute.xlu0 0
          %4507 = vperm.xlu0 %4506, %v4441
          %v4508 = vpop.permute.xlu0 %4507
          %4511 = vset.pattern.permute.xlu0 0
          %4512 = vperm.xlu0 %4511, %v4442
          %v4513 = vpop.permute.xlu0 %4512
          %4516 = vset.pattern.permute.xlu0 0
          %4517 = vperm.xlu0 %4516, %v4443
          %v4518 = vpop.permute.xlu0 %4517
          %4521 = vset.pattern.permute.xlu0 0
          %4522 = vperm.xlu0 %4521, %v4444
          %v4523 = vpop.permute.xlu0 %4522
          %v4541 = vunpack.c.l.b16 %v4413
          %v4542 = vunpack.c.l.b16 %v4414
          %v4543 = vunpack.c.l.b16 %v4415
          %v4544 = vunpack.c.l.b16 %v4416
          %v4545 = vunpack.c.l.b16 %v4417
          %v4546 = vunpack.c.l.b16 %v4418
          %v4547 = vunpack.c.l.b16 %v4419
          %v4548 = vunpack.c.l.b16 %v4420
          %v4549 = vunpack.c.l.b16 %v4421
          %v4550 = vunpack.c.l.b16 %v4422
          %v4551 = vunpack.c.l.b16 %v4423
          %v4552 = vunpack.c.l.b16 %v4424
          %v4553 = vunpack.c.l.b16 %v4425
          %v4554 = vunpack.c.l.b16 %v4426
          %v4555 = vunpack.c.l.b16 %v4427
          %v4556 = vunpack.c.l.b16 %v4428
          %v4557 = vpack.c.b16 %v4542, %v4541
          %v4558 = vpack.c.b16 %v4544, %v4543
          %v4559 = vpack.c.b16 %v4546, %v4545
          %v4560 = vpack.c.b16 %v4548, %v4547
          %v4561 = vpack.c.b16 %v4550, %v4549
          %v4562 = vpack.c.b16 %v4552, %v4551
          %v4563 = vpack.c.b16 %v4554, %v4553
          %v4564 = vpack.c.b16 %v4556, %v4555
          %4573 = vmatpush.bf16.msra.mxu0 %v4412
          %4574 = vmatpush.bf16.msra.mxu0 %v4411
          %4575 = vmatpush.bf16.msra.mxu0 %v4410
          %4576 = vmatpush.bf16.msra.mxu0 %v4409
          %4577 = vmatpush.bf16.msra.mxu0 %v4408
          %4578 = vmatpush.bf16.msra.mxu0 %v4407
          %4579 = vmatpush.bf16.msra.mxu0 %v4406
          %4580 = vmatpush.bf16.msra.mxu0 %v4405
          %4581 = vmatmul.bf16.gmra.mxu0 %v4557
          %v4582 = vpop.f32.mrf.mxu0
          %v4583 = vadd.f32 %v4448, %v4582
          %v4584 = vpop.f32.mrf.mxu0
          %v4585 = vadd.f32 %v4453, %v4584
          %4586 = vmatmul.bf16.gmra.mxu0 %v4558
          %v4587 = vpop.f32.mrf.mxu0
          %v4588 = vadd.f32 %v4458, %v4587
          %v4589 = vpop.f32.mrf.mxu0
          %v4590 = vadd.f32 %v4463, %v4589
          %4591 = vmatmul.bf16.gmra.mxu0 %v4559
          %v4592 = vpop.f32.mrf.mxu0
          %v4593 = vadd.f32 %v4468, %v4592
          %v4594 = vpop.f32.mrf.mxu0
          %v4595 = vadd.f32 %v4473, %v4594
          %4596 = vmatmul.bf16.gmra.mxu0 %v4560
          %v4597 = vpop.f32.mrf.mxu0
          %v4598 = vadd.f32 %v4478, %v4597
          %v4599 = vpop.f32.mrf.mxu0
          %v4600 = vadd.f32 %v4483, %v4599
          %4601 = vmatmul.bf16.gmra.mxu0 %v4561
          %v4602 = vpop.f32.mrf.mxu0
          %v4603 = vadd.f32 %v4488, %v4602
          %v4604 = vpop.f32.mrf.mxu0
          %v4605 = vadd.f32 %v4493, %v4604
          %4606 = vmatmul.bf16.gmra.mxu0 %v4562
          %v4607 = vpop.f32.mrf.mxu0
          %v4608 = vadd.f32 %v4498, %v4607
          %v4609 = vpop.f32.mrf.mxu0
          %v4610 = vadd.f32 %v4503, %v4609
          %4611 = vmatmul.bf16.gmra.mxu0 %v4563
          %v4612 = vpop.f32.mrf.mxu0
          %v4613 = vadd.f32 %v4508, %v4612
          %v4614 = vpop.f32.mrf.mxu0
          %v4615 = vadd.f32 %v4513, %v4614
          %4616 = vmatmul.bf16.gmra.mxu0 %v4564
          %v4617 = vpop.f32.mrf.mxu0
          %v4618 = vadd.f32 %v4518, %v4617
          %v4619 = vpop.f32.mrf.mxu0
          %v4620 = vadd.f32 %v4523, %v4619
          %4621 = vdwg.mxu0
          %s4622 = scalar_lea.vmem [#allocation6], 1
          %v4623 = vld [vmem:[%s4622] sm:$0x1]
          %v4624 = vsel %vm3125, %v4583, -inf
          %4625 = vmax.xlane.f32.xlu0 %v4624
          %v4626 = vpop.xlane.xlu0 %4625
          %v4627 = vsel %vm3125, %v4585, -inf
          %4628 = vmax.xlane.f32.xlu0 %v4627
          %v4629 = vpop.xlane.xlu0 %4628
          %v4630 = vsel %vm3125, %v4588, -inf
          %4631 = vmax.xlane.f32.xlu0 %v4630
          %v4632 = vpop.xlane.xlu0 %4631
          %v4633 = vsel %vm3125, %v4590, -inf
          %4634 = vmax.xlane.f32.xlu0 %v4633
          %v4635 = vpop.xlane.xlu0 %4634
          %v4636 = vsel %vm3125, %v4593, -inf
          %4637 = vmax.xlane.f32.xlu0 %v4636
          %v4638 = vpop.xlane.xlu0 %4637
          %v4639 = vsel %vm3125, %v4595, -inf
          %4640 = vmax.xlane.f32.xlu0 %v4639
          %v4641 = vpop.xlane.xlu0 %4640
          %v4642 = vsel %vm3125, %v4598, -inf
          %4643 = vmax.xlane.f32.xlu0 %v4642
          %v4644 = vpop.xlane.xlu0 %4643
          %v4645 = vsel %vm3125, %v4600, -inf
          %4646 = vmax.xlane.f32.xlu0 %v4645
          %v4647 = vpop.xlane.xlu0 %4646
          %v4648 = vsel %vm3125, %v4603, -inf
          %4649 = vmax.xlane.f32.xlu0 %v4648
          %v4650 = vpop.xlane.xlu0 %4649
          %v4651 = vsel %vm3125, %v4605, -inf
          %4652 = vmax.xlane.f32.xlu0 %v4651
          %v4653 = vpop.xlane.xlu0 %4652
          %v4654 = vsel %vm3125, %v4608, -inf
          %4655 = vmax.xlane.f32.xlu0 %v4654
          %v4656 = vpop.xlane.xlu0 %4655
          %v4657 = vsel %vm3125, %v4610, -inf
          %4658 = vmax.xlane.f32.xlu0 %v4657
          %v4659 = vpop.xlane.xlu0 %4658
          %v4660 = vsel %vm3125, %v4613, -inf
          %4661 = vmax.xlane.f32.xlu0 %v4660
          %v4662 = vpop.xlane.xlu0 %4661
          %v4663 = vsel %vm3125, %v4615, -inf
          %4664 = vmax.xlane.f32.xlu0 %v4663
          %v4665 = vpop.xlane.xlu0 %4664
          %v4666 = vsel %vm3125, %v4618, -inf
          %4667 = vmax.xlane.f32.xlu0 %v4666
          %v4668 = vpop.xlane.xlu0 %4667
          %v4669 = vsel %vm3125, %v4620, -inf
          %4670 = vmax.xlane.f32.xlu0 %v4669
          %v4671 = vpop.xlane.xlu0 %4670
          %v4688 = vperm.slane %v4626, 0
          %v4689 = vperm.slane %v4626, 1
          %v4690 = vperm.slane %v4626, 2
          %v4691 = vperm.slane %v4626, 3
          %v4692 = vperm.slane %v4626, 4
          %v4693 = vperm.slane %v4626, 5
          %v4694 = vperm.slane %v4626, 6
          %v4695 = vperm.slane %v4626, 7
          %v4696 = vperm.slane %v4629, 0
          %v4697 = vperm.slane %v4629, 1
          %v4698 = vperm.slane %v4629, 2
          %v4699 = vperm.slane %v4629, 3
          %v4700 = vperm.slane %v4629, 4
          %v4701 = vperm.slane %v4629, 5
          %v4702 = vperm.slane %v4629, 6
          %v4703 = vperm.slane %v4629, 7
          %v4704 = vperm.slane %v4632, 0
          %v4705 = vperm.slane %v4632, 1
          %v4706 = vperm.slane %v4632, 2
          %v4707 = vperm.slane %v4632, 3
          %v4708 = vperm.slane %v4632, 4
          %v4709 = vperm.slane %v4632, 5
          %v4710 = vperm.slane %v4632, 6
          %v4711 = vperm.slane %v4632, 7
          %v4712 = vperm.slane %v4635, 0
          %v4713 = vperm.slane %v4635, 1
          %v4714 = vperm.slane %v4635, 2
          %v4715 = vperm.slane %v4635, 3
          %v4716 = vperm.slane %v4635, 4
          %v4717 = vperm.slane %v4635, 5
          %v4718 = vperm.slane %v4635, 6
          %v4719 = vperm.slane %v4635, 7
          %v4720 = vperm.slane %v4638, 0
          %v4721 = vperm.slane %v4638, 1
          %v4722 = vperm.slane %v4638, 2
          %v4723 = vperm.slane %v4638, 3
          %v4724 = vperm.slane %v4638, 4
          %v4725 = vperm.slane %v4638, 5
          %v4726 = vperm.slane %v4638, 6
          %v4727 = vperm.slane %v4638, 7
          %v4728 = vperm.slane %v4641, 0
          %v4729 = vperm.slane %v4641, 1
          %v4730 = vperm.slane %v4641, 2
          %v4731 = vperm.slane %v4641, 3
          %v4732 = vperm.slane %v4641, 4
          %v4733 = vperm.slane %v4641, 5
          %v4734 = vperm.slane %v4641, 6
          %v4735 = vperm.slane %v4641, 7
          %v4736 = vperm.slane %v4644, 0
          %v4737 = vperm.slane %v4644, 1
          %v4738 = vperm.slane %v4644, 2
          %v4739 = vperm.slane %v4644, 3
          %v4740 = vperm.slane %v4644, 4
          %v4741 = vperm.slane %v4644, 5
          %v4742 = vperm.slane %v4644, 6
          %v4743 = vperm.slane %v4644, 7
          %v4744 = vperm.slane %v4647, 0
          %v4745 = vperm.slane %v4647, 1
          %v4746 = vperm.slane %v4647, 2
          %v4747 = vperm.slane %v4647, 3
          %v4748 = vperm.slane %v4647, 4
          %v4749 = vperm.slane %v4647, 5
          %v4750 = vperm.slane %v4647, 6
          %v4751 = vperm.slane %v4647, 7
          %v4752 = vperm.slane %v4650, 0
          %v4753 = vperm.slane %v4650, 1
          %v4754 = vperm.slane %v4650, 2
          %v4755 = vperm.slane %v4650, 3
          %v4756 = vperm.slane %v4650, 4
          %v4757 = vperm.slane %v4650, 5
          %v4758 = vperm.slane %v4650, 6
          %v4759 = vperm.slane %v4650, 7
          %v4760 = vperm.slane %v4653, 0
          %v4761 = vperm.slane %v4653, 1
          %v4762 = vperm.slane %v4653, 2
          %v4763 = vperm.slane %v4653, 3
          %v4764 = vperm.slane %v4653, 4
          %v4765 = vperm.slane %v4653, 5
          %v4766 = vperm.slane %v4653, 6
          %v4767 = vperm.slane %v4653, 7
          %v4768 = vperm.slane %v4656, 0
          %v4769 = vperm.slane %v4656, 1
          %v4770 = vperm.slane %v4656, 2
          %v4771 = vperm.slane %v4656, 3
          %v4772 = vperm.slane %v4656, 4
          %v4773 = vperm.slane %v4656, 5
          %v4774 = vperm.slane %v4656, 6
          %v4775 = vperm.slane %v4656, 7
          %v4776 = vperm.slane %v4659, 0
          %v4777 = vperm.slane %v4659, 1
          %v4778 = vperm.slane %v4659, 2
          %v4779 = vperm.slane %v4659, 3
          %v4780 = vperm.slane %v4659, 4
          %v4781 = vperm.slane %v4659, 5
          %v4782 = vperm.slane %v4659, 6
          %v4783 = vperm.slane %v4659, 7
          %v4784 = vperm.slane %v4662, 0
          %v4785 = vperm.slane %v4662, 1
          %v4786 = vperm.slane %v4662, 2
          %v4787 = vperm.slane %v4662, 3
          %v4788 = vperm.slane %v4662, 4
          %v4789 = vperm.slane %v4662, 5
          %v4790 = vperm.slane %v4662, 6
          %v4791 = vperm.slane %v4662, 7
          %v4792 = vperm.slane %v4665, 0
          %v4793 = vperm.slane %v4665, 1
          %v4794 = vperm.slane %v4665, 2
          %v4795 = vperm.slane %v4665, 3
          %v4796 = vperm.slane %v4665, 4
          %v4797 = vperm.slane %v4665, 5
          %v4798 = vperm.slane %v4665, 6
          %v4799 = vperm.slane %v4665, 7
          %v4800 = vperm.slane %v4668, 0
          %v4801 = vperm.slane %v4668, 1
          %v4802 = vperm.slane %v4668, 2
          %v4803 = vperm.slane %v4668, 3
          %v4804 = vperm.slane %v4668, 4
          %v4805 = vperm.slane %v4668, 5
          %v4806 = vperm.slane %v4668, 6
          %v4807 = vperm.slane %v4668, 7
          %v4808 = vperm.slane %v4671, 0
          %v4809 = vperm.slane %v4671, 1
          %v4810 = vperm.slane %v4671, 2
          %v4811 = vperm.slane %v4671, 3
          %v4812 = vperm.slane %v4671, 4
          %v4813 = vperm.slane %v4671, 5
          %v4814 = vperm.slane %v4671, 6
          %v4815 = vperm.slane %v4671, 7
          %4816 = vst [vmem:[#allocation1] ss:$9 sm:$0xff] %v4688
          %s4817 = scalar_lea.vmem [#allocation1], 1
          %4818 = vst [vmem:[%s4817] ss:$9 sm:$0xff] %v4689
          %s4819 = scalar_lea.vmem [#allocation1], 2
          %4820 = vst [vmem:[%s4819] ss:$9 sm:$0xff] %v4690
          %s4821 = scalar_lea.vmem [#allocation1], 3
          %4822 = vst [vmem:[%s4821] ss:$9 sm:$0xff] %v4691
          %s4823 = scalar_lea.vmem [#allocation1], 4
          %4824 = vst [vmem:[%s4823] ss:$9 sm:$0xff] %v4692
          %s4825 = scalar_lea.vmem [#allocation1], 5
          %4826 = vst [vmem:[%s4825] ss:$9 sm:$0xff] %v4693
          %s4827 = scalar_lea.vmem [#allocation1], 6
          %4828 = vst [vmem:[%s4827] ss:$9 sm:$0xff] %v4694
          %s4829 = scalar_lea.vmem [#allocation1], 7
          %4830 = vst [vmem:[%s4829] ss:$9 sm:$0xff] %v4695
          %v4831 = vld [vmem:[#allocation1] sm:$0xff]
          %4832 = vst [vmem:[#allocation1] ss:$9 sm:$0xff] %v4696
          %4833 = vst [vmem:[%s4817] ss:$9 sm:$0xff] %v4697
          %4834 = vst [vmem:[%s4819] ss:$9 sm:$0xff] %v4698
          %4835 = vst [vmem:[%s4821] ss:$9 sm:$0xff] %v4699
          %4836 = vst [vmem:[%s4823] ss:$9 sm:$0xff] %v4700
          %4837 = vst [vmem:[%s4825] ss:$9 sm:$0xff] %v4701
          %4838 = vst [vmem:[%s4827] ss:$9 sm:$0xff] %v4702
          %4839 = vst [vmem:[%s4829] ss:$9 sm:$0xff] %v4703
          %v4840 = vld [vmem:[#allocation1] sm:$0xff]
          %4841 = vst [vmem:[#allocation1] ss:$9 sm:$0xff] %v4704
          %4842 = vst [vmem:[%s4817] ss:$9 sm:$0xff] %v4705
          %4843 = vst [vmem:[%s4819] ss:$9 sm:$0xff] %v4706
          %4844 = vst [vmem:[%s4821] ss:$9 sm:$0xff] %v4707
          %4845 = vst [vmem:[%s4823] ss:$9 sm:$0xff] %v4708
          %4846 = vst [vmem:[%s4825] ss:$9 sm:$0xff] %v4709
          %4847 = vst [vmem:[%s4827] ss:$9 sm:$0xff] %v4710
          %4848 = vst [vmem:[%s4829] ss:$9 sm:$0xff] %v4711
          %v4849 = vld [vmem:[#allocation1] sm:$0xff]
          %4850 = vst [vmem:[#allocation1] ss:$9 sm:$0xff] %v4712
          %4851 = vst [vmem:[%s4817] ss:$9 sm:$0xff] %v4713
          %4852 = vst [vmem:[%s4819] ss:$9 sm:$0xff] %v4714
          %4853 = vst [vmem:[%s4821] ss:$9 sm:$0xff] %v4715
          %4854 = vst [vmem:[%s4823] ss:$9 sm:$0xff] %v4716
          %4855 = vst [vmem:[%s4825] ss:$9 sm:$0xff] %v4717
          %4856 = vst [vmem:[%s4827] ss:$9 sm:$0xff] %v4718
          %4857 = vst [vmem:[%s4829] ss:$9 sm:$0xff] %v4719
          %v4858 = vld [vmem:[#allocation1] sm:$0xff]
          %4859 = vst [vmem:[#allocation1] ss:$9 sm:$0xff] %v4720
          %4860 = vst [vmem:[%s4817] ss:$9 sm:$0xff] %v4721
          %4861 = vst [vmem:[%s4819] ss:$9 sm:$0xff] %v4722
          %4862 = vst [vmem:[%s4821] ss:$9 sm:$0xff] %v4723
          %4863 = vst [vmem:[%s4823] ss:$9 sm:$0xff] %v4724
          %4864 = vst [vmem:[%s4825] ss:$9 sm:$0xff] %v4725
          %4865 = vst [vmem:[%s4827] ss:$9 sm:$0xff] %v4726
          %4866 = vst [vmem:[%s4829] ss:$9 sm:$0xff] %v4727
          %v4867 = vld [vmem:[#allocation1] sm:$0xff]
          %4868 = vst [vmem:[#allocation1] ss:$9 sm:$0xff] %v4728
          %4869 = vst [vmem:[%s4817] ss:$9 sm:$0xff] %v4729
          %4870 = vst [vmem:[%s4819] ss:$9 sm:$0xff] %v4730
          %4871 = vst [vmem:[%s4821] ss:$9 sm:$0xff] %v4731
          %4872 = vst [vmem:[%s4823] ss:$9 sm:$0xff] %v4732
          %4873 = vst [vmem:[%s4825] ss:$9 sm:$0xff] %v4733
          %4874 = vst [vmem:[%s4827] ss:$9 sm:$0xff] %v4734
          %4875 = vst [vmem:[%s4829] ss:$9 sm:$0xff] %v4735
          %v4876 = vld [vmem:[#allocation1] sm:$0xff]
          %4877 = vst [vmem:[#allocation1] ss:$9 sm:$0xff] %v4736
          %4878 = vst [vmem:[%s4817] ss:$9 sm:$0xff] %v4737
          %4879 = vst [vmem:[%s4819] ss:$9 sm:$0xff] %v4738
          %4880 = vst [vmem:[%s4821] ss:$9 sm:$0xff] %v4739
          %4881 = vst [vmem:[%s4823] ss:$9 sm:$0xff] %v4740
          %4882 = vst [vmem:[%s4825] ss:$9 sm:$0xff] %v4741
          %4883 = vst [vmem:[%s4827] ss:$9 sm:$0xff] %v4742
          %4884 = vst [vmem:[%s4829] ss:$9 sm:$0xff] %v4743
          %v4885 = vld [vmem:[#allocation1] sm:$0xff]
          %4886 = vst [vmem:[#allocation1] ss:$9 sm:$0xff] %v4744
          %4887 = vst [vmem:[%s4817] ss:$9 sm:$0xff] %v4745
          %4888 = vst [vmem:[%s4819] ss:$9 sm:$0xff] %v4746
          %4889 = vst [vmem:[%s4821] ss:$9 sm:$0xff] %v4747
          %4890 = vst [vmem:[%s4823] ss:$9 sm:$0xff] %v4748
          %4891 = vst [vmem:[%s4825] ss:$9 sm:$0xff] %v4749
          %4892 = vst [vmem:[%s4827] ss:$9 sm:$0xff] %v4750
          %4893 = vst [vmem:[%s4829] ss:$9 sm:$0xff] %v4751
          %v4894 = vld [vmem:[#allocation1] sm:$0xff]
          %4895 = vst [vmem:[#allocation1] ss:$9 sm:$0xff] %v4752
          %4896 = vst [vmem:[%s4817] ss:$9 sm:$0xff] %v4753
          %4897 = vst [vmem:[%s4819] ss:$9 sm:$0xff] %v4754
          %4898 = vst [vmem:[%s4821] ss:$9 sm:$0xff] %v4755
          %4899 = vst [vmem:[%s4823] ss:$9 sm:$0xff] %v4756
          %4900 = vst [vmem:[%s4825] ss:$9 sm:$0xff] %v4757
          %4901 = vst [vmem:[%s4827] ss:$9 sm:$0xff] %v4758
          %4902 = vst [vmem:[%s4829] ss:$9 sm:$0xff] %v4759
          %v4903 = vld [vmem:[#allocation1] sm:$0xff]
          %4904 = vst [vmem:[#allocation1] ss:$9 sm:$0xff] %v4760
          %4905 = vst [vmem:[%s4817] ss:$9 sm:$0xff] %v4761
          %4906 = vst [vmem:[%s4819] ss:$9 sm:$0xff] %v4762
          %4907 = vst [vmem:[%s4821] ss:$9 sm:$0xff] %v4763
          %4908 = vst [vmem:[%s4823] ss:$9 sm:$0xff] %v4764
          %4909 = vst [vmem:[%s4825] ss:$9 sm:$0xff] %v4765
          %4910 = vst [vmem:[%s4827] ss:$9 sm:$0xff] %v4766
          %4911 = vst [vmem:[%s4829] ss:$9 sm:$0xff] %v4767
          %v4912 = vld [vmem:[#allocation1] sm:$0xff]
          %4913 = vst [vmem:[#allocation1] ss:$9 sm:$0xff] %v4768
          %4914 = vst [vmem:[%s4817] ss:$9 sm:$0xff] %v4769
          %4915 = vst [vmem:[%s4819] ss:$9 sm:$0xff] %v4770
          %4916 = vst [vmem:[%s4821] ss:$9 sm:$0xff] %v4771
          %4917 = vst [vmem:[%s4823] ss:$9 sm:$0xff] %v4772
          %4918 = vst [vmem:[%s4825] ss:$9 sm:$0xff] %v4773
          %4919 = vst [vmem:[%s4827] ss:$9 sm:$0xff] %v4774
          %4920 = vst [vmem:[%s4829] ss:$9 sm:$0xff] %v4775
          %v4921 = vld [vmem:[#allocation1] sm:$0xff]
          %4922 = vst [vmem:[#allocation1] ss:$9 sm:$0xff] %v4776
          %4923 = vst [vmem:[%s4817] ss:$9 sm:$0xff] %v4777
          %4924 = vst [vmem:[%s4819] ss:$9 sm:$0xff] %v4778
          %4925 = vst [vmem:[%s4821] ss:$9 sm:$0xff] %v4779
          %4926 = vst [vmem:[%s4823] ss:$9 sm:$0xff] %v4780
          %4927 = vst [vmem:[%s4825] ss:$9 sm:$0xff] %v4781
          %4928 = vst [vmem:[%s4827] ss:$9 sm:$0xff] %v4782
          %4929 = vst [vmem:[%s4829] ss:$9 sm:$0xff] %v4783
          %v4930 = vld [vmem:[#allocation1] sm:$0xff]
          %4931 = vst [vmem:[#allocation1] ss:$9 sm:$0xff] %v4784
          %4932 = vst [vmem:[%s4817] ss:$9 sm:$0xff] %v4785
          %4933 = vst [vmem:[%s4819] ss:$9 sm:$0xff] %v4786
          %4934 = vst [vmem:[%s4821] ss:$9 sm:$0xff] %v4787
          %4935 = vst [vmem:[%s4823] ss:$9 sm:$0xff] %v4788
          %4936 = vst [vmem:[%s4825] ss:$9 sm:$0xff] %v4789
          %4937 = vst [vmem:[%s4827] ss:$9 sm:$0xff] %v4790
          %4938 = vst [vmem:[%s4829] ss:$9 sm:$0xff] %v4791
          %v4939 = vld [vmem:[#allocation1] sm:$0xff]
          %4940 = vst [vmem:[#allocation1] ss:$9 sm:$0xff] %v4792
          %4941 = vst [vmem:[%s4817] ss:$9 sm:$0xff] %v4793
          %4942 = vst [vmem:[%s4819] ss:$9 sm:$0xff] %v4794
          %4943 = vst [vmem:[%s4821] ss:$9 sm:$0xff] %v4795
          %4944 = vst [vmem:[%s4823] ss:$9 sm:$0xff] %v4796
          %4945 = vst [vmem:[%s4825] ss:$9 sm:$0xff] %v4797
          %4946 = vst [vmem:[%s4827] ss:$9 sm:$0xff] %v4798
          %4947 = vst [vmem:[%s4829] ss:$9 sm:$0xff] %v4799
          %v4948 = vld [vmem:[#allocation1] sm:$0xff]
          %4949 = vst [vmem:[#allocation1] ss:$9 sm:$0xff] %v4800
          %4950 = vst [vmem:[%s4817] ss:$9 sm:$0xff] %v4801
          %4951 = vst [vmem:[%s4819] ss:$9 sm:$0xff] %v4802
          %4952 = vst [vmem:[%s4821] ss:$9 sm:$0xff] %v4803
          %4953 = vst [vmem:[%s4823] ss:$9 sm:$0xff] %v4804
          %4954 = vst [vmem:[%s4825] ss:$9 sm:$0xff] %v4805
          %4955 = vst [vmem:[%s4827] ss:$9 sm:$0xff] %v4806
          %4956 = vst [vmem:[%s4829] ss:$9 sm:$0xff] %v4807
          %v4957 = vld [vmem:[#allocation1] sm:$0xff]
          %4958 = vst [vmem:[#allocation1] ss:$9 sm:$0xff] %v4808
          %4959 = vst [vmem:[%s4817] ss:$9 sm:$0xff] %v4809
          %4960 = vst [vmem:[%s4819] ss:$9 sm:$0xff] %v4810
          %4961 = vst [vmem:[%s4821] ss:$9 sm:$0xff] %v4811
          %4962 = vst [vmem:[%s4823] ss:$9 sm:$0xff] %v4812
          %4963 = vst [vmem:[%s4825] ss:$9 sm:$0xff] %v4813
          %4964 = vst [vmem:[%s4827] ss:$9 sm:$0xff] %v4814
          %4965 = vst [vmem:[%s4829] ss:$9 sm:$0xff] %v4815
          %v4966 = vld [vmem:[#allocation1] sm:$0xff]
          %4967 = vset.pattern.permute.xlu0 0
          %4968 = vperm.xlu0 %4967, %v4831
          %v4969 = vpop.permute.xlu0 %4968
          %4970 = vset.pattern.permute.xlu0 0
          %4971 = vperm.xlu0 %4970, %v4840
          %v4972 = vpop.permute.xlu0 %4971
          %4973 = vset.pattern.permute.xlu0 0
          %4974 = vperm.xlu0 %4973, %v4849
          %v4975 = vpop.permute.xlu0 %4974
          %4976 = vset.pattern.permute.xlu0 0
          %4977 = vperm.xlu0 %4976, %v4858
          %v4978 = vpop.permute.xlu0 %4977
          %4979 = vset.pattern.permute.xlu0 0
          %4980 = vperm.xlu0 %4979, %v4867
          %v4981 = vpop.permute.xlu0 %4980
          %4982 = vset.pattern.permute.xlu0 0
          %4983 = vperm.xlu0 %4982, %v4876
          %v4984 = vpop.permute.xlu0 %4983
          %4985 = vset.pattern.permute.xlu0 0
          %4986 = vperm.xlu0 %4985, %v4885
          %v4987 = vpop.permute.xlu0 %4986
          %4988 = vset.pattern.permute.xlu0 0
          %4989 = vperm.xlu0 %4988, %v4894
          %v4990 = vpop.permute.xlu0 %4989
          %4991 = vset.pattern.permute.xlu0 0
          %4992 = vperm.xlu0 %4991, %v4903
          %v4993 = vpop.permute.xlu0 %4992
          %4994 = vset.pattern.permute.xlu0 0
          %4995 = vperm.xlu0 %4994, %v4912
          %v4996 = vpop.permute.xlu0 %4995
          %4997 = vset.pattern.permute.xlu0 0
          %4998 = vperm.xlu0 %4997, %v4921
          %v4999 = vpop.permute.xlu0 %4998
          %5000 = vset.pattern.permute.xlu0 0
          %5001 = vperm.xlu0 %5000, %v4930
          %v5002 = vpop.permute.xlu0 %5001
          %5003 = vset.pattern.permute.xlu0 0
          %5004 = vperm.xlu0 %5003, %v4939
          %v5005 = vpop.permute.xlu0 %5004
          %5006 = vset.pattern.permute.xlu0 0
          %5007 = vperm.xlu0 %5006, %v4948
          %v5008 = vpop.permute.xlu0 %5007
          %5009 = vset.pattern.permute.xlu0 0
          %5010 = vperm.xlu0 %5009, %v4957
          %v5011 = vpop.permute.xlu0 %5010
          %5012 = vset.pattern.permute.xlu0 0
          %5013 = vperm.xlu0 %5012, %v4966
          %v5014 = vpop.permute.xlu0 %5013
          %v5015 = vperm.slane %v4969, %v3518
          %v5016 = vperm.slane %v4972, %v3520
          %v5017 = vsel %vm3522, %v5016, %v5015
          %v5018 = vperm.slane %v4975, %v3524
          %v5019 = vsel %vm3526, %v5018, %v5017
          %v5020 = vperm.slane %v4978, %v3528
          %v5021 = vsel %vm3530, %v5020, %v5019
          %v5022 = vperm.slane %v4981, %v3532
          %v5023 = vsel %vm3534, %v5022, %v5021
          %v5024 = vperm.slane %v4984, %v3536
          %v5025 = vsel %vm3538, %v5024, %v5023
          %v5026 = vperm.slane %v4987, %v3540
          %v5027 = vsel %vm3542, %v5026, %v5025
          %v5028 = vperm.slane %v4990, %v3544
          %v5029 = vsel %vm3546, %v5028, %v5027
          %v5030 = vperm.slane %v4993, %v3548
          %v5031 = vsel %vm3550, %v5030, %v5029
          %v5032 = vperm.slane %v4996, %v3552
          %v5033 = vsel %vm3554, %v5032, %v5031
          %v5034 = vperm.slane %v4999, %v3556
          %v5035 = vsel %vm3558, %v5034, %v5033
          %v5036 = vperm.slane %v5002, %v3560
          %v5037 = vsel %vm3562, %v5036, %v5035
          %v5038 = vperm.slane %v5005, %v3564
          %v5039 = vsel %vm3566, %v5038, %v5037
          %v5040 = vperm.slane %v5008, %v3568
          %v5041 = vsel %vm3570, %v5040, %v5039
          %v5042 = vperm.slane %v5011, %v3572
          %v5043 = vsel %vm3574, %v5042, %v5041
          %v5044 = vperm.slane %v5014, %v3576
          %v5045 = vsel %vm3578, %v5044, %v5043
          %v5047 = vmax.f32 %v4623, %v5045
          %5048 = vst [vmem:[%s4622] sm:$0x1] %v5047
        $region88: #{tpu_custom_call.1} parent=63 // pred_fallthru
          _
        // Predicated region
        $region89: #{tpu_custom_call.1} parent=63 // pred_check
          %p5049 = pneg %p298
        $region90: #{tpu_custom_call.1} parent=63 // pred_check_branch
          %5051 = sbr.rel (%p5049) target = $region92
        $region91: #{tpu_custom_call.1} parent=63 // pred_region
          %s5052 = smul.u32 2, %s28
          %5054 = vsyncadd [#allocation7], 0
          %s5055 = scalar_lea.hbm %s11, %s5052
          %s5056 = sshll.u32 [#allocation6], 4
          %s5057 = int_to_ptr.vmem [resolvable:$true] %s5056
          %s5058 = sshll.u32 %s5055, 4
          %s5059 = int_to_ptr.hbm [resolvable:$true] %s5058
          %5064 = dma.vmem_to_hbm [thread:$0]  %s5057, 32, %s5059, [#allocation7], 16, 16, 1
        $region92: #{tpu_custom_call.1} parent=63 // pred_fallthru
          _
        // Predicated region
        $region93: #{tpu_custom_call.1} parent=63 // pred_check
          %p5065 = pneg %p298
        $region94: #{tpu_custom_call.1} parent=63 // pred_check_branch
          %5067 = sbr.rel (%p5065) target = $region96
        $region95: #{tpu_custom_call.1} parent=63 // pred_region
          %5069 = dma.done [#allocation7], 32
        $region96: #{tpu_custom_call.1} parent=63 // pred_fallthru
          _
      $region64: #{tpu_custom_call.1} parent=5 // pred_fallthru
        _
      %p5070 = scmp.le.s32.totalorder 2, %s18
      // Predicated region
      $region97: #{tpu_custom_call.1} parent=5 // pred_check
        %p5071 = pneg %p5070
      $region98: #{tpu_custom_call.1} parent=5 // pred_check_branch
        %5073 = sbr.rel (%p5071) target = $region100
      $region99: #{tpu_custom_call.1} parent=5 // pred_region
        %s5074 = ssub.s32 %s18, 2
      $region100: #{tpu_custom_call.1} parent=5 // pred_fallthru
        _
    $region6: #{tpu_custom_call.1} parent=1 // loop_footer
      %s22 = sadd.s32 1, %s18
    $region7: #{tpu_custom_call.1} parent=1 // loop_footer_branch
      %17 = sbr.rel target = $region3
    $region8: #{tpu_custom_call.1} parent=1 // loop_exit
      _
    %5075 = vsyncpa [#allocation7], 1
    %s5076 = scalar_lea.sflag [#allocation7], 1
    %5077 = vsyncpa %s5076, 1

</llo_original>
